<compile_context>
chip_gen: v5e
topology: v5e:2x2
jax: 0.10.0
libtpu: 0.0.40
codegen_flags: <defaults>
</compile_context>

<pallas_src>
import functools
import math

import jax
import jax.numpy as jnp
from jax.experimental import pallas as pl
from jax.experimental.pallas import tpu as pltpu  # noqa: F401  (kept for parity)


# ---------------------------------------------------------------------------
# Config (stand-in for TRADING_TRANSFORMER_CONFIG) — small, deterministic.
# ---------------------------------------------------------------------------
CONFIG = dict(
    factor_num=16,
    d_model=32,
    dim_ff=64,
    slope=0.01,
    dropout=0.0,            # eval mode -> dropout is identity
    tt_nhead=2,
    tt_nlayers=2,
    activation="relu",
    max_len=64,
    actions=[0, 1, 2],
    assets=[0, 1, 2, 3, 4],
    K=1.0,
    value_embeds_nlayers=2,
    reward_embeds_nlayers=2,
    asset_map_nlayers=2,
    value_map_nlayers=2,
    action_map_nlayers=2,
    reward_map_nlayers=2,
)


# ---------------------------------------------------------------------------
# In-kernel helpers
# ---------------------------------------------------------------------------
def _ln(x, g, b, eps=1e-5):
    mean = jnp.mean(x, axis=-1, keepdims=True)
    xc = x - mean
    var = jnp.mean(xc * xc, axis=-1, keepdims=True)
    return xc * jax.lax.rsqrt(var + eps) * g + b


# ---------------------------------------------------------------------------
# Kernel 1: fused multi-path MLP stack
#   Each "path" = optional (Linear(1,d)+Tanh prefix) -> nlayers Linear with
#   LeakyReLU between -> optional LayerNorm -> optional residual add (used to
#   fold the time-embedding add into the kernel).  All paths in one
#   pallas_call, all intermediates stay in VMEM.  Matmul weights are bf16.
# ---------------------------------------------------------------------------
def _paths_kernel(*refs, meta, n_inputs, slope):
    n_out = len(meta)
    in_refs = refs[:n_inputs]
    param_refs = refs[n_inputs:len(refs) - n_out]
    out_refs = refs[len(refs) - n_out:]
    p = 0
    for oi, path in enumerate(meta):
        x = in_refs[path["x"]][...]
        if path["pre_tanh"]:
            w = param_refs[p][...]
            b = param_refs[p + 1][...]
            p += 2
            # (M,1)*(1,d) broadcast == Linear(1,d), then Tanh
            x = jnp.tanh(x * w + b)
        for act in path["acts"]:
            w = param_refs[p][...]
            b = param_refs[p + 1][...]
            p += 2
            if x.shape[-1] == 1:
                y = x * w + b          # degenerate d_in==1 -> broadcast multiply
            else:
                y = jnp.dot(x.astype(jnp.bfloat16), w,
                            preferred_element_type=jnp.float32) + b
            if act == "leaky":
                y = jnp.where(y >= 0.0, y, slope * y)
            elif act == "relu":
                y = jnp.maximum(y, 0.0)
            x = y
        if path["norm"]:
            g = param_refs[p][...]
            b = param_refs[p + 1][...]
            p += 2
            x = _ln(x, g, b)
        if path["add"] is not None:
            x = x + in_refs[path["add"]][...]
        out_refs[oi][...] = x


def fused_paths(inputs, path_specs, slope):
    """Run several independent MLP paths in a single pallas_call."""
    inputs = [x.astype(jnp.float32) for x in inputs]
    meta, flat, out_shapes = [], [], []
    for spec in path_specs:
        m = {
            "x": spec["x"],
            "pre_tanh": spec.get("pre_tanh") is not None,
            "acts": tuple(a for (_, _, a) in spec["layers"]),
            "norm": spec.get("norm") is not None,
            "add": spec.get("add"),
        }
        if spec.get("pre_tanh") is not None:
            w, b = spec["pre_tanh"]
            flat += [w.reshape(1, -1).astype(jnp.float32),
                     b.reshape(1, -1).astype(jnp.float32)]
        d_out = None
        for (w, b, _) in spec["layers"]:
            wdt = jnp.bfloat16 if w.shape[0] > 1 else jnp.float32
            flat += [w.astype(wdt), b.reshape(1, -1).astype(jnp.float32)]
            d_out = w.shape[1]
        if spec.get("norm") is not None:
            g, bb = spec["norm"]
            flat += [g.reshape(1, -1).astype(jnp.float32),
                     bb.reshape(1, -1).astype(jnp.float32)]
        M = inputs[spec["x"]].shape[0]
        out_shapes.append(jax.ShapeDtypeStruct((M, d_out), jnp.float32))
        meta.append(m)

    kernel = functools.partial(_paths_kernel, meta=tuple(meta),
                               n_inputs=len(inputs), slope=slope)
    # No grid: everything (a few KB) stays resident in VMEM for one step.
    return pl.pallas_call(kernel, out_shape=tuple(out_shapes))(*inputs, *flat)


def _mapping_path(x_idx, map_p, pre=None, add=None):
    n = len(map_p["layers"])
    layers = [(lp["w"], lp["b"], "leaky" if i < n - 1 else None)
              for i, lp in enumerate(map_p["layers"])]
    spec = {"x": x_idx, "layers": layers}
    if pre is not None:
        spec["pre_tanh"] = (pre["w"], pre["b"])
    if "ln_g" in map_p:
        spec["norm"] = (map_p["ln_g"], map_p["ln_b"])
    if add is not None:
        spec["add"] = add
    return spec


# ---------------------------------------------------------------------------
# Kernel 2: fused transformer-encoder stack (all layers, batch folded into M)
#   Post-norm nn.TransformerEncoderLayer semantics, dropout=id.
#   x is (B*L_pad, d); attention uses a precomputed block-diagonal additive
#   mask (causal + key-padding + cross-batch = -1e30), so QKV / out-proj /
#   FFN / LN all run on the full (B*L_pad, d) slab (max MXU/sublane fill).
# ---------------------------------------------------------------------------
_ENC_WEIGHT_ORDER = ("w_qkv", "b_qkv", "w_o", "b_o",
                     "w_ff1", "b_ff1", "w_ff2", "b_ff2",
                     "ln1_g", "ln1_b", "ln2_g", "ln2_b")


def _enc_stack_kernel(x_ref, bias_ref,
                      wqkv_ref, bqkv_ref, wo_ref, bo_ref,
                      wff1_ref, bff1_ref, wff2_ref, bff2_ref,
                      ln1g_ref, ln1b_ref, ln2g_ref, ln2b_ref,
                      o_ref, *, nhead, nlayers, activation, scale, slope):
    h = x_ref[...]                        # (B*L_pad, d) f32 residual stream
    bias = bias_ref[...]                  # (B*L_pad, B*L_pad) additive mask
    BL, d = h.shape
    dh = d // nhead

    for l in range(nlayers):
        # ---- self-attention: one wide QKV matmul, per-head lane slices ----
        qkv = jnp.dot(h.astype(jnp.bfloat16), wqkv_ref[l],
                      preferred_element_type=jnp.float32) + bqkv_ref[l]
        heads = []
        for hd in range(nhead):
            q = qkv[:, 0 * d + hd * dh: 0 * d + (hd + 1) * dh]
            k = qkv[:, 1 * d + hd * dh: 1 * d + (hd + 1) * dh]
            v = qkv[:, 2 * d + hd * dh: 2 * d + (hd + 1) * dh]
            # scores without materializing k.T (contract dim 1 of both)
            s = jax.lax.dot_general(
                q.astype(jnp.bfloat16), k.astype(jnp.bfloat16),
                (((1,), (1,)), ((), ())),
                preferred_element_type=jnp.float32)
            s = s * scale + bias
            m = jnp.max(s, axis=-1, keepdims=True)
            p = jnp.exp(s - m)
            p = p * pl.reciprocal(jnp.sum(p, axis=-1, keepdims=True),
                                  approx=True)
            heads.append(jnp.dot(p.astype(jnp.bfloat16),
                                 v.astype(jnp.bfloat16),
                                 preferred_element_type=jnp.float32))
        cat = jnp.concatenate(heads, axis=-1)           # (BL, d)
        sa = jnp.dot(cat.astype(jnp.bfloat16), wo_ref[l],
                     preferred_element_type=jnp.float32) + bo_ref[l]
        h = _ln(h + sa, ln1g_ref[l], ln1b_ref[l])
        # ---- feed-forward ----
        ff = jnp.dot(h.astype(jnp.bfloat16), wff1_ref[l],
                     preferred_element_type=jnp.float32) + bff1_ref[l]
        if activation == "relu":
            ff = jnp.maximum(ff, 0.0)
        elif activation == "gelu":
            ff = jax.nn.gelu(ff)
        else:  # leaky fallback
            ff = jnp.where(ff >= 0.0, ff, slope * ff)
        ff = jnp.dot(ff.astype(jnp.bfloat16), wff2_ref[l],
                     preferred_element_type=jnp.float32) + bff2_ref[l]
        h = _ln(h + ff, ln2g_ref[l], ln2b_ref[l])
    o_ref[...] = h


def encoder_stack(x, mask_bias, enc_p, *, nhead, nlayers, activation, slope):
    BL, d = x.shape
    scale = 1.0 / math.sqrt(d // nhead)
    kernel = functools.partial(_enc_stack_kernel, nhead=nhead, nlayers=nlayers,
                               activation=activation, scale=scale, slope=slope)
    weights = [enc_p[k] for k in _ENC_WEIGHT_ORDER]
    # No grid: single TC step with everything VMEM-resident.  For large B on
    # v7x a parallel batch grid would be preferable; at these shapes the grid
    # would be pure serialization overhead on v5e/v6e.
    return pl.pallas_call(
        kernel,
        out_shape=jax.ShapeDtypeStruct((BL, d), jnp.float32),
    )(x.astype(jnp.float32), mask_bias.astype(jnp.float32), *weights)


# ---------------------------------------------------------------------------
# Parameter initialization (matches _init_weights semantics: normal(0, 0.02)
# for Linear/Embedding weights, zero biases, LayerNorm gamma=1 / beta=0)
# ---------------------------------------------------------------------------
def _linear_init(key, d_in, d_out):
    return {"w": 0.02 * jax.random.normal(key, (d_in, d_out), jnp.float32),
            "b": jnp.zeros((d_out,), jnp.float32)}


def _embedding_init(key, n, d):
    return 0.02 * jax.random.normal(key, (n, d), jnp.float32)


def _mapping_init(key, d_in, d_out, nlayers, position, use_norm):
    keys = jax.random.split(key, nlayers)
    if position == "first":
        dims = [(d_in, d_out)] + [(d_out, d_out)] * (nlayers - 1)
    else:  # 'last'
        dims = [(d_in, d_in)] * (nlayers - 1) + [(d_in, d_out)]
    layers = [_linear_init(k, a, b) for k, (a, b) in zip(keys, dims)]
    p = {"layers": layers}
    if use_norm:
        p["ln_g"] = jnp.ones((d_out,), jnp.float32)
        p["ln_b"] = jnp.zeros((d_out,), jnp.float32)
    return p


def _enc_stack_init(key, nlayers, d, nhead, dim_ff):
    wqkv, bqkv, wo, bo = [], [], [], []
    wf1, bf1, wf2, bf2 = [], [], [], []
    l1g, l1b, l2g, l2b = [], [], [], []
    for k in jax.random.split(key, nlayers):
        kk = jax.random.split(k, 4)
        wqkv.append(0.02 * jax.random.normal(kk[0], (d, 3 * d), jnp.float32))
        bqkv.append(jnp.zeros((1, 3 * d), jnp.float32))
        wo.append(0.02 * jax.random.normal(kk[1], (d, d), jnp.float32))
        bo.append(jnp.zeros((1, d), jnp.float32))
        wf1.append(0.02 * jax.random.normal(kk[2], (d, dim_ff), jnp.float32))
        bf1.append(jnp.zeros((1, dim_ff), jnp.float32))
        wf2.append(0.02 * jax.random.normal(kk[3], (dim_ff, d), jnp.float32))
        bf2.append(jnp.zeros((1, d), jnp.float32))
        l1g.append(jnp.ones((1, d), jnp.float32))
        l1b.append(jnp.zeros((1, d), jnp.float32))
        l2g.append(jnp.ones((1, d), jnp.float32))
        l2b.append(jnp.zeros((1, d), jnp.float32))
    return {
        "w_qkv": jnp.stack(wqkv).astype(jnp.bfloat16),   # (nl, d, 3d)
        "b_qkv": jnp.stack(bqkv),                        # (nl, 1, 3d)
        "w_o": jnp.stack(wo).astype(jnp.bfloat16),       # (nl, d, d)
        "b_o": jnp.stack(bo),
        "w_ff1": jnp.stack(wf1).astype(jnp.bfloat16), "b_ff1": jnp.stack(bf1),
        "w_ff2": jnp.stack(wf2).astype(jnp.bfloat16), "b_ff2": jnp.stack(bf2),
        "ln1_g": jnp.stack(l1g), "ln1_b": jnp.stack(l1b),
        "ln2_g": jnp.stack(l2g), "ln2_b": jnp.stack(l2b),
    }


def init_params(key, cfg):
    ks = jax.random.split(key, 12)
    d = cfg["d_model"]
    return {
        "asset_emb": _embedding_init(ks[0], len(cfg["assets"]), d),
        "action_emb": _embedding_init(ks[1], len(cfg["actions"]), d),
        "time_emb": _embedding_init(ks[2], cfg["max_len"], d),
        "value_lin": _linear_init(ks[3], 1, d),
        "value_map": _mapping_init(ks[4], d, d, cfg["value_embeds_nlayers"], "first", True),
        "reward_lin": _linear_init(ks[5], 1, d),
        "reward_map": _mapping_init(ks[6], d, d, cfg["reward_embeds_nlayers"], "first", True),
        "obs_map": _mapping_init(ks[7], cfg["factor_num"], d, cfg["asset_map_nlayers"], "first", True),
        "enc": _enc_stack_init(ks[8], cfg["tt_nlayers"], d, cfg["tt_nhead"], cfg["dim_ff"]),
        # Reference module uses action_map_nlayers for ALL three heads.
        "value_preds": _mapping_init(ks[9], d, 1, cfg["action_map_nlayers"], "last", False),
        "action_preds": _mapping_init(ks[10], d, len(cfg["actions"]), cfg["action_map_nlayers"], "last", False),
        "reward_preds": _mapping_init(ks[11], d, 1, cfg["action_map_nlayers"], "last", False),
    }


# ---------------------------------------------------------------------------
# TradingTransformer.forward
# ---------------------------------------------------------------------------
def trading_transformer_forward(params, cfg, assets_in, obs_in, values_in,
                                actions_in, rewards_in, seq_mask=True):
    B, T, F = obs_in.shape
    d = cfg["d_model"]
    slope = cfg["slope"]

    # --- embedding-table gathers (plain-JAX glue, fused under jit) ---
    asset_e = jnp.take(params["asset_emb"], assets_in[:, None], axis=0)   # (B,1,d)
    action_e = jnp.take(params["action_emb"], actions_in, axis=0)         # (B,T,d)
    time_asset = params["time_emb"][0][None, None, :]                     # (1,1,d)
    time_e = params["time_emb"][1:T + 1]                                  # (T,d)
    time_tiled = jnp.broadcast_to(time_e[None], (B, T, d)).reshape(B * T, d)

    # --- fused embedding front-end (one pallas_call); time-add folded in ---
    obs2 = obs_in.reshape(B * T, F).astype(jnp.float32)
    v2 = values_in.astype(jnp.float32).reshape(B * T, 1)
    r2 = rewards_in.astype(jnp.float32).reshape(B * T, 1)
    obs_t, value_t, reward_t = fused_paths(
        [obs2, v2, r2, time_tiled],
        [_mapping_path(0, params["obs_map"], add=3),
         _mapping_path(1, params["value_map"], pre=params["value_lin"], add=3),
         _mapping_path(2, params["reward_map"], pre=params["reward_lin"], add=3)],
        slope)

    assets = asset_e + time_asset                                         # (B,1,d)
    obs = obs_t.reshape(B, T, d)
    values = value_t.reshape(B, T, d)
    actions = action_e + time_e[None]
    rewards = reward_t.reshape(B, T, d)

    # interleave (obs_t, value_t, action_t, reward_t) per timestep
    inputs_in = jnp.stack((obs, values, actions, rewards), axis=2)        # (B,T,4,d)
    inputs_in = inputs_in.reshape(B, T * 4, d)
    inputs = jnp.concatenate((assets, inputs_in), axis=1)                 # (B,1+4T,d)

    # --- pad sequence to a multiple of 8 for clean sublane tiling ---
    L_real = 1 + 4 * T
    L_pad = -(-L_real // 8) * 8
    if L_pad != L_real:
        inputs = jnp.pad(inputs, ((0, 0), (0, L_pad - L_real), (0, 0)))
    x = inputs.reshape(B * L_pad, d)

    # block-diagonal (batch) + key-padding + optional causal additive mask
    pos = jnp.arange(L_pad)
    keep = jnp.broadcast_to(pos[None, :] < L_real, (L_pad, L_pad))
    if seq_mask:
        keep = keep & (pos[None, :] <= pos[:, None])
    keep_bias = jnp.where(keep, 0.0, -1e30).astype(jnp.float32)           # (L_pad,L_pad)
    b_ids = jnp.arange(B)
    same_b = b_ids[:, None, None, None] == b_ids[None, None, :, None]     # (B,1,B,1)
    mask_bias = jnp.where(same_b, keep_bias[None, :, None, :],
                          jnp.float32(-1e30)).reshape(B * L_pad, B * L_pad)

    # --- fused transformer-encoder stack (one pallas_call) ---
    h = encoder_stack(x, mask_bias, params["enc"],
                      nhead=cfg["tt_nhead"], nlayers=cfg["tt_nlayers"],
                      activation=cfg["activation"], slope=slope)
    h = h.reshape(B, L_pad, d)[:, 1:L_real]                               # (B,4T,d)
    outputs = jnp.transpose(h.reshape(B, T, 4, d), (0, 2, 1, 3))          # (B,4,T,d)

    # --- fused prediction heads (one pallas_call) ---
    xv = outputs[:, 0].reshape(B * T, d)
    xa = outputs[:, 1].reshape(B * T, d)
    xr = outputs[:, 2].reshape(B * T, d)
    vp, ap, rp = fused_paths(
        [xv, xa, xr],
        [_mapping_path(0, params["value_preds"]),
         _mapping_path(1, params["action_preds"]),
         _mapping_path(2, params["reward_preds"])],
        slope)
    value_preds = vp.reshape(B, T)
    action_preds = ap.reshape(B, T, len(cfg["actions"]))
    reward_preds = rp.reshape(B, T)
    return value_preds, action_preds, reward_preds, outputs


# ---------------------------------------------------------------------------
if __name__ == "__main__":
    cfg = CONFIG
    key = jax.random.PRNGKey(0)
    kparams, kdata = jax.random.split(key)
    params = init_params(kparams, cfg)

    B, T = 2, 8
    k1, k2, k3, k4, k5 = jax.random.split(kdata, 5)
    assets_in = jax.random.randint(k1, (B,), 0, len(cfg["assets"]))
    obs_in = jax.random.normal(k2, (B, T, cfg["factor_num"]), jnp.float32)
    values_in = jax.random.randint(k3, (B, T), 0, 10)
    actions_in = jax.random.randint(k4, (B, T), 0, len(cfg["actions"]))
    rewards_in = jax.random.randint(k5, (B, T), 0, 10)

    fwd = jax.jit(lambda a, o, v, ac, r: trading_transformer_forward(
        params, cfg, a, o, v, ac, r, seq_mask=True))
    value_preds, action_preds, reward_preds, outputs = fwd(
        assets_in, obs_in, values_in, actions_in, rewards_in)
    jax.block_until_ready((value_preds, action_preds, reward_preds, outputs))

    assert value_preds.shape == (B, T)
    assert action_preds.shape == (B, T, len(cfg["actions"]))
    assert reward_preds.shape == (B, T)
    assert outputs.shape == (B, 4, T, cfg["d_model"])
    assert bool(jnp.all(jnp.isfinite(value_preds)))
    assert bool(jnp.all(jnp.isfinite(action_preds)))
    assert bool(jnp.all(jnp.isfinite(outputs)))
    print("KERNEL_OK")
</pallas_src>

<mosaic_0001>
module attributes {stable_mosaic.version = 11 : i64} {
  func.func @_paths_kernel(%arg0: memref<16x16xf32, #tpu.memory_space<vmem>>, %arg1: memref<16x1xf32, #tpu.memory_space<vmem>>, %arg2: memref<16x1xf32, #tpu.memory_space<vmem>>, %arg3: memref<16x32xf32, #tpu.memory_space<vmem>>, %arg4: memref<16x32xbf16, #tpu.memory_space<vmem>>, %arg5: memref<1x32xf32, #tpu.memory_space<vmem>>, %arg6: memref<32x32xbf16, #tpu.memory_space<vmem>>, %arg7: memref<1x32xf32, #tpu.memory_space<vmem>>, %arg8: memref<1x32xf32, #tpu.memory_space<vmem>>, %arg9: memref<1x32xf32, #tpu.memory_space<vmem>>, %arg10: memref<1x32xf32, #tpu.memory_space<vmem>>, %arg11: memref<1x32xf32, #tpu.memory_space<vmem>>, %arg12: memref<32x32xbf16, #tpu.memory_space<vmem>>, %arg13: memref<1x32xf32, #tpu.memory_space<vmem>>, %arg14: memref<32x32xbf16, #tpu.memory_space<vmem>>, %arg15: memref<1x32xf32, #tpu.memory_space<vmem>>, %arg16: memref<1x32xf32, #tpu.memory_space<vmem>>, %arg17: memref<1x32xf32, #tpu.memory_space<vmem>>, %arg18: memref<1x32xf32, #tpu.memory_space<vmem>>, %arg19: memref<1x32xf32, #tpu.memory_space<vmem>>, %arg20: memref<32x32xbf16, #tpu.memory_space<vmem>>, %arg21: memref<1x32xf32, #tpu.memory_space<vmem>>, %arg22: memref<32x32xbf16, #tpu.memory_space<vmem>>, %arg23: memref<1x32xf32, #tpu.memory_space<vmem>>, %arg24: memref<1x32xf32, #tpu.memory_space<vmem>>, %arg25: memref<1x32xf32, #tpu.memory_space<vmem>>, %arg26: memref<16x32xf32, #tpu.memory_space<vmem>>, %arg27: memref<16x32xf32, #tpu.memory_space<vmem>>, %arg28: memref<16x32xf32, #tpu.memory_space<vmem>>) attributes {dimension_semantics = [], scalar_prefetch = 0 : i64, scratch_operands = 0 : i64, tpu.core_type = #tpu.core_type<tc>} {
    %c0 = arith.constant 0 : index
    %c0_0 = arith.constant 0 : index
    %0 = vector.load %arg0[%c0, %c0_0] : memref<16x16xf32, #tpu.memory_space<vmem>>, vector<16x16xf32>
    %c0_1 = arith.constant 0 : index
    %c0_2 = arith.constant 0 : index
    %1 = vector.load %arg4[%c0_1, %c0_2] : memref<16x32xbf16, #tpu.memory_space<vmem>>, vector<16x32xbf16>
    %c0_3 = arith.constant 0 : index
    %c0_4 = arith.constant 0 : index
    %2 = vector.load %arg5[%c0_3, %c0_4] : memref<1x32xf32, #tpu.memory_space<vmem>>, vector<1x32xf32>
    %3 = arith.truncf %0 : vector<16x16xf32> to vector<16x16xbf16>
    %cst = arith.constant dense<0.000000e+00> : vector<16x32xf32>
    %4 = tpu.matmul %3, %1, %cst {dimension_numbers = #tpu.dot_dimension_numbers<[1], [0], [0], [1], [0, 0, 1, 1], [], []>} : vector<16x16xbf16>, vector<16x32xbf16>, vector<16x32xf32> -> vector<16x32xf32>
    %5 = vector.broadcast %2 : vector<1x32xf32> to vector<16x32xf32>
    %6 = arith.addf %4, %5 : vector<16x32xf32>
    %cst_5 = arith.constant 0.000000e+00 : f32
    %7 = vector.broadcast %cst_5 : f32 to vector<16x32xf32>
    %8 = arith.cmpf oge, %6, %7 : vector<16x32xf32>
    %cst_6 = arith.constant 0.00999999977 : f32
    %9 = vector.broadcast %cst_6 : f32 to vector<16x32xf32>
    %10 = arith.mulf %9, %6 : vector<16x32xf32>
    %11 = arith.select %8, %6, %10 : vector<16x32xi1>, vector<16x32xf32>
    %c0_7 = arith.constant 0 : index
    %c0_8 = arith.constant 0 : index
    %12 = vector.load %arg6[%c0_7, %c0_8] : memref<32x32xbf16, #tpu.memory_space<vmem>>, vector<32x32xbf16>
    %c0_9 = arith.constant 0 : index
    %c0_10 = arith.constant 0 : index
    %13 = vector.load %arg7[%c0_9, %c0_10] : memref<1x32xf32, #tpu.memory_space<vmem>>, vector<1x32xf32>
    %14 = arith.truncf %11 : vector<16x32xf32> to vector<16x32xbf16>
    %cst_11 = arith.constant dense<0.000000e+00> : vector<16x32xf32>
    %15 = tpu.matmul %14, %12, %cst_11 {dimension_numbers = #tpu.dot_dimension_numbers<[1], [0], [0], [1], [0, 0, 1, 1], [], []>} : vector<16x32xbf16>, vector<32x32xbf16>, vector<16x32xf32> -> vector<16x32xf32>
    %16 = vector.broadcast %13 : vector<1x32xf32> to vector<16x32xf32>
    %17 = arith.addf %15, %16 : vector<16x32xf32>
    %c0_12 = arith.constant 0 : index
    %c0_13 = arith.constant 0 : index
    %18 = vector.load %arg8[%c0_12, %c0_13] : memref<1x32xf32, #tpu.memory_space<vmem>>, vector<1x32xf32>
    %c0_14 = arith.constant 0 : index
    %c0_15 = arith.constant 0 : index
    %19 = vector.load %arg9[%c0_14, %c0_15] : memref<1x32xf32, #tpu.memory_space<vmem>>, vector<1x32xf32>
    %cst_16 = arith.constant dense<0.000000e+00> : vector<16xf32>
    %20 = vector.multi_reduction <add>, %17, %cst_16 [1] : vector<16x32xf32> to vector<16xf32>
    %21 = vector.shape_cast %20 : vector<16xf32> to vector<16x1xf32>
    %cst_17 = arith.constant 3.200000e+01 : f32
    %22 = vector.broadcast %cst_17 : f32 to vector<16x1xf32>
    %23 = arith.divf %21, %22 : vector<16x1xf32>
    %24 = vector.broadcast %23 : vector<16x1xf32> to vector<16x32xf32>
    %25 = arith.subf %17, %24 : vector<16x32xf32>
    %26 = arith.mulf %25, %25 : vector<16x32xf32>
    %cst_18 = arith.constant dense<0.000000e+00> : vector<16xf32>
    %27 = vector.multi_reduction <add>, %26, %cst_18 [1] : vector<16x32xf32> to vector<16xf32>
    %28 = vector.shape_cast %27 : vector<16xf32> to vector<16x1xf32>
    %cst_19 = arith.constant 3.200000e+01 : f32
    %29 = vector.broadcast %cst_19 : f32 to vector<16x1xf32>
    %30 = arith.divf %28, %29 : vector<16x1xf32>
    %cst_20 = arith.constant 9.99999974E-6 : f32
    %31 = vector.broadcast %cst_20 : f32 to vector<16x1xf32>
    %32 = arith.addf %30, %31 : vector<16x1xf32>
    %33 = math.rsqrt %32 : vector<16x1xf32>
    %34 = vector.broadcast %33 : vector<16x1xf32> to vector<16x32xf32>
    %35 = arith.mulf %25, %34 : vector<16x32xf32>
    %36 = vector.broadcast %18 : vector<1x32xf32> to vector<16x32xf32>
    %37 = arith.mulf %35, %36 : vector<16x32xf32>
    %38 = vector.broadcast %19 : vector<1x32xf32> to vector<16x32xf32>
    %39 = arith.addf %37, %38 : vector<16x32xf32>
    %c0_21 = arith.constant 0 : index
    %c0_22 = arith.constant 0 : index
    %40 = vector.load %arg3[%c0_21, %c0_22] : memref<16x32xf32, #tpu.memory_space<vmem>>, vector<16x32xf32>
    %41 = arith.addf %39, %40 : vector<16x32xf32>
    %c0_23 = arith.constant 0 : index
    %c0_24 = arith.constant 0 : index
    %42 = vector.load %arg26[%c0_23, %c0_24] : memref<16x32xf32, #tpu.memory_space<vmem>>, vector<16x32xf32>
    tpu.vector_store %arg26[%c0_23, %c0_24], %41 {strides = array<i32>} : memref<16x32xf32, #tpu.memory_space<vmem>>, vector<16x32xf32>,
    %c0_25 = arith.constant 0 : index
    %c0_26 = arith.constant 0 : index
    %43 = vector.load %arg1[%c0_25, %c0_26] : memref<16x1xf32, #tpu.memory_space<vmem>>, vector<16x1xf32>
    %c0_27 = arith.constant 0 : index
    %c0_28 = arith.constant 0 : index
    %44 = vector.load %arg10[%c0_27, %c0_28] : memref<1x32xf32, #tpu.memory_space<vmem>>, vector<1x32xf32>
    %c0_29 = arith.constant 0 : index
    %c0_30 = arith.constant 0 : index
    %45 = vector.load %arg11[%c0_29, %c0_30] : memref<1x32xf32, #tpu.memory_space<vmem>>, vector<1x32xf32>
    %46 = vector.broadcast %43 : vector<16x1xf32> to vector<16x32xf32>
    %47 = vector.broadcast %44 : vector<1x32xf32> to vector<16x32xf32>
    %48 = arith.mulf %46, %47 : vector<16x32xf32>
    %49 = vector.broadcast %45 : vector<1x32xf32> to vector<16x32xf32>
    %50 = arith.addf %48, %49 : vector<16x32xf32>
    %51 = math.tanh %50 : vector<16x32xf32>
    %c0_31 = arith.constant 0 : index
    %c0_32 = arith.constant 0 : index
    %52 = vector.load %arg12[%c0_31, %c0_32] : memref<32x32xbf16, #tpu.memory_space<vmem>>, vector<32x32xbf16>
    %c0_33 = arith.constant 0 : index
    %c0_34 = arith.constant 0 : index
    %53 = vector.load %arg13[%c0_33, %c0_34] : memref<1x32xf32, #tpu.memory_space<vmem>>, vector<1x32xf32>
    %54 = arith.truncf %51 : vector<16x32xf32> to vector<16x32xbf16>
    %cst_35 = arith.constant dense<0.000000e+00> : vector<16x32xf32>
    %55 = tpu.matmul %54, %52, %cst_35 {dimension_numbers = #tpu.dot_dimension_numbers<[1], [0], [0], [1], [0, 0, 1, 1], [], []>} : vector<16x32xbf16>, vector<32x32xbf16>, vector<16x32xf32> -> vector<16x32xf32>
    %56 = vector.broadcast %53 : vector<1x32xf32> to vector<16x32xf32>
    %57 = arith.addf %55, %56 : vector<16x32xf32>
    %cst_36 = arith.constant 0.000000e+00 : f32
    %58 = vector.broadcast %cst_36 : f32 to vector<16x32xf32>
    %59 = arith.cmpf oge, %57, %58 : vector<16x32xf32>
    %cst_37 = arith.constant 0.00999999977 : f32
    %60 = vector.broadcast %cst_37 : f32 to vector<16x32xf32>
    %61 = arith.mulf %60, %57 : vector<16x32xf32>
    %62 = arith.select %59, %57, %61 : vector<16x32xi1>, vector<16x32xf32>
    %c0_38 = arith.constant 0 : index
    %c0_39 = arith.constant 0 : index
    %63 = vector.load %arg14[%c0_38, %c0_39] : memref<32x32xbf16, #tpu.memory_space<vmem>>, vector<32x32xbf16>
    %c0_40 = arith.constant 0 : index
    %c0_41 = arith.constant 0 : index
    %64 = vector.load %arg15[%c0_40, %c0_41] : memref<1x32xf32, #tpu.memory_space<vmem>>, vector<1x32xf32>
    %65 = arith.truncf %62 : vector<16x32xf32> to vector<16x32xbf16>
    %cst_42 = arith.constant dense<0.000000e+00> : vector<16x32xf32>
    %66 = tpu.matmul %65, %63, %cst_42 {dimension_numbers = #tpu.dot_dimension_numbers<[1], [0], [0], [1], [0, 0, 1, 1], [], []>} : vector<16x32xbf16>, vector<32x32xbf16>, vector<16x32xf32> -> vector<16x32xf32>
    %67 = vector.broadcast %64 : vector<1x32xf32> to vector<16x32xf32>
    %68 = arith.addf %66, %67 : vector<16x32xf32>
    %c0_43 = arith.constant 0 : index
    %c0_44 = arith.constant 0 : index
    %69 = vector.load %arg16[%c0_43, %c0_44] : memref<1x32xf32, #tpu.memory_space<vmem>>, vector<1x32xf32>
    %c0_45 = arith.constant 0 : index
    %c0_46 = arith.constant 0 : index
    %70 = vector.load %arg17[%c0_45, %c0_46] : memref<1x32xf32, #tpu.memory_space<vmem>>, vector<1x32xf32>
    %cst_47 = arith.constant dense<0.000000e+00> : vector<16xf32>
    %71 = vector.multi_reduction <add>, %68, %cst_47 [1] : vector<16x32xf32> to vector<16xf32>
    %72 = vector.shape_cast %71 : vector<16xf32> to vector<16x1xf32>
    %cst_48 = arith.constant 3.200000e+01 : f32
    %73 = vector.broadcast %cst_48 : f32 to vector<16x1xf32>
    %74 = arith.divf %72, %73 : vector<16x1xf32>
    %75 = vector.broadcast %74 : vector<16x1xf32> to vector<16x32xf32>
    %76 = arith.subf %68, %75 : vector<16x32xf32>
    %77 = arith.mulf %76, %76 : vector<16x32xf32>
    %cst_49 = arith.constant dense<0.000000e+00> : vector<16xf32>
    %78 = vector.multi_reduction <add>, %77, %cst_49 [1] : vector<16x32xf32> to vector<16xf32>
    %79 = vector.shape_cast %78 : vector<16xf32> to vector<16x1xf32>
    %cst_50 = arith.constant 3.200000e+01 : f32
    %80 = vector.broadcast %cst_50 : f32 to vector<16x1xf32>
    %81 = arith.divf %79, %80 : vector<16x1xf32>
    %cst_51 = arith.constant 9.99999974E-6 : f32
    %82 = vector.broadcast %cst_51 : f32 to vector<16x1xf32>
    %83 = arith.addf %81, %82 : vector<16x1xf32>
    %84 = math.rsqrt %83 : vector<16x1xf32>
    %85 = vector.broadcast %84 : vector<16x1xf32> to vector<16x32xf32>
    %86 = arith.mulf %76, %85 : vector<16x32xf32>
    %87 = vector.broadcast %69 : vector<1x32xf32> to vector<16x32xf32>
    %88 = arith.mulf %86, %87 : vector<16x32xf32>
    %89 = vector.broadcast %70 : vector<1x32xf32> to vector<16x32xf32>
    %90 = arith.addf %88, %89 : vector<16x32xf32>
    %c0_52 = arith.constant 0 : index
    %c0_53 = arith.constant 0 : index
    %91 = vector.load %arg3[%c0_52, %c0_53] : memref<16x32xf32, #tpu.memory_space<vmem>>, vector<16x32xf32>
    %92 = arith.addf %90, %91 : vector<16x32xf32>
    %c0_54 = arith.constant 0 : index
    %c0_55 = arith.constant 0 : index
    %93 = vector.load %arg27[%c0_54, %c0_55] : memref<16x32xf32, #tpu.memory_space<vmem>>, vector<16x32xf32>
    tpu.vector_store %arg27[%c0_54, %c0_55], %92 {strides = array<i32>} : memref<16x32xf32, #tpu.memory_space<vmem>>, vector<16x32xf32>,
    %c0_56 = arith.constant 0 : index
    %c0_57 = arith.constant 0 : index
    %94 = vector.load %arg2[%c0_56, %c0_57] : memref<16x1xf32, #tpu.memory_space<vmem>>, vector<16x1xf32>
    %c0_58 = arith.constant 0 : index
    %c0_59 = arith.constant 0 : index
    %95 = vector.load %arg18[%c0_58, %c0_59] : memref<1x32xf32, #tpu.memory_space<vmem>>, vector<1x32xf32>
    %c0_60 = arith.constant 0 : index
    %c0_61 = arith.constant 0 : index
    %96 = vector.load %arg19[%c0_60, %c0_61] : memref<1x32xf32, #tpu.memory_space<vmem>>, vector<1x32xf32>
    %97 = vector.broadcast %94 : vector<16x1xf32> to vector<16x32xf32>
    %98 = vector.broadcast %95 : vector<1x32xf32> to vector<16x32xf32>
    %99 = arith.mulf %97, %98 : vector<16x32xf32>
    %100 = vector.broadcast %96 : vector<1x32xf32> to vector<16x32xf32>
    %101 = arith.addf %99, %100 : vector<16x32xf32>
    %102 = math.tanh %101 : vector<16x32xf32>
    %c0_62 = arith.constant 0 : index
    %c0_63 = arith.constant 0 : index
    %103 = vector.load %arg20[%c0_62, %c0_63] : memref<32x32xbf16, #tpu.memory_space<vmem>>, vector<32x32xbf16>
    %c0_64 = arith.constant 0 : index
    %c0_65 = arith.constant 0 : index
    %104 = vector.load %arg21[%c0_64, %c0_65] : memref<1x32xf32, #tpu.memory_space<vmem>>, vector<1x32xf32>
    %105 = arith.truncf %102 : vector<16x32xf32> to vector<16x32xbf16>
    %cst_66 = arith.constant dense<0.000000e+00> : vector<16x32xf32>
    %106 = tpu.matmul %105, %103, %cst_66 {dimension_numbers = #tpu.dot_dimension_numbers<[1], [0], [0], [1], [0, 0, 1, 1], [], []>} : vector<16x32xbf16>, vector<32x32xbf16>, vector<16x32xf32> -> vector<16x32xf32>
    %107 = vector.broadcast %104 : vector<1x32xf32> to vector<16x32xf32>
    %108 = arith.addf %106, %107 : vector<16x32xf32>
    %cst_67 = arith.constant 0.000000e+00 : f32
    %109 = vector.broadcast %cst_67 : f32 to vector<16x32xf32>
    %110 = arith.cmpf oge, %108, %109 : vector<16x32xf32>
    %cst_68 = arith.constant 0.00999999977 : f32
    %111 = vector.broadcast %cst_68 : f32 to vector<16x32xf32>
    %112 = arith.mulf %111, %108 : vector<16x32xf32>
    %113 = arith.select %110, %108, %112 : vector<16x32xi1>, vector<16x32xf32>
    %c0_69 = arith.constant 0 : index
    %c0_70 = arith.constant 0 : index
    %114 = vector.load %arg22[%c0_69, %c0_70] : memref<32x32xbf16, #tpu.memory_space<vmem>>, vector<32x32xbf16>
    %c0_71 = arith.constant 0 : index
    %c0_72 = arith.constant 0 : index
    %115 = vector.load %arg23[%c0_71, %c0_72] : memref<1x32xf32, #tpu.memory_space<vmem>>, vector<1x32xf32>
    %116 = arith.truncf %113 : vector<16x32xf32> to vector<16x32xbf16>
    %cst_73 = arith.constant dense<0.000000e+00> : vector<16x32xf32>
    %117 = tpu.matmul %116, %114, %cst_73 {dimension_numbers = #tpu.dot_dimension_numbers<[1], [0], [0], [1], [0, 0, 1, 1], [], []>} : vector<16x32xbf16>, vector<32x32xbf16>, vector<16x32xf32> -> vector<16x32xf32>
    %118 = vector.broadcast %115 : vector<1x32xf32> to vector<16x32xf32>
    %119 = arith.addf %117, %118 : vector<16x32xf32>
    %c0_74 = arith.constant 0 : index
    %c0_75 = arith.constant 0 : index
    %120 = vector.load %arg24[%c0_74, %c0_75] : memref<1x32xf32, #tpu.memory_space<vmem>>, vector<1x32xf32>
    %c0_76 = arith.constant 0 : index
    %c0_77 = arith.constant 0 : index
    %121 = vector.load %arg25[%c0_76, %c0_77] : memref<1x32xf32, #tpu.memory_space<vmem>>, vector<1x32xf32>
    %cst_78 = arith.constant dense<0.000000e+00> : vector<16xf32>
    %122 = vector.multi_reduction <add>, %119, %cst_78 [1] : vector<16x32xf32> to vector<16xf32>
    %123 = vector.shape_cast %122 : vector<16xf32> to vector<16x1xf32>
    %cst_79 = arith.constant 3.200000e+01 : f32
    %124 = vector.broadcast %cst_79 : f32 to vector<16x1xf32>
    %125 = arith.divf %123, %124 : vector<16x1xf32>
    %126 = vector.broadcast %125 : vector<16x1xf32> to vector<16x32xf32>
    %127 = arith.subf %119, %126 : vector<16x32xf32>
    %128 = arith.mulf %127, %127 : vector<16x32xf32>
    %cst_80 = arith.constant dense<0.000000e+00> : vector<16xf32>
    %129 = vector.multi_reduction <add>, %128, %cst_80 [1] : vector<16x32xf32> to vector<16xf32>
    %130 = vector.shape_cast %129 : vector<16xf32> to vector<16x1xf32>
    %cst_81 = arith.constant 3.200000e+01 : f32
    %131 = vector.broadcast %cst_81 : f32 to vector<16x1xf32>
    %132 = arith.divf %130, %131 : vector<16x1xf32>
    %cst_82 = arith.constant 9.99999974E-6 : f32
    %133 = vector.broadcast %cst_82 : f32 to vector<16x1xf32>
    %134 = arith.addf %132, %133 : vector<16x1xf32>
    %135 = math.rsqrt %134 : vector<16x1xf32>
    %136 = vector.broadcast %135 : vector<16x1xf32> to vector<16x32xf32>
    %137 = arith.mulf %127, %136 : vector<16x32xf32>
    %138 = vector.broadcast %120 : vector<1x32xf32> to vector<16x32xf32>
    %139 = arith.mulf %137, %138 : vector<16x32xf32>
    %140 = vector.broadcast %121 : vector<1x32xf32> to vector<16x32xf32>
    %141 = arith.addf %139, %140 : vector<16x32xf32>
    %c0_83 = arith.constant 0 : index
    %c0_84 = arith.constant 0 : index
    %142 = vector.load %arg3[%c0_83, %c0_84] : memref<16x32xf32, #tpu.memory_space<vmem>>, vector<16x32xf32>
    %143 = arith.addf %141, %142 : vector<16x32xf32>
    %c0_85 = arith.constant 0 : index
    %c0_86 = arith.constant 0 : index
    %144 = vector.load %arg28[%c0_85, %c0_86] : memref<16x32xf32, #tpu.memory_space<vmem>>, vector<16x32xf32>
    tpu.vector_store %arg28[%c0_85, %c0_86], %143 {strides = array<i32>} : memref<16x32xf32, #tpu.memory_space<vmem>>, vector<16x32xf32>,
    return
  }
}

module attributes {stable_mosaic.version = 11 : i64} {
  func.func @_enc_stack_kernel(%arg0: memref<80x32xf32, #tpu.memory_space<vmem>>, %arg1: memref<80x80xf32, #tpu.memory_space<vmem>>, %arg2: memref<2x32x96xbf16, #tpu.memory_space<vmem>>, %arg3: memref<2x1x96xf32, #tpu.memory_space<vmem>>, %arg4: memref<2x32x32xbf16, #tpu.memory_space<vmem>>, %arg5: memref<2x1x32xf32, #tpu.memory_space<vmem>>, %arg6: memref<2x32x64xbf16, #tpu.memory_space<vmem>>, %arg7: memref<2x1x64xf32, #tpu.memory_space<vmem>>, %arg8: memref<2x64x32xbf16, #tpu.memory_space<vmem>>, %arg9: memref<2x1x32xf32, #tpu.memory_space<vmem>>, %arg10: memref<2x1x32xf32, #tpu.memory_space<vmem>>, %arg11: memref<2x1x32xf32, #tpu.memory_space<vmem>>, %arg12: memref<2x1x32xf32, #tpu.memory_space<vmem>>, %arg13: memref<2x1x32xf32, #tpu.memory_space<vmem>>, %arg14: memref<80x32xf32, #tpu.memory_space<vmem>>) attributes {dimension_semantics = [], scalar_prefetch = 0 : i64, scratch_operands = 0 : i64, tpu.core_type = #tpu.core_type<tc>} {
    %c0 = arith.constant 0 : index
    %c0_0 = arith.constant 0 : index
    %0 = vector.load %arg0[%c0, %c0_0] : memref<80x32xf32, #tpu.memory_space<vmem>>, vector<80x32xf32>
    %c0_1 = arith.constant 0 : index
    %c0_2 = arith.constant 0 : index
    %1 = vector.load %arg1[%c0_1, %c0_2] : memref<80x80xf32, #tpu.memory_space<vmem>>, vector<80x80xf32>
    %2 = arith.truncf %0 : vector<80x32xf32> to vector<80x32xbf16>
    %c0_3 = arith.constant 0 : index
    %c0_4 = arith.constant 0 : index
    %c0_5 = arith.constant 0 : index
    %3 = vector.load %arg2[%c0_3, %c0_4, %c0_5] : memref<2x32x96xbf16, #tpu.memory_space<vmem>>, vector<1x32x96xbf16>
    %4 = vector.shape_cast %3 : vector<1x32x96xbf16> to vector<32x96xbf16>
    %cst = arith.constant dense<0.000000e+00> : vector<80x96xf32>
    %5 = tpu.matmul %2, %4, %cst {dimension_numbers = #tpu.dot_dimension_numbers<[1], [0], [0], [1], [0, 0, 1, 1], [], []>} : vector<80x32xbf16>, vector<32x96xbf16>, vector<80x96xf32> -> vector<80x96xf32>
    %c0_6 = arith.constant 0 : index
    %c0_7 = arith.constant 0 : index
    %c0_8 = arith.constant 0 : index
    %6 = vector.load %arg3[%c0_6, %c0_7, %c0_8] : memref<2x1x96xf32, #tpu.memory_space<vmem>>, vector<1x1x96xf32>
    %7 = vector.shape_cast %6 : vector<1x1x96xf32> to vector<1x96xf32>
    %8 = vector.broadcast %7 : vector<1x96xf32> to vector<80x96xf32>
    %9 = arith.addf %5, %8 : vector<80x96xf32>
    %10 = vector.extract_strided_slice %9 {offsets = [0, 0], sizes = [80, 16], strides = [1, 1]} : vector<80x96xf32> to vector<80x16xf32>
    %11 = vector.extract_strided_slice %9 {offsets = [0, 32], sizes = [80, 16], strides = [1, 1]} : vector<80x96xf32> to vector<80x16xf32>
    %12 = vector.extract_strided_slice %9 {offsets = [0, 64], sizes = [80, 16], strides = [1, 1]} : vector<80x96xf32> to vector<80x16xf32>
    %13 = arith.truncf %10 : vector<80x16xf32> to vector<80x16xbf16>
    %14 = arith.truncf %11 : vector<80x16xf32> to vector<80x16xbf16>
    %cst_9 = arith.constant dense<0.000000e+00> : vector<80x80xf32>
    %15 = tpu.matmul %13, %14, %cst_9 {dimension_numbers = #tpu.dot_dimension_numbers<[1], [1], [0], [0], [0, 0, 1, 0], [], []>} : vector<80x16xbf16>, vector<80x16xbf16>, vector<80x80xf32> -> vector<80x80xf32>
    %cst_10 = arith.constant 2.500000e-01 : f32
    %16 = vector.broadcast %cst_10 : f32 to vector<80x80xf32>
    %17 = arith.mulf %15, %16 : vector<80x80xf32>
    %18 = arith.addf %17, %1 : vector<80x80xf32>
    %cst_11 = arith.constant dense<0xFF800000> : vector<80xf32>
    %19 = vector.multi_reduction <maximumf>, %18, %cst_11 [1] : vector<80x80xf32> to vector<80xf32>
    %20 = vector.shape_cast %19 : vector<80xf32> to vector<80x1xf32>
    %21 = vector.broadcast %20 : vector<80x1xf32> to vector<80x80xf32>
    %22 = arith.subf %18, %21 : vector<80x80xf32>
    %23 = math.exp %22 : vector<80x80xf32>
    %cst_12 = arith.constant dense<0.000000e+00> : vector<80xf32>
    %24 = vector.multi_reduction <add>, %23, %cst_12 [1] : vector<80x80xf32> to vector<80xf32>
    %25 = vector.shape_cast %24 : vector<80xf32> to vector<80x1xf32>
    %26 = tpu.reciprocal %25 {approx = true} : vector<80x1xf32> -> vector<80x1xf32>
    %27 = vector.broadcast %26 : vector<80x1xf32> to vector<80x80xf32>
    %28 = arith.mulf %23, %27 : vector<80x80xf32>
    %29 = arith.truncf %28 : vector<80x80xf32> to vector<80x80xbf16>
    %30 = arith.truncf %12 : vector<80x16xf32> to vector<80x16xbf16>
    %cst_13 = arith.constant dense<0.000000e+00> : vector<80x16xf32>
    %31 = tpu.matmul %29, %30, %cst_13 {dimension_numbers = #tpu.dot_dimension_numbers<[1], [0], [0], [1], [0, 0, 1, 1], [], []>} : vector<80x80xbf16>, vector<80x16xbf16>, vector<80x16xf32> -> vector<80x16xf32>
    %32 = vector.extract_strided_slice %9 {offsets = [0, 16], sizes = [80, 16], strides = [1, 1]} : vector<80x96xf32> to vector<80x16xf32>
    %33 = vector.extract_strided_slice %9 {offsets = [0, 48], sizes = [80, 16], strides = [1, 1]} : vector<80x96xf32> to vector<80x16xf32>
    %34 = vector.extract_strided_slice %9 {offsets = [0, 80], sizes = [80, 16], strides = [1, 1]} : vector<80x96xf32> to vector<80x16xf32>
    %35 = arith.truncf %32 : vector<80x16xf32> to vector<80x16xbf16>
    %36 = arith.truncf %33 : vector<80x16xf32> to vector<80x16xbf16>
    %cst_14 = arith.constant dense<0.000000e+00> : vector<80x80xf32>
    %37 = tpu.matmul %35, %36, %cst_14 {dimension_numbers = #tpu.dot_dimension_numbers<[1], [1], [0], [0], [0, 0, 1, 0], [], []>} : vector<80x16xbf16>, vector<80x16xbf16>, vector<80x80xf32> -> vector<80x80xf32>
    %cst_15 = arith.constant 2.500000e-01 : f32
    %38 = vector.broadcast %cst_15 : f32 to vector<80x80xf32>
    %39 = arith.mulf %37, %38 : vector<80x80xf32>
    %40 = arith.addf %39, %1 : vector<80x80xf32>
    %cst_16 = arith.constant dense<0xFF800000> : vector<80xf32>
    %41 = vector.multi_reduction <maximumf>, %40, %cst_16 [1] : vector<80x80xf32> to vector<80xf32>
    %42 = vector.shape_cast %41 : vector<80xf32> to vector<80x1xf32>
    %43 = vector.broadcast %42 : vector<80x1xf32> to vector<80x80xf32>
    %44 = arith.subf %40, %43 : vector<80x80xf32>
    %45 = math.exp %44 : vector<80x80xf32>
    %cst_17 = arith.constant dense<0.000000e+00> : vector<80xf32>
    %46 = vector.multi_reduction <add>, %45, %cst_17 [1] : vector<80x80xf32> to vector<80xf32>
    %47 = vector.shape_cast %46 : vector<80xf32> to vector<80x1xf32>
    %48 = tpu.reciprocal %47 {approx = true} : vector<80x1xf32> -> vector<80x1xf32>
    %49 = vector.broadcast %48 : vector<80x1xf32> to vector<80x80xf32>
    %50 = arith.mulf %45, %49 : vector<80x80xf32>
    %51 = arith.truncf %50 : vector<80x80xf32> to vector<80x80xbf16>
    %52 = arith.truncf %34 : vector<80x16xf32> to vector<80x16xbf16>
    %cst_18 = arith.constant dense<0.000000e+00> : vector<80x16xf32>
    %53 = tpu.matmul %51, %52, %cst_18 {dimension_numbers = #tpu.dot_dimension_numbers<[1], [0], [0], [1], [0, 0, 1, 1], [], []>} : vector<80x80xbf16>, vector<80x16xbf16>, vector<80x16xf32> -> vector<80x16xf32>
    %54 = tpu.concatenate %31, %53 in 1 : vector<80x16xf32>, vector<80x16xf32> -> vector<80x32xf32>
    %55 = arith.truncf %54 : vector<80x32xf32> to vector<80x32xbf16>
    %c0_19 = arith.constant 0 : index
    %c0_20 = arith.constant 0 : index
    %c0_21 = arith.constant 0 : index
    %56 = vector.load %arg4[%c0_19, %c0_20, %c0_21] : memref<2x32x32xbf16, #tpu.memory_space<vmem>>, vector<1x32x32xbf16>
    %57 = vector.shape_cast %56 : vector<1x32x32xbf16> to vector<32x32xbf16>
    %cst_22 = arith.constant dense<0.000000e+00> : vector<80x32xf32>
    %58 = tpu.matmul %55, %57, %cst_22 {dimension_numbers = #tpu.dot_dimension_numbers<[1], [0], [0], [1], [0, 0, 1, 1], [], []>} : vector<80x32xbf16>, vector<32x32xbf16>, vector<80x32xf32> -> vector<80x32xf32>
    %c0_23 = arith.constant 0 : index
    %c0_24 = arith.constant 0 : index
    %c0_25 = arith.constant 0 : index
    %59 = vector.load %arg5[%c0_23, %c0_24, %c0_25] : memref<2x1x32xf32, #tpu.memory_space<vmem>>, vector<1x1x32xf32>
    %60 = vector.shape_cast %59 : vector<1x1x32xf32> to vector<1x32xf32>
    %61 = vector.broadcast %60 : vector<1x32xf32> to vector<80x32xf32>
    %62 = arith.addf %58, %61 : vector<80x32xf32>
    %63 = arith.addf %0, %62 : vector<80x32xf32>
    %c0_26 = arith.constant 0 : index
    %c0_27 = arith.constant 0 : index
    %c0_28 = arith.constant 0 : index
    %64 = vector.load %arg10[%c0_26, %c0_27, %c0_28] : memref<2x1x32xf32, #tpu.memory_space<vmem>>, vector<1x1x32xf32>
    %65 = vector.shape_cast %64 : vector<1x1x32xf32> to vector<1x32xf32>
    %c0_29 = arith.constant 0 : index
    %c0_30 = arith.constant 0 : index
    %c0_31 = arith.constant 0 : index
    %66 = vector.load %arg11[%c0_29, %c0_30, %c0_31] : memref<2x1x32xf32, #tpu.memory_space<vmem>>, vector<1x1x32xf32>
    %67 = vector.shape_cast %66 : vector<1x1x32xf32> to vector<1x32xf32>
    %cst_32 = arith.constant dense<0.000000e+00> : vector<80xf32>
    %68 = vector.multi_reduction <add>, %63, %cst_32 [1] : vector<80x32xf32> to vector<80xf32>
    %69 = vector.shape_cast %68 : vector<80xf32> to vector<80x1xf32>
    %cst_33 = arith.constant 3.200000e+01 : f32
    %70 = vector.broadcast %cst_33 : f32 to vector<80x1xf32>
    %71 = arith.divf %69, %70 : vector<80x1xf32>
    %72 = vector.broadcast %71 : vector<80x1xf32> to vector<80x32xf32>
    %73 = arith.subf %63, %72 : vector<80x32xf32>
    %74 = arith.mulf %73, %73 : vector<80x32xf32>
    %cst_34 = arith.constant dense<0.000000e+00> : vector<80xf32>
    %75 = vector.multi_reduction <add>, %74, %cst_34 [1] : vector<80x32xf32> to vector<80xf32>
    %76 = vector.shape_cast %75 : vector<80xf32> to vector<80x1xf32>
    %cst_35 = arith.constant 3.200000e+01 : f32
    %77 = vector.broadcast %cst_35 : f32 to vector<80x1xf32>
    %78 = arith.divf %76, %77 : vector<80x1xf32>
    %cst_36 = arith.constant 9.99999974E-6 : f32
    %79 = vector.broadcast %cst_36 : f32 to vector<80x1xf32>
    %80 = arith.addf %78, %79 : vector<80x1xf32>
    %81 = math.rsqrt %80 : vector<80x1xf32>
    %82 = vector.broadcast %81 : vector<80x1xf32> to vector<80x32xf32>
    %83 = arith.mulf %73, %82 : vector<80x32xf32>
    %84 = vector.broadcast %65 : vector<1x32xf32> to vector<80x32xf32>
    %85 = arith.mulf %83, %84 : vector<80x32xf32>
    %86 = vector.broadcast %67 : vector<1x32xf32> to vector<80x32xf32>
    %87 = arith.addf %85, %86 : vector<80x32xf32>
    %88 = arith.truncf %87 : vector<80x32xf32> to vector<80x32xbf16>
    %c0_37 = arith.constant 0 : index
    %c0_38 = arith.constant 0 : index
    %c0_39 = arith.constant 0 : index
    %89 = vector.load %arg6[%c0_37, %c0_38, %c0_39] : memref<2x32x64xbf16, #tpu.memory_space<vmem>>, vector<1x32x64xbf16>
    %90 = vector.shape_cast %89 : vector<1x32x64xbf16> to vector<32x64xbf16>
    %cst_40 = arith.constant dense<0.000000e+00> : vector<80x64xf32>
    %91 = tpu.matmul %88, %90, %cst_40 {dimension_numbers = #tpu.dot_dimension_numbers<[1], [0], [0], [1], [0, 0, 1, 1], [], []>} : vector<80x32xbf16>, vector<32x64xbf16>, vector<80x64xf32> -> vector<80x64xf32>
    %c0_41 = arith.constant 0 : index
    %c0_42 = arith.constant 0 : index
    %c0_43 = arith.constant 0 : index
    %92 = vector.load %arg7[%c0_41, %c0_42, %c0_43] : memref<2x1x64xf32, #tpu.memory_space<vmem>>, vector<1x1x64xf32>
    %93 = vector.shape_cast %92 : vector<1x1x64xf32> to vector<1x64xf32>
    %94 = vector.broadcast %93 : vector<1x64xf32> to vector<80x64xf32>
    %95 = arith.addf %91, %94 : vector<80x64xf32>
    %cst_44 = arith.constant 0.000000e+00 : f32
    %96 = vector.broadcast %cst_44 : f32 to vector<80x64xf32>
    %97 = arith.maximumf %95, %96 : vector<80x64xf32>
    %98 = arith.truncf %97 : vector<80x64xf32> to vector<80x64xbf16>
    %c0_45 = arith.constant 0 : index
    %c0_46 = arith.constant 0 : index
    %c0_47 = arith.constant 0 : index
    %99 = vector.load %arg8[%c0_45, %c0_46, %c0_47] : memref<2x64x32xbf16, #tpu.memory_space<vmem>>, vector<1x64x32xbf16>
    %100 = vector.shape_cast %99 : vector<1x64x32xbf16> to vector<64x32xbf16>
    %cst_48 = arith.constant dense<0.000000e+00> : vector<80x32xf32>
    %101 = tpu.matmul %98, %100, %cst_48 {dimension_numbers = #tpu.dot_dimension_numbers<[1], [0], [0], [1], [0, 0, 1, 1], [], []>} : vector<80x64xbf16>, vector<64x32xbf16>, vector<80x32xf32> -> vector<80x32xf32>
    %c0_49 = arith.constant 0 : index
    %c0_50 = arith.constant 0 : index
    %c0_51 = arith.constant 0 : index
    %102 = vector.load %arg9[%c0_49, %c0_50, %c0_51] : memref<2x1x32xf32, #tpu.memory_space<vmem>>, vector<1x1x32xf32>
    %103 = vector.shape_cast %102 : vector<1x1x32xf32> to vector<1x32xf32>
    %104 = vector.broadcast %103 : vector<1x32xf32> to vector<80x32xf32>
    %105 = arith.addf %101, %104 : vector<80x32xf32>
    %106 = arith.addf %87, %105 : vector<80x32xf32>
    %c0_52 = arith.constant 0 : index
    %c0_53 = arith.constant 0 : index
    %c0_54 = arith.constant 0 : index
    %107 = vector.load %arg12[%c0_52, %c0_53, %c0_54] : memref<2x1x32xf32, #tpu.memory_space<vmem>>, vector<1x1x32xf32>
    %108 = vector.shape_cast %107 : vector<1x1x32xf32> to vector<1x32xf32>
    %c0_55 = arith.constant 0 : index
    %c0_56 = arith.constant 0 : index
    %c0_57 = arith.constant 0 : index
    %109 = vector.load %arg13[%c0_55, %c0_56, %c0_57] : memref<2x1x32xf32, #tpu.memory_space<vmem>>, vector<1x1x32xf32>
    %110 = vector.shape_cast %109 : vector<1x1x32xf32> to vector<1x32xf32>
    %cst_58 = arith.constant dense<0.000000e+00> : vector<80xf32>
    %111 = vector.multi_reduction <add>, %106, %cst_58 [1] : vector<80x32xf32> to vector<80xf32>
    %112 = vector.shape_cast %111 : vector<80xf32> to vector<80x1xf32>
    %cst_59 = arith.constant 3.200000e+01 : f32
    %113 = vector.broadcast %cst_59 : f32 to vector<80x1xf32>
    %114 = arith.divf %112, %113 : vector<80x1xf32>
    %115 = vector.broadcast %114 : vector<80x1xf32> to vector<80x32xf32>
    %116 = arith.subf %106, %115 : vector<80x32xf32>
    %117 = arith.mulf %116, %116 : vector<80x32xf32>
    %cst_60 = arith.constant dense<0.000000e+00> : vector<80xf32>
    %118 = vector.multi_reduction <add>, %117, %cst_60 [1] : vector<80x32xf32> to vector<80xf32>
    %119 = vector.shape_cast %118 : vector<80xf32> to vector<80x1xf32>
    %cst_61 = arith.constant 3.200000e+01 : f32
    %120 = vector.broadcast %cst_61 : f32 to vector<80x1xf32>
    %121 = arith.divf %119, %120 : vector<80x1xf32>
    %cst_62 = arith.constant 9.99999974E-6 : f32
    %122 = vector.broadcast %cst_62 : f32 to vector<80x1xf32>
    %123 = arith.addf %121, %122 : vector<80x1xf32>
    %124 = math.rsqrt %123 : vector<80x1xf32>
    %125 = vector.broadcast %124 : vector<80x1xf32> to vector<80x32xf32>
    %126 = arith.mulf %116, %125 : vector<80x32xf32>
    %127 = vector.broadcast %108 : vector<1x32xf32> to vector<80x32xf32>
    %128 = arith.mulf %126, %127 : vector<80x32xf32>
    %129 = vector.broadcast %110 : vector<1x32xf32> to vector<80x32xf32>
    %130 = arith.addf %128, %129 : vector<80x32xf32>
    %131 = arith.truncf %130 : vector<80x32xf32> to vector<80x32xbf16>
    %c1 = arith.constant 1 : index
    %c0_63 = arith.constant 0 : index
    %c0_64 = arith.constant 0 : index
    %132 = vector.load %arg2[%c1, %c0_63, %c0_64] : memref<2x32x96xbf16, #tpu.memory_space<vmem>>, vector<1x32x96xbf16>
    %133 = vector.shape_cast %132 : vector<1x32x96xbf16> to vector<32x96xbf16>
    %cst_65 = arith.constant dense<0.000000e+00> : vector<80x96xf32>
    %134 = tpu.matmul %131, %133, %cst_65 {dimension_numbers = #tpu.dot_dimension_numbers<[1], [0], [0], [1], [0, 0, 1, 1], [], []>} : vector<80x32xbf16>, vector<32x96xbf16>, vector<80x96xf32> -> vector<80x96xf32>
    %c1_66 = arith.constant 1 : index
    %c0_67 = arith.constant 0 : index
    %c0_68 = arith.constant 0 : index
    %135 = vector.load %arg3[%c1_66, %c0_67, %c0_68] : memref<2x1x96xf32, #tpu.memory_space<vmem>>, vector<1x1x96xf32>
    %136 = vector.shape_cast %135 : vector<1x1x96xf32> to vector<1x96xf32>
    %137 = vector.broadcast %136 : vector<1x96xf32> to vector<80x96xf32>
    %138 = arith.addf %134, %137 : vector<80x96xf32>
    %139 = vector.extract_strided_slice %138 {offsets = [0, 0], sizes = [80, 16], strides = [1, 1]} : vector<80x96xf32> to vector<80x16xf32>
    %140 = vector.extract_strided_slice %138 {offsets = [0, 32], sizes = [80, 16], strides = [1, 1]} : vector<80x96xf32> to vector<80x16xf32>
    %141 = vector.extract_strided_slice %138 {offsets = [0, 64], sizes = [80, 16], strides = [1, 1]} : vector<80x96xf32> to vector<80x16xf32>
    %142 = arith.truncf %139 : vector<80x16xf32> to vector<80x16xbf16>
    %143 = arith.truncf %140 : vector<80x16xf32> to vector<80x16xbf16>
    %cst_69 = arith.constant dense<0.000000e+00> : vector<80x80xf32>
    %144 = tpu.matmul %142, %143, %cst_69 {dimension_numbers = #tpu.dot_dimension_numbers<[1], [1], [0], [0], [0, 0, 1, 0], [], []>} : vector<80x16xbf16>, vector<80x16xbf16>, vector<80x80xf32> -> vector<80x80xf32>
    %cst_70 = arith.constant 2.500000e-01 : f32
    %145 = vector.broadcast %cst_70 : f32 to vector<80x80xf32>
    %146 = arith.mulf %144, %145 : vector<80x80xf32>
    %147 = arith.addf %146, %1 : vector<80x80xf32>
    %cst_71 = arith.constant dense<0xFF800000> : vector<80xf32>
    %148 = vector.multi_reduction <maximumf>, %147, %cst_71 [1] : vector<80x80xf32> to vector<80xf32>
    %149 = vector.shape_cast %148 : vector<80xf32> to vector<80x1xf32>
    %150 = vector.broadcast %149 : vector<80x1xf32> to vector<80x80xf32>
    %151 = arith.subf %147, %150 : vector<80x80xf32>
    %152 = math.exp %151 : vector<80x80xf32>
    %cst_72 = arith.constant dense<0.000000e+00> : vector<80xf32>
    %153 = vector.multi_reduction <add>, %152, %cst_72 [1] : vector<80x80xf32> to vector<80xf32>
    %154 = vector.shape_cast %153 : vector<80xf32> to vector<80x1xf32>
    %155 = tpu.reciprocal %154 {approx = true} : vector<80x1xf32> -> vector<80x1xf32>
    %156 = vector.broadcast %155 : vector<80x1xf32> to vector<80x80xf32>
    %157 = arith.mulf %152, %156 : vector<80x80xf32>
    %158 = arith.truncf %157 : vector<80x80xf32> to vector<80x80xbf16>
    %159 = arith.truncf %141 : vector<80x16xf32> to vector<80x16xbf16>
    %cst_73 = arith.constant dense<0.000000e+00> : vector<80x16xf32>
    %160 = tpu.matmul %158, %159, %cst_73 {dimension_numbers = #tpu.dot_dimension_numbers<[1], [0], [0], [1], [0, 0, 1, 1], [], []>} : vector<80x80xbf16>, vector<80x16xbf16>, vector<80x16xf32> -> vector<80x16xf32>
    %161 = vector.extract_strided_slice %138 {offsets = [0, 16], sizes = [80, 16], strides = [1, 1]} : vector<80x96xf32> to vector<80x16xf32>
    %162 = vector.extract_strided_slice %138 {offsets = [0, 48], sizes = [80, 16], strides = [1, 1]} : vector<80x96xf32> to vector<80x16xf32>
    %163 = vector.extract_strided_slice %138 {offsets = [0, 80], sizes = [80, 16], strides = [1, 1]} : vector<80x96xf32> to vector<80x16xf32>
    %164 = arith.truncf %161 : vector<80x16xf32> to vector<80x16xbf16>
    %165 = arith.truncf %162 : vector<80x16xf32> to vector<80x16xbf16>
    %cst_74 = arith.constant dense<0.000000e+00> : vector<80x80xf32>
    %166 = tpu.matmul %164, %165, %cst_74 {dimension_numbers = #tpu.dot_dimension_numbers<[1], [1], [0], [0], [0, 0, 1, 0], [], []>} : vector<80x16xbf16>, vector<80x16xbf16>, vector<80x80xf32> -> vector<80x80xf32>
    %cst_75 = arith.constant 2.500000e-01 : f32
    %167 = vector.broadcast %cst_75 : f32 to vector<80x80xf32>
    %168 = arith.mulf %166, %167 : vector<80x80xf32>
    %169 = arith.addf %168, %1 : vector<80x80xf32>
    %cst_76 = arith.constant dense<0xFF800000> : vector<80xf32>
    %170 = vector.multi_reduction <maximumf>, %169, %cst_76 [1] : vector<80x80xf32> to vector<80xf32>
    %171 = vector.shape_cast %170 : vector<80xf32> to vector<80x1xf32>
    %172 = vector.broadcast %171 : vector<80x1xf32> to vector<80x80xf32>
    %173 = arith.subf %169, %172 : vector<80x80xf32>
    %174 = math.exp %173 : vector<80x80xf32>
    %cst_77 = arith.constant dense<0.000000e+00> : vector<80xf32>
    %175 = vector.multi_reduction <add>, %174, %cst_77 [1] : vector<80x80xf32> to vector<80xf32>
    %176 = vector.shape_cast %175 : vector<80xf32> to vector<80x1xf32>
    %177 = tpu.reciprocal %176 {approx = true} : vector<80x1xf32> -> vector<80x1xf32>
    %178 = vector.broadcast %177 : vector<80x1xf32> to vector<80x80xf32>
    %179 = arith.mulf %174, %178 : vector<80x80xf32>
    %180 = arith.truncf %179 : vector<80x80xf32> to vector<80x80xbf16>
    %181 = arith.truncf %163 : vector<80x16xf32> to vector<80x16xbf16>
    %cst_78 = arith.constant dense<0.000000e+00> : vector<80x16xf32>
    %182 = tpu.matmul %180, %181, %cst_78 {dimension_numbers = #tpu.dot_dimension_numbers<[1], [0], [0], [1], [0, 0, 1, 1], [], []>} : vector<80x80xbf16>, vector<80x16xbf16>, vector<80x16xf32> -> vector<80x16xf32>
    %183 = tpu.concatenate %160, %182 in 1 : vector<80x16xf32>, vector<80x16xf32> -> vector<80x32xf32>
    %184 = arith.truncf %183 : vector<80x32xf32> to vector<80x32xbf16>
    %c1_79 = arith.constant 1 : index
    %c0_80 = arith.constant 0 : index
    %c0_81 = arith.constant 0 : index
    %185 = vector.load %arg4[%c1_79, %c0_80, %c0_81] : memref<2x32x32xbf16, #tpu.memory_space<vmem>>, vector<1x32x32xbf16>
    %186 = vector.shape_cast %185 : vector<1x32x32xbf16> to vector<32x32xbf16>
    %cst_82 = arith.constant dense<0.000000e+00> : vector<80x32xf32>
    %187 = tpu.matmul %184, %186, %cst_82 {dimension_numbers = #tpu.dot_dimension_numbers<[1], [0], [0], [1], [0, 0, 1, 1], [], []>} : vector<80x32xbf16>, vector<32x32xbf16>, vector<80x32xf32> -> vector<80x32xf32>
    %c1_83 = arith.constant 1 : index
    %c0_84 = arith.constant 0 : index
    %c0_85 = arith.constant 0 : index
    %188 = vector.load %arg5[%c1_83, %c0_84, %c0_85] : memref<2x1x32xf32, #tpu.memory_space<vmem>>, vector<1x1x32xf32>
    %189 = vector.shape_cast %188 : vector<1x1x32xf32> to vector<1x32xf32>
    %190 = vector.broadcast %189 : vector<1x32xf32> to vector<80x32xf32>
    %191 = arith.addf %187, %190 : vector<80x32xf32>
    %192 = arith.addf %130, %191 : vector<80x32xf32>
    %c1_86 = arith.constant 1 : index
    %c0_87 = arith.constant 0 : index
    %c0_88 = arith.constant 0 : index
    %193 = vector.load %arg10[%c1_86, %c0_87, %c0_88] : memref<2x1x32xf32, #tpu.memory_space<vmem>>, vector<1x1x32xf32>
    %194 = vector.shape_cast %193 : vector<1x1x32xf32> to vector<1x32xf32>
    %c1_89 = arith.constant 1 : index
    %c0_90 = arith.constant 0 : index
    %c0_91 = arith.constant 0 : index
    %195 = vector.load %arg11[%c1_89, %c0_90, %c0_91] : memref<2x1x32xf32, #tpu.memory_space<vmem>>, vector<1x1x32xf32>
    %196 = vector.shape_cast %195 : vector<1x1x32xf32> to vector<1x32xf32>
    %cst_92 = arith.constant dense<0.000000e+00> : vector<80xf32>
    %197 = vector.multi_reduction <add>, %192, %cst_92 [1] : vector<80x32xf32> to vector<80xf32>
    %198 = vector.shape_cast %197 : vector<80xf32> to vector<80x1xf32>
    %cst_93 = arith.constant 3.200000e+01 : f32
    %199 = vector.broadcast %cst_93 : f32 to vector<80x1xf32>
    %200 = arith.divf %198, %199 : vector<80x1xf32>
    %201 = vector.broadcast %200 : vector<80x1xf32> to vector<80x32xf32>
    %202 = arith.subf %192, %201 : vector<80x32xf32>
    %203 = arith.mulf %202, %202 : vector<80x32xf32>
    %cst_94 = arith.constant dense<0.000000e+00> : vector<80xf32>
    %204 = vector.multi_reduction <add>, %203, %cst_94 [1] : vector<80x32xf32> to vector<80xf32>
    %205 = vector.shape_cast %204 : vector<80xf32> to vector<80x1xf32>
    %cst_95 = arith.constant 3.200000e+01 : f32
    %206 = vector.broadcast %cst_95 : f32 to vector<80x1xf32>
    %207 = arith.divf %205, %206 : vector<80x1xf32>
    %cst_96 = arith.constant 9.99999974E-6 : f32
    %208 = vector.broadcast %cst_96 : f32 to vector<80x1xf32>
    %209 = arith.addf %207, %208 : vector<80x1xf32>
    %210 = math.rsqrt %209 : vector<80x1xf32>
    %211 = vector.broadcast %210 : vector<80x1xf32> to vector<80x32xf32>
    %212 = arith.mulf %202, %211 : vector<80x32xf32>
    %213 = vector.broadcast %194 : vector<1x32xf32> to vector<80x32xf32>
    %214 = arith.mulf %212, %213 : vector<80x32xf32>
    %215 = vector.broadcast %196 : vector<1x32xf32> to vector<80x32xf32>
    %216 = arith.addf %214, %215 : vector<80x32xf32>
    %217 = arith.truncf %216 : vector<80x32xf32> to vector<80x32xbf16>
    %c1_97 = arith.constant 1 : index
    %c0_98 = arith.constant 0 : index
    %c0_99 = arith.constant 0 : index
    %218 = vector.load %arg6[%c1_97, %c0_98, %c0_99] : memref<2x32x64xbf16, #tpu.memory_space<vmem>>, vector<1x32x64xbf16>
    %219 = vector.shape_cast %218 : vector<1x32x64xbf16> to vector<32x64xbf16>
    %cst_100 = arith.constant dense<0.000000e+00> : vector<80x64xf32>
    %220 = tpu.matmul %217, %219, %cst_100 {dimension_numbers = #tpu.dot_dimension_numbers<[1], [0], [0], [1], [0, 0, 1, 1], [], []>} : vector<80x32xbf16>, vector<32x64xbf16>, vector<80x64xf32> -> vector<80x64xf32>
    %c1_101 = arith.constant 1 : index
    %c0_102 = arith.constant 0 : index
    %c0_103 = arith.constant 0 : index
    %221 = vector.load %arg7[%c1_101, %c0_102, %c0_103] : memref<2x1x64xf32, #tpu.memory_space<vmem>>, vector<1x1x64xf32>
    %222 = vector.shape_cast %221 : vector<1x1x64xf32> to vector<1x64xf32>
    %223 = vector.broadcast %222 : vector<1x64xf32> to vector<80x64xf32>
    %224 = arith.addf %220, %223 : vector<80x64xf32>
    %cst_104 = arith.constant 0.000000e+00 : f32
    %225 = vector.broadcast %cst_104 : f32 to vector<80x64xf32>
    %226 = arith.maximumf %224, %225 : vector<80x64xf32>
    %227 = arith.truncf %226 : vector<80x64xf32> to vector<80x64xbf16>
    %c1_105 = arith.constant 1 : index
    %c0_106 = arith.constant 0 : index
    %c0_107 = arith.constant 0 : index
    %228 = vector.load %arg8[%c1_105, %c0_106, %c0_107] : memref<2x64x32xbf16, #tpu.memory_space<vmem>>, vector<1x64x32xbf16>
    %229 = vector.shape_cast %228 : vector<1x64x32xbf16> to vector<64x32xbf16>
    %cst_108 = arith.constant dense<0.000000e+00> : vector<80x32xf32>
    %230 = tpu.matmul %227, %229, %cst_108 {dimension_numbers = #tpu.dot_dimension_numbers<[1], [0], [0], [1], [0, 0, 1, 1], [], []>} : vector<80x64xbf16>, vector<64x32xbf16>, vector<80x32xf32> -> vector<80x32xf32>
    %c1_109 = arith.constant 1 : index
    %c0_110 = arith.constant 0 : index
    %c0_111 = arith.constant 0 : index
    %231 = vector.load %arg9[%c1_109, %c0_110, %c0_111] : memref<2x1x32xf32, #tpu.memory_space<vmem>>, vector<1x1x32xf32>
    %232 = vector.shape_cast %231 : vector<1x1x32xf32> to vector<1x32xf32>
    %233 = vector.broadcast %232 : vector<1x32xf32> to vector<80x32xf32>
    %234 = arith.addf %230, %233 : vector<80x32xf32>
    %235 = arith.addf %216, %234 : vector<80x32xf32>
    %c1_112 = arith.constant 1 : index
    %c0_113 = arith.constant 0 : index
    %c0_114 = arith.constant 0 : index
    %236 = vector.load %arg12[%c1_112, %c0_113, %c0_114] : memref<2x1x32xf32, #tpu.memory_space<vmem>>, vector<1x1x32xf32>
    %237 = vector.shape_cast %236 : vector<1x1x32xf32> to vector<1x32xf32>
    %c1_115 = arith.constant 1 : index
    %c0_116 = arith.constant 0 : index
    %c0_117 = arith.constant 0 : index
    %238 = vector.load %arg13[%c1_115, %c0_116, %c0_117] : memref<2x1x32xf32, #tpu.memory_space<vmem>>, vector<1x1x32xf32>
    %239 = vector.shape_cast %238 : vector<1x1x32xf32> to vector<1x32xf32>
    %cst_118 = arith.constant dense<0.000000e+00> : vector<80xf32>
    %240 = vector.multi_reduction <add>, %235, %cst_118 [1] : vector<80x32xf32> to vector<80xf32>
    %241 = vector.shape_cast %240 : vector<80xf32> to vector<80x1xf32>
    %cst_119 = arith.constant 3.200000e+01 : f32
    %242 = vector.broadcast %cst_119 : f32 to vector<80x1xf32>
    %243 = arith.divf %241, %242 : vector<80x1xf32>
    %244 = vector.broadcast %243 : vector<80x1xf32> to vector<80x32xf32>
    %245 = arith.subf %235, %244 : vector<80x32xf32>
    %246 = arith.mulf %245, %245 : vector<80x32xf32>
    %cst_120 = arith.constant dense<0.000000e+00> : vector<80xf32>
    %247 = vector.multi_reduction <add>, %246, %cst_120 [1] : vector<80x32xf32> to vector<80xf32>
    %248 = vector.shape_cast %247 : vector<80xf32> to vector<80x1xf32>
    %cst_121 = arith.constant 3.200000e+01 : f32
    %249 = vector.broadcast %cst_121 : f32 to vector<80x1xf32>
    %250 = arith.divf %248, %249 : vector<80x1xf32>
    %cst_122 = arith.constant 9.99999974E-6 : f32
    %251 = vector.broadcast %cst_122 : f32 to vector<80x1xf32>
    %252 = arith.addf %250, %251 : vector<80x1xf32>
    %253 = math.rsqrt %252 : vector<80x1xf32>
    %254 = vector.broadcast %253 : vector<80x1xf32> to vector<80x32xf32>
    %255 = arith.mulf %245, %254 : vector<80x32xf32>
    %256 = vector.broadcast %237 : vector<1x32xf32> to vector<80x32xf32>
    %257 = arith.mulf %255, %256 : vector<80x32xf32>
    %258 = vector.broadcast %239 : vector<1x32xf32> to vector<80x32xf32>
    %259 = arith.addf %257, %258 : vector<80x32xf32>
    %c0_123 = arith.constant 0 : index
    %c0_124 = arith.constant 0 : index
    %260 = vector.load %arg14[%c0_123, %c0_124] : memref<80x32xf32, #tpu.memory_space<vmem>>, vector<80x32xf32>
    tpu.vector_store %arg14[%c0_123, %c0_124], %259 {strides = array<i32>} : memref<80x32xf32, #tpu.memory_space<vmem>>, vector<80x32xf32>,
    return
  }
}

module attributes {stable_mosaic.version = 11 : i64} {
  func.func @_paths_kernel(%arg0: memref<16x32xf32, #tpu.memory_space<vmem>>, %arg1: memref<16x32xf32, #tpu.memory_space<vmem>>, %arg2: memref<16x32xf32, #tpu.memory_space<vmem>>, %arg3: memref<32x32xbf16, #tpu.memory_space<vmem>>, %arg4: memref<1x32xf32, #tpu.memory_space<vmem>>, %arg5: memref<32x1xbf16, #tpu.memory_space<vmem>>, %arg6: memref<1x1xf32, #tpu.memory_space<vmem>>, %arg7: memref<32x32xbf16, #tpu.memory_space<vmem>>, %arg8: memref<1x32xf32, #tpu.memory_space<vmem>>, %arg9: memref<32x3xbf16, #tpu.memory_space<vmem>>, %arg10: memref<1x3xf32, #tpu.memory_space<vmem>>, %arg11: memref<32x32xbf16, #tpu.memory_space<vmem>>, %arg12: memref<1x32xf32, #tpu.memory_space<vmem>>, %arg13: memref<32x1xbf16, #tpu.memory_space<vmem>>, %arg14: memref<1x1xf32, #tpu.memory_space<vmem>>, %arg15: memref<16x1xf32, #tpu.memory_space<vmem>>, %arg16: memref<16x3xf32, #tpu.memory_space<vmem>>, %arg17: memref<16x1xf32, #tpu.memory_space<vmem>>) attributes {dimension_semantics = [], scalar_prefetch = 0 : i64, scratch_operands = 0 : i64, tpu.core_type = #tpu.core_type<tc>} {
    %c0 = arith.constant 0 : index
    %c0_0 = arith.constant 0 : index
    %0 = vector.load %arg0[%c0, %c0_0] : memref<16x32xf32, #tpu.memory_space<vmem>>, vector<16x32xf32>
    %c0_1 = arith.constant 0 : index
    %c0_2 = arith.constant 0 : index
    %1 = vector.load %arg3[%c0_1, %c0_2] : memref<32x32xbf16, #tpu.memory_space<vmem>>, vector<32x32xbf16>
    %c0_3 = arith.constant 0 : index
    %c0_4 = arith.constant 0 : index
    %2 = vector.load %arg4[%c0_3, %c0_4] : memref<1x32xf32, #tpu.memory_space<vmem>>, vector<1x32xf32>
    %3 = arith.truncf %0 : vector<16x32xf32> to vector<16x32xbf16>
    %cst = arith.constant dense<0.000000e+00> : vector<16x32xf32>
    %4 = tpu.matmul %3, %1, %cst {dimension_numbers = #tpu.dot_dimension_numbers<[1], [0], [0], [1], [0, 0, 1, 1], [], []>} : vector<16x32xbf16>, vector<32x32xbf16>, vector<16x32xf32> -> vector<16x32xf32>
    %5 = vector.broadcast %2 : vector<1x32xf32> to vector<16x32xf32>
    %6 = arith.addf %4, %5 : vector<16x32xf32>
    %cst_5 = arith.constant 0.000000e+00 : f32
    %7 = vector.broadcast %cst_5 : f32 to vector<16x32xf32>
    %8 = arith.cmpf oge, %6, %7 : vector<16x32xf32>
    %cst_6 = arith.constant 0.00999999977 : f32
    %9 = vector.broadcast %cst_6 : f32 to vector<16x32xf32>
    %10 = arith.mulf %9, %6 : vector<16x32xf32>
    %11 = arith.select %8, %6, %10 : vector<16x32xi1>, vector<16x32xf32>
    %c0_7 = arith.constant 0 : index
    %c0_8 = arith.constant 0 : index
    %12 = vector.load %arg5[%c0_7, %c0_8] : memref<32x1xbf16, #tpu.memory_space<vmem>>, vector<32x1xbf16>
    %c0_9 = arith.constant 0 : index
    %c0_10 = arith.constant 0 : index
    %13 = vector.load %arg6[%c0_9, %c0_10] : memref<1x1xf32, #tpu.memory_space<vmem>>, vector<1x1xf32>
    %14 = arith.truncf %11 : vector<16x32xf32> to vector<16x32xbf16>
    %cst_11 = arith.constant dense<0.000000e+00> : vector<16x1xf32>
    %15 = tpu.matmul %14, %12, %cst_11 {dimension_numbers = #tpu.dot_dimension_numbers<[1], [0], [0], [1], [0, 0, 1, 1], [], []>} : vector<16x32xbf16>, vector<32x1xbf16>, vector<16x1xf32> -> vector<16x1xf32>
    %16 = vector.broadcast %13 : vector<1x1xf32> to vector<16x1xf32>
    %17 = arith.addf %15, %16 : vector<16x1xf32>
    %c0_12 = arith.constant 0 : index
    %c0_13 = arith.constant 0 : index
    %18 = vector.load %arg15[%c0_12, %c0_13] : memref<16x1xf32, #tpu.memory_space<vmem>>, vector<16x1xf32>
    tpu.vector_store %arg15[%c0_12, %c0_13], %17 {strides = array<i32>} : memref<16x1xf32, #tpu.memory_space<vmem>>, vector<16x1xf32>,
    %c0_14 = arith.constant 0 : index
    %c0_15 = arith.constant 0 : index
    %19 = vector.load %arg1[%c0_14, %c0_15] : memref<16x32xf32, #tpu.memory_space<vmem>>, vector<16x32xf32>
    %c0_16 = arith.constant 0 : index
    %c0_17 = arith.constant 0 : index
    %20 = vector.load %arg7[%c0_16, %c0_17] : memref<32x32xbf16, #tpu.memory_space<vmem>>, vector<32x32xbf16>
    %c0_18 = arith.constant 0 : index
    %c0_19 = arith.constant 0 : index
    %21 = vector.load %arg8[%c0_18, %c0_19] : memref<1x32xf32, #tpu.memory_space<vmem>>, vector<1x32xf32>
    %22 = arith.truncf %19 : vector<16x32xf32> to vector<16x32xbf16>
    %cst_20 = arith.constant dense<0.000000e+00> : vector<16x32xf32>
    %23 = tpu.matmul %22, %20, %cst_20 {dimension_numbers = #tpu.dot_dimension_numbers<[1], [0], [0], [1], [0, 0, 1, 1], [], []>} : vector<16x32xbf16>, vector<32x32xbf16>, vector<16x32xf32> -> vector<16x32xf32>
    %24 = vector.broadcast %21 : vector<1x32xf32> to vector<16x32xf32>
    %25 = arith.addf %23, %24 : vector<16x32xf32>
    %cst_21 = arith.constant 0.000000e+00 : f32
    %26 = vector.broadcast %cst_21 : f32 to vector<16x32xf32>
    %27 = arith.cmpf oge, %25, %26 : vector<16x32xf32>
    %cst_22 = arith.constant 0.00999999977 : f32
    %28 = vector.broadcast %cst_22 : f32 to vector<16x32xf32>
    %29 = arith.mulf %28, %25 : vector<16x32xf32>
    %30 = arith.select %27, %25, %29 : vector<16x32xi1>, vector<16x32xf32>
    %c0_23 = arith.constant 0 : index
    %c0_24 = arith.constant 0 : index
    %31 = vector.load %arg9[%c0_23, %c0_24] : memref<32x3xbf16, #tpu.memory_space<vmem>>, vector<32x3xbf16>
    %c0_25 = arith.constant 0 : index
    %c0_26 = arith.constant 0 : index
    %32 = vector.load %arg10[%c0_25, %c0_26] : memref<1x3xf32, #tpu.memory_space<vmem>>, vector<1x3xf32>
    %33 = arith.truncf %30 : vector<16x32xf32> to vector<16x32xbf16>
    %cst_27 = arith.constant dense<0.000000e+00> : vector<16x3xf32>
    %34 = tpu.matmul %33, %31, %cst_27 {dimension_numbers = #tpu.dot_dimension_numbers<[1], [0], [0], [1], [0, 0, 1, 1], [], []>} : vector<16x32xbf16>, vector<32x3xbf16>, vector<16x3xf32> -> vector<16x3xf32>
    %35 = vector.broadcast %32 : vector<1x3xf32> to vector<16x3xf32>
    %36 = arith.addf %34, %35 : vector<16x3xf32>
    %c0_28 = arith.constant 0 : index
    %c0_29 = arith.constant 0 : index
    %37 = vector.load %arg16[%c0_28, %c0_29] : memref<16x3xf32, #tpu.memory_space<vmem>>, vector<16x3xf32>
    tpu.vector_store %arg16[%c0_28, %c0_29], %36 {strides = array<i32>} : memref<16x3xf32, #tpu.memory_space<vmem>>, vector<16x3xf32>,
    %c0_30 = arith.constant 0 : index
    %c0_31 = arith.constant 0 : index
    %38 = vector.load %arg2[%c0_30, %c0_31] : memref<16x32xf32, #tpu.memory_space<vmem>>, vector<16x32xf32>
    %c0_32 = arith.constant 0 : index
    %c0_33 = arith.constant 0 : index
    %39 = vector.load %arg11[%c0_32, %c0_33] : memref<32x32xbf16, #tpu.memory_space<vmem>>, vector<32x32xbf16>
    %c0_34 = arith.constant 0 : index
    %c0_35 = arith.constant 0 : index
    %40 = vector.load %arg12[%c0_34, %c0_35] : memref<1x32xf32, #tpu.memory_space<vmem>>, vector<1x32xf32>
    %41 = arith.truncf %38 : vector<16x32xf32> to vector<16x32xbf16>
    %cst_36 = arith.constant dense<0.000000e+00> : vector<16x32xf32>
    %42 = tpu.matmul %41, %39, %cst_36 {dimension_numbers = #tpu.dot_dimension_numbers<[1], [0], [0], [1], [0, 0, 1, 1], [], []>} : vector<16x32xbf16>, vector<32x32xbf16>, vector<16x32xf32> -> vector<16x32xf32>
    %43 = vector.broadcast %40 : vector<1x32xf32> to vector<16x32xf32>
    %44 = arith.addf %42, %43 : vector<16x32xf32>
    %cst_37 = arith.constant 0.000000e+00 : f32
    %45 = vector.broadcast %cst_37 : f32 to vector<16x32xf32>
    %46 = arith.cmpf oge, %44, %45 : vector<16x32xf32>
    %cst_38 = arith.constant 0.00999999977 : f32
    %47 = vector.broadcast %cst_38 : f32 to vector<16x32xf32>
    %48 = arith.mulf %47, %44 : vector<16x32xf32>
    %49 = arith.select %46, %44, %48 : vector<16x32xi1>, vector<16x32xf32>
    %c0_39 = arith.constant 0 : index
    %c0_40 = arith.constant 0 : index
    %50 = vector.load %arg13[%c0_39, %c0_40] : memref<32x1xbf16, #tpu.memory_space<vmem>>, vector<32x1xbf16>
    %c0_41 = arith.constant 0 : index
    %c0_42 = arith.constant 0 : index
    %51 = vector.load %arg14[%c0_41, %c0_42] : memref<1x1xf32, #tpu.memory_space<vmem>>, vector<1x1xf32>
    %52 = arith.truncf %49 : vector<16x32xf32> to vector<16x32xbf16>
    %cst_43 = arith.constant dense<0.000000e+00> : vector<16x1xf32>
    %53 = tpu.matmul %52, %50, %cst_43 {dimension_numbers = #tpu.dot_dimension_numbers<[1], [0], [0], [1], [0, 0, 1, 1], [], []>} : vector<16x32xbf16>, vector<32x1xbf16>, vector<16x1xf32> -> vector<16x1xf32>
    %54 = vector.broadcast %51 : vector<1x1xf32> to vector<16x1xf32>
    %55 = arith.addf %53, %54 : vector<16x1xf32>
    %c0_44 = arith.constant 0 : index
    %c0_45 = arith.constant 0 : index
    %56 = vector.load %arg17[%c0_44, %c0_45] : memref<16x1xf32, #tpu.memory_space<vmem>>, vector<16x1xf32>
    tpu.vector_store %arg17[%c0_44, %c0_45], %55 {strides = array<i32>} : memref<16x1xf32, #tpu.memory_space<vmem>>, vector<16x1xf32>,
    return
  }
}

</mosaic_0001>

<llo_original>
// kernel: _lambda_.3
$region0: #{_lambda_.3}
  #allocation0 [shape = 'u32[]', space=smem, size = 0x4, offset = 0x4, fixed_abs, tag = 'smem constant byte address 0x4 - core index']
  #allocation1 [shape = 'u32[72,128]{1,0:T(1,128)}', space=vmem, size = 0x9000, scoped, tag = 'internal scratch']
  %s0 = inlined_call_operand.vmem [shape: f32[16,16], index: 0, kind: input, shape index: {}]
  %s1 = inlined_call_operand.vmem [shape: f32[16,1], index: 1, kind: input, shape index: {}]
  %s2 = inlined_call_operand.vmem [shape: f32[16,1], index: 2, kind: input, shape index: {}]
  %s3 = inlined_call_operand.vmem [shape: f32[16,32], index: 3, kind: input, shape index: {}]
  %s4 = inlined_call_operand.hbm [shape: bf16[16,32], index: 4, kind: input, shape index: {}]
  %s5 = inlined_call_operand.vmem [shape: f32[1,32], index: 5, kind: input, shape index: {}, may-alias: {5,7,9,11,13,15,17,19,21,23,25}]
  %s6 = inlined_call_operand.hbm [shape: bf16[32,32], index: 6, kind: input, shape index: {}]
  %s7 = inlined_call_operand.vmem [shape: f32[1,32], index: 7, kind: input, shape index: {}, may-alias: {5,7,9,11,13,15,17,19,21,23,25}]
  %s8 = inlined_call_operand.vmem [shape: f32[1,32], index: 8, kind: input, shape index: {}, may-alias: {8,16,24}]
  %s9 = inlined_call_operand.vmem [shape: f32[1,32], index: 9, kind: input, shape index: {}, may-alias: {5,7,9,11,13,15,17,19,21,23,25}]
  %s10 = inlined_call_operand.vmem [shape: f32[1,32], index: 10, kind: input, shape index: {}]
  %s11 = inlined_call_operand.vmem [shape: f32[1,32], index: 11, kind: input, shape index: {}, may-alias: {5,7,9,11,13,15,17,19,21,23,25}]
  %s12 = inlined_call_operand.vmem [shape: bf16[32,32], index: 12, kind: input, shape index: {}]
  %s13 = inlined_call_operand.vmem [shape: f32[1,32], index: 13, kind: input, shape index: {}, may-alias: {5,7,9,11,13,15,17,19,21,23,25}]
  %s14 = inlined_call_operand.vmem [shape: bf16[32,32], index: 14, kind: input, shape index: {}]
  %s15 = inlined_call_operand.vmem [shape: f32[1,32], index: 15, kind: input, shape index: {}, may-alias: {5,7,9,11,13,15,17,19,21,23,25}]
  %s16 = inlined_call_operand.vmem [shape: f32[1,32], index: 16, kind: input, shape index: {}, may-alias: {8,16,24}]
  %s17 = inlined_call_operand.vmem [shape: f32[1,32], index: 17, kind: input, shape index: {}, may-alias: {5,7,9,11,13,15,17,19,21,23,25}]
  %s18 = inlined_call_operand.hbm [shape: f32[1,32], index: 18, kind: input, shape index: {}]
  %s19 = inlined_call_operand.vmem [shape: f32[1,32], index: 19, kind: input, shape index: {}, may-alias: {5,7,9,11,13,15,17,19,21,23,25}]
  %s20 = inlined_call_operand.vmem [shape: bf16[32,32], index: 20, kind: input, shape index: {}]
  %s21 = inlined_call_operand.vmem [shape: f32[1,32], index: 21, kind: input, shape index: {}, may-alias: {5,7,9,11,13,15,17,19,21,23,25}]
  %s22 = inlined_call_operand.vmem [shape: bf16[32,32], index: 22, kind: input, shape index: {}]
  %s23 = inlined_call_operand.vmem [shape: f32[1,32], index: 23, kind: input, shape index: {}, may-alias: {5,7,9,11,13,15,17,19,21,23,25}]
  %s24 = inlined_call_operand.vmem [shape: f32[1,32], index: 24, kind: input, shape index: {}, may-alias: {8,16,24}]
  %s25 = inlined_call_operand.vmem [shape: f32[1,32], index: 25, kind: input, shape index: {}, may-alias: {5,7,9,11,13,15,17,19,21,23,25}]
  %s26 = inlined_call_operand.vmem [shape: f32[16,32], index: 26, kind: output, shape index: {0}]
  %s27 = inlined_call_operand.vmem [shape: f32[16,32], index: 27, kind: output, shape index: {1}]
  %s28 = inlined_call_operand.vmem [shape: f32[16,32], index: 28, kind: output, shape index: {2}]
  %29 = xla_tuple %s26, %s27, %s28
  %s30 = sld [smem:[#allocation0]]
  $region142: #{_lambda_.3} parent=0
    _
  %s32 = ssub.s32 1, %s30
  %s33 = scalar_select 0, %s32, %s30
  $region1: #{_lambda_.3} parent=0
    #allocation2 [shape = 'u8[4096]{0}', space=vmem, size = 0x1000, scoped, tag = 'input window, operand 4, single buffered']
    #allocation3 [shape = 's32[1]{0}', space=sflag, size = 0x4, scoped, tag = 'scoped memory for _lambda_.3']
    #allocation4 [shape = 'u8[8192]{0}', space=vmem, size = 0x2000, scoped, tag = 'input window, operand 6, single buffered']
    #allocation5 [shape = 's32[1]{0}', space=sflag, size = 0x4, scoped, tag = 'scoped memory for _lambda_.3']
    #allocation6 [shape = 'u8[512]{0}', space=vmem, size = 0x400, scoped, tag = 'input window, operand 18, single buffered']
    %34 = vsyncpa [#allocation3], 0
    %35 = vsyncpa [#allocation5], 0
    // Predicated region
    $region2: #{_lambda_.3} parent=1 // pred_check
      _
    $region3: #{_lambda_.3} parent=1 // pred_check_branch
      %37 = sbr.rel (0) target = $region5
    $region4: #{_lambda_.3} parent=1 // pred_region
      _
    $region5: #{_lambda_.3} parent=1 // pred_fallthru
      _
    // Predicated region
    $region6: #{_lambda_.3} parent=1 // pred_check
      _
    $region7: #{_lambda_.3} parent=1 // pred_check_branch
      %39 = sbr.rel (0) target = $region9
    $region8: #{_lambda_.3} parent=1 // pred_region
      _
    $region9: #{_lambda_.3} parent=1 // pred_fallthru
      _
    // Predicated region
    $region10: #{_lambda_.3} parent=1 // pred_check
      _
    $region11: #{_lambda_.3} parent=1 // pred_check_branch
      %41 = sbr.rel (0) target = $region13
    $region12: #{_lambda_.3} parent=1 // pred_region
      _
    $region13: #{_lambda_.3} parent=1 // pred_fallthru
      _
    // Predicated region
    $region14: #{_lambda_.3} parent=1 // pred_check
      _
    $region15: #{_lambda_.3} parent=1 // pred_check_branch
      %43 = sbr.rel (0) target = $region17
    $region16: #{_lambda_.3} parent=1 // pred_region
      _
    $region17: #{_lambda_.3} parent=1 // pred_fallthru
      _
    // Predicated region
    $region18: #{_lambda_.3} parent=1 // pred_check
      _
    $region19: #{_lambda_.3} parent=1 // pred_check_branch
      %45 = sbr.rel (0) target = $region21
    $region20: #{_lambda_.3} parent=1 // pred_region
      %47 = vsyncadd [#allocation3], 0
      %s48 = sshll.u32 %s4, 4
      %s49 = int_to_ptr.hbm [resolvable:$true] %s48
      %s50 = sshll.u32 [#allocation2], 4
      %s51 = int_to_ptr.vmem [resolvable:$true] %s50
      %56 = dma.hbm_to_vmem [thread:$0]  %s49, 128, %s51, [#allocation3], 64, 64, 4
    $region21: #{_lambda_.3} parent=1 // pred_fallthru
      _
    // Predicated region
    $region22: #{_lambda_.3} parent=1 // pred_check
      _
    $region23: #{_lambda_.3} parent=1 // pred_check_branch
      %58 = sbr.rel (0) target = $region25
    $region24: #{_lambda_.3} parent=1 // pred_region
      _
    $region25: #{_lambda_.3} parent=1 // pred_fallthru
      _
    // Predicated region
    $region26: #{_lambda_.3} parent=1 // pred_check
      _
    $region27: #{_lambda_.3} parent=1 // pred_check_branch
      %60 = sbr.rel (0) target = $region29
    $region28: #{_lambda_.3} parent=1 // pred_region
      %62 = vsyncadd [#allocation5], 0
      %s63 = sshll.u32 %s6, 4
      %s64 = int_to_ptr.hbm [resolvable:$true] %s63
      %s65 = sshll.u32 [#allocation4], 4
      %s66 = int_to_ptr.vmem [resolvable:$true] %s65
      %71 = dma.hbm_to_vmem [thread:$0]  %s64, 256, %s66, [#allocation5], 64, 64, 4
    $region29: #{_lambda_.3} parent=1 // pred_fallthru
      _
    // Predicated region
    $region30: #{_lambda_.3} parent=1 // pred_check
      _
    $region31: #{_lambda_.3} parent=1 // pred_check_branch
      %73 = sbr.rel (0) target = $region33
    $region32: #{_lambda_.3} parent=1 // pred_region
      _
    $region33: #{_lambda_.3} parent=1 // pred_fallthru
      _
    // Predicated region
    $region34: #{_lambda_.3} parent=1 // pred_check
      _
    $region35: #{_lambda_.3} parent=1 // pred_check_branch
      %75 = sbr.rel (0) target = $region37
    $region36: #{_lambda_.3} parent=1 // pred_region
      _
    $region37: #{_lambda_.3} parent=1 // pred_fallthru
      _
    // Predicated region
    $region38: #{_lambda_.3} parent=1 // pred_check
      _
    $region39: #{_lambda_.3} parent=1 // pred_check_branch
      %77 = sbr.rel (0) target = $region41
    $region40: #{_lambda_.3} parent=1 // pred_region
      _
    $region41: #{_lambda_.3} parent=1 // pred_fallthru
      _
    // Predicated region
    $region42: #{_lambda_.3} parent=1 // pred_check
      _
    $region43: #{_lambda_.3} parent=1 // pred_check_branch
      %79 = sbr.rel (0) target = $region45
    $region44: #{_lambda_.3} parent=1 // pred_region
      _
    $region45: #{_lambda_.3} parent=1 // pred_fallthru
      _
    // Predicated region
    $region46: #{_lambda_.3} parent=1 // pred_check
      _
    $region47: #{_lambda_.3} parent=1 // pred_check_branch
      %81 = sbr.rel (0) target = $region49
    $region48: #{_lambda_.3} parent=1 // pred_region
      _
    $region49: #{_lambda_.3} parent=1 // pred_fallthru
      _
    // Predicated region
    $region50: #{_lambda_.3} parent=1 // pred_check
      _
    $region51: #{_lambda_.3} parent=1 // pred_check_branch
      %83 = sbr.rel (0) target = $region53
    $region52: #{_lambda_.3} parent=1 // pred_region
      _
    $region53: #{_lambda_.3} parent=1 // pred_fallthru
      _
    // Predicated region
    $region54: #{_lambda_.3} parent=1 // pred_check
      _
    $region55: #{_lambda_.3} parent=1 // pred_check_branch
      %85 = sbr.rel (0) target = $region57
    $region56: #{_lambda_.3} parent=1 // pred_region
      _
    $region57: #{_lambda_.3} parent=1 // pred_fallthru
      _
    // Predicated region
    $region58: #{_lambda_.3} parent=1 // pred_check
      _
    $region59: #{_lambda_.3} parent=1 // pred_check_branch
      %87 = sbr.rel (0) target = $region61
    $region60: #{_lambda_.3} parent=1 // pred_region
      _
    $region61: #{_lambda_.3} parent=1 // pred_fallthru
      _
    // Predicated region
    $region62: #{_lambda_.3} parent=1 // pred_check
      _
    $region63: #{_lambda_.3} parent=1 // pred_check_branch
      %89 = sbr.rel (0) target = $region65
    $region64: #{_lambda_.3} parent=1 // pred_region
      _
    $region65: #{_lambda_.3} parent=1 // pred_fallthru
      _
    // Predicated region
    $region66: #{_lambda_.3} parent=1 // pred_check
      _
    $region67: #{_lambda_.3} parent=1 // pred_check_branch
      %91 = sbr.rel (0) target = $region69
    $region68: #{_lambda_.3} parent=1 // pred_region
      _
    $region69: #{_lambda_.3} parent=1 // pred_fallthru
      _
    // Predicated region
    $region70: #{_lambda_.3} parent=1 // pred_check
      _
    $region71: #{_lambda_.3} parent=1 // pred_check_branch
      %93 = sbr.rel (0) target = $region73
    $region72: #{_lambda_.3} parent=1 // pred_region
      _
    $region73: #{_lambda_.3} parent=1 // pred_fallthru
      _
    // Predicated region
    $region74: #{_lambda_.3} parent=1 // pred_check
      _
    $region75: #{_lambda_.3} parent=1 // pred_check_branch
      %95 = sbr.rel (0) target = $region77
    $region76: #{_lambda_.3} parent=1 // pred_region
      %97 = vsyncadd [#allocation5], 0
      %s99 = sshll.u32 %s18, 4
      %s100 = int_to_ptr.hbm [resolvable:$true] %s99
      %s101 = sshll.u32 [#allocation6], 4
      %s102 = int_to_ptr.vmem [resolvable:$true] %s101
      %104 = dma.hbm_to_vmem [thread:$0]  %s100, 16, %s102, [#allocation5]
    $region77: #{_lambda_.3} parent=1 // pred_fallthru
      _
    // Predicated region
    $region78: #{_lambda_.3} parent=1 // pred_check
      _
    $region79: #{_lambda_.3} parent=1 // pred_check_branch
      %106 = sbr.rel (0) target = $region81
    $region80: #{_lambda_.3} parent=1 // pred_region
      _
    $region81: #{_lambda_.3} parent=1 // pred_fallthru
      _
    // Predicated region
    $region82: #{_lambda_.3} parent=1 // pred_check
      _
    $region83: #{_lambda_.3} parent=1 // pred_check_branch
      %108 = sbr.rel (0) target = $region85
    $region84: #{_lambda_.3} parent=1 // pred_region
      _
    $region85: #{_lambda_.3} parent=1 // pred_fallthru
      _
    // Predicated region
    $region86: #{_lambda_.3} parent=1 // pred_check
      _
    $region87: #{_lambda_.3} parent=1 // pred_check_branch
      %110 = sbr.rel (0) target = $region89
    $region88: #{_lambda_.3} parent=1 // pred_region
      _
    $region89: #{_lambda_.3} parent=1 // pred_fallthru
      _
    // Predicated region
    $region90: #{_lambda_.3} parent=1 // pred_check
      _
    $region91: #{_lambda_.3} parent=1 // pred_check_branch
      %112 = sbr.rel (0) target = $region93
    $region92: #{_lambda_.3} parent=1 // pred_region
      _
    $region93: #{_lambda_.3} parent=1 // pred_fallthru
      _
    // Predicated region
    $region94: #{_lambda_.3} parent=1 // pred_check
      _
    $region95: #{_lambda_.3} parent=1 // pred_check_branch
      %114 = sbr.rel (0) target = $region97
    $region96: #{_lambda_.3} parent=1 // pred_region
      _
    $region97: #{_lambda_.3} parent=1 // pred_fallthru
      _
    // Predicated region
    $region98: #{_lambda_.3} parent=1 // pred_check
      _
    $region99: #{_lambda_.3} parent=1 // pred_check_branch
      %116 = sbr.rel (0) target = $region101
    $region100: #{_lambda_.3} parent=1 // pred_region
      _
    $region101: #{_lambda_.3} parent=1 // pred_fallthru
      _
    // Predicated region
    $region102: #{_lambda_.3} parent=1 // pred_check
      _
    $region103: #{_lambda_.3} parent=1 // pred_check_branch
      %118 = sbr.rel (0) target = $region105
    $region104: #{_lambda_.3} parent=1 // pred_region
      _
    $region105: #{_lambda_.3} parent=1 // pred_fallthru
      _
    // Predicated region
    $region106: #{_lambda_.3} parent=1 // pred_check
      _
    $region107: #{_lambda_.3} parent=1 // pred_check_branch
      %120 = sbr.rel (0) target = $region109
    $region108: #{_lambda_.3} parent=1 // pred_region
      %122 = dma.done [#allocation3], 128
    $region109: #{_lambda_.3} parent=1 // pred_fallthru
      _
    // Predicated region
    $region110: #{_lambda_.3} parent=1 // pred_check
      _
    $region111: #{_lambda_.3} parent=1 // pred_check_branch
      %124 = sbr.rel (0) target = $region113
    $region112: #{_lambda_.3} parent=1 // pred_region
      %126 = dma.done [#allocation5], 256
    $region113: #{_lambda_.3} parent=1 // pred_fallthru
      _
    // Predicated region
    $region114: #{_lambda_.3} parent=1 // pred_check
      _
    $region115: #{_lambda_.3} parent=1 // pred_check_branch
      %128 = sbr.rel (0) target = $region117
    $region116: #{_lambda_.3} parent=1 // pred_region
      %130 = dma.done [#allocation5], 16
    $region117: #{_lambda_.3} parent=1 // pred_fallthru
      _
    %v132 = vld [vmem:[%s0] sm:$0xff]
    %v133 = vld [vmem:[%s0 + $0x8] sm:$0xff]
    %v134 = vld [vmem:[#allocation2] sm:$0xf]
    %v135 = vld [vmem:[#allocation2 + $0x4] sm:$0xf]
    %v136 = vld [vmem:[%s5] sm:$0x1]
    %v137 = vpack.c.bf16 %v133, %v132
    %v139 = vperm.slane %v136, 0
    %v143 = vunpack.c.l.b16 %v134
    %v144 = vunpack.c.l.b16 %v135
    %v145 = vpack.c.b16 %v144, %v143
    %vm147 = vcmask 130048
    %v149 = vsel %vm147, %v137, 0
    %151 = vmatpush.bf16.msra.mxu0 0
    %152 = vmatpush.bf16.msra.mxu0 0
    %153 = vmatpush.bf16.msra.mxu0 0
    %154 = vmatpush.bf16.msra.mxu0 0
    %155 = vmatpush.bf16.msra.mxu0 0
    %156 = vmatpush.bf16.msra.mxu0 0
    %157 = vmatpush.bf16.msra.mxu0 0
    %158 = vmatpush.bf16.msra.mxu0 %v145
    %159 = vmatmul.bf16.gmra.mxu0 %v149
    %v160 = vpop.f32.mrf.mxu0
    %v161 = vadd.f32 %v139, %v160
    %v162 = vpop.f32.mrf.mxu0
    %v163 = vadd.f32 %v139, %v162
    %164 = vdwg.mxu0
    %vm165 = vcmp.ge.f32.partialorder %v161, 0.0
    %vm166 = vcmp.ge.f32.partialorder %v163, 0.0
    %v167 = vmul.f32 %v161, 0.01
    %v168 = vmul.f32 %v163, 0.01
    %v169 = vsel %vm165, %v161, %v167
    %v170 = vsel %vm166, %v163, %v168
    %v171 = vld [vmem:[#allocation4] sm:$0xf]
    %v172 = vld [vmem:[#allocation4 + $0x4] sm:$0xf]
    %v173 = vld [vmem:[#allocation4 + $0x8] sm:$0xf]
    %v174 = vld [vmem:[#allocation4 + $0xc] sm:$0xf]
    %v175 = vld [vmem:[%s7] sm:$0x1]
    %v176 = vpack.c.bf16 %v170, %v169
    %v178 = vperm.slane %v175, 0
    %v184 = vunpack.c.l.b16 %v171
    %v185 = vunpack.c.l.b16 %v172
    %v186 = vunpack.c.l.b16 %v173
    %v187 = vunpack.c.l.b16 %v174
    %v188 = vpack.c.b16 %v185, %v184
    %v189 = vpack.c.b16 %v187, %v186
    %vm192 = vcmask 261120
    %v194 = vsel %vm192, %v176, 0
    %196 = vmatpush.bf16.msra.mxu0 0
    %197 = vmatpush.bf16.msra.mxu0 0
    %198 = vmatpush.bf16.msra.mxu0 0
    %199 = vmatpush.bf16.msra.mxu0 0
    %200 = vmatpush.bf16.msra.mxu0 0
    %201 = vmatpush.bf16.msra.mxu0 0
    %202 = vmatpush.bf16.msra.mxu0 %v189
    %203 = vmatpush.bf16.msra.mxu0 %v188
    %204 = vmatmul.bf16.gmra.mxu0 %v194
    %v205 = vpop.f32.mrf.mxu0
    %v206 = vadd.f32 %v178, %v205
    %v207 = vpop.f32.mrf.mxu0
    %v208 = vadd.f32 %v178, %v207
    %209 = vdwg.mxu0
    %v210 = vld [vmem:[%s8] sm:$0x1]
    %v211 = vld [vmem:[%s9] sm:$0x1]
    %v212 = vsel %vm192, %v206, 0.0
    %213 = vadd.xlane.f32.xlu0 %v212
    %v214 = vpop.xlane.xlu0 %213
    %v215 = vsel %vm192, %v208, 0.0
    %216 = vadd.xlane.f32.xlu0 %v215
    %v217 = vpop.xlane.xlu0 %216
    %v218 = vrcp.pop 32.0
    %v219 = vmul.f32 32.0, %v218
    %v220 = vsub.f32 1.0, %v219
    %v221 = vmul.f32 %v218, %v220
    %v222 = vadd.f32 %v218, %v221
    %vm223 = vweird.f32 %v218
    %v224 = vsel %vm223, %v218, %v222
    %v225 = vmul.f32 %v214, %v224
    %v226 = vmul.f32 %v217, %v224
    %v227 = vsub.f32 %v206, %v225
    %v228 = vsub.f32 %v208, %v226
    %v229 = vmul.f32 %v227, %v227
    %v230 = vmul.f32 %v228, %v228
    %v231 = vsel %vm192, %v229, 0.0
    %232 = vadd.xlane.f32.xlu0 %v231
    %v233 = vpop.xlane.xlu0 %232
    %v234 = vsel %vm192, %v230, 0.0
    %235 = vadd.xlane.f32.xlu0 %v234
    %v236 = vpop.xlane.xlu0 %235
    %v237 = vmul.f32 %v233, %v224
    %v238 = vmul.f32 %v236, %v224
    %v239 = vadd.f32 %v237, 1e-05
    %v240 = vadd.f32 %v238, 1e-05
    %v241 = vrsqrt.pop %v239
    %v242 = vmul.f32 %v241, %v239
    %v243 = vmul.f32 %v242, %v241
    %v244 = vmul.f32 0.5, %v243
    %v245 = vsub.f32 1.5, %v244
    %v246 = vmul.f32 %v241, %v245
    %vm247 = vweird.f32 %v239
    %vm248 = vweird.f32 %v241
    %vm249 = vmor %vm247, %vm248
    %v250 = vsel %vm249, %v241, %v246
    %v251 = vrsqrt.pop %v240
    %v252 = vmul.f32 %v251, %v240
    %v253 = vmul.f32 %v252, %v251
    %v254 = vmul.f32 0.5, %v253
    %v255 = vsub.f32 1.5, %v254
    %v256 = vmul.f32 %v251, %v255
    %vm257 = vweird.f32 %v240
    %vm258 = vweird.f32 %v251
    %vm259 = vmor %vm257, %vm258
    %v260 = vsel %vm259, %v251, %v256
    %v261 = vmul.f32 %v227, %v250
    %v262 = vmul.f32 %v228, %v260
    %v264 = vperm.slane %v210, 0
    %v266 = vmul.f32 %v261, %v264
    %v267 = vmul.f32 %v262, %v264
    %v269 = vperm.slane %v211, 0
    %v271 = vadd.f32 %v266, %v269
    %v272 = vadd.f32 %v267, %v269
    %v273 = vld [vmem:[%s3] sm:$0xff]
    %v274 = vld [vmem:[%s3 + $0x8] sm:$0xff]
    %v275 = vadd.f32 %v271, %v273
    %v276 = vadd.f32 %v272, %v274
    %277 = vst.msk [vmem:[%s26] sm:$0xff] %vm192, %v275
    %278 = vst.msk [vmem:[%s26 + $0x8] sm:$0xff] %vm192, %v276
    %v279 = vld [vmem:[%s1] sm:$0xff]
    %v280 = vld [vmem:[%s1 + $0x8] sm:$0xff]
    %v281 = vld [vmem:[%s10] sm:$0x1]
    %v282 = vld [vmem:[%s11] sm:$0x1]
    %284 = vset.pattern.permute.xlu0 0
    %285 = vperm.xlu0 %284, %v279
    %v286 = vpop.permute.xlu0 %285
    %289 = vset.pattern.permute.xlu0 0
    %290 = vperm.xlu0 %289, %v280
    %v291 = vpop.permute.xlu0 %290
    %v294 = vperm.slane %v281, 0
    %v296 = vmul.f32 %v286, %v294
    %v297 = vmul.f32 %v291, %v294
    %v299 = vperm.slane %v282, 0
    %v301 = vadd.f32 %v296, %v299
    %v302 = vadd.f32 %v297, %v299
    %v303 = vtanh.pop %v301
    %v304 = vtanh.pop %v302
    %v305 = vld [vmem:[%s12] sm:$0xf]
    %v306 = vld [vmem:[%s12 + $0x4] sm:$0xf]
    %v307 = vld [vmem:[%s12 + $0x8] sm:$0xf]
    %v308 = vld [vmem:[%s12 + $0xc] sm:$0xf]
    %v309 = vld [vmem:[%s13] sm:$0x1]
    %v310 = vpack.c.bf16 %v304, %v303
    %v312 = vperm.slane %v309, 0
    %v318 = vunpack.c.l.b16 %v305
    %v319 = vunpack.c.l.b16 %v306
    %v320 = vunpack.c.l.b16 %v307
    %v321 = vunpack.c.l.b16 %v308
    %v322 = vpack.c.b16 %v319, %v318
    %v323 = vpack.c.b16 %v321, %v320
    %v327 = vsel %vm192, %v310, 0
    %329 = vmatpush.bf16.msra.mxu0 0
    %330 = vmatpush.bf16.msra.mxu0 0
    %331 = vmatpush.bf16.msra.mxu0 0
    %332 = vmatpush.bf16.msra.mxu0 0
    %333 = vmatpush.bf16.msra.mxu0 0
    %334 = vmatpush.bf16.msra.mxu0 0
    %335 = vmatpush.bf16.msra.mxu0 %v323
    %336 = vmatpush.bf16.msra.mxu0 %v322
    %337 = vmatmul.bf16.gmra.mxu0 %v327
    %v338 = vpop.f32.mrf.mxu0
    %v339 = vadd.f32 %v312, %v338
    %v340 = vpop.f32.mrf.mxu0
    %v341 = vadd.f32 %v312, %v340
    %342 = vdwg.mxu0
    %vm343 = vcmp.ge.f32.partialorder %v339, 0.0
    %vm344 = vcmp.ge.f32.partialorder %v341, 0.0
    %v345 = vmul.f32 %v339, 0.01
    %v346 = vmul.f32 %v341, 0.01
    %v347 = vsel %vm343, %v339, %v345
    %v348 = vsel %vm344, %v341, %v346
    %v349 = vld [vmem:[%s14] sm:$0xf]
    %v350 = vld [vmem:[%s14 + $0x4] sm:$0xf]
    %v351 = vld [vmem:[%s14 + $0x8] sm:$0xf]
    %v352 = vld [vmem:[%s14 + $0xc] sm:$0xf]
    %v353 = vld [vmem:[%s15] sm:$0x1]
    %v354 = vpack.c.bf16 %v348, %v347
    %v356 = vperm.slane %v353, 0
    %v362 = vunpack.c.l.b16 %v349
    %v363 = vunpack.c.l.b16 %v350
    %v364 = vunpack.c.l.b16 %v351
    %v365 = vunpack.c.l.b16 %v352
    %v366 = vpack.c.b16 %v363, %v362
    %v367 = vpack.c.b16 %v365, %v364
    %v371 = vsel %vm192, %v354, 0
    %373 = vmatpush.bf16.msra.mxu0 0
    %374 = vmatpush.bf16.msra.mxu0 0
    %375 = vmatpush.bf16.msra.mxu0 0
    %376 = vmatpush.bf16.msra.mxu0 0
    %377 = vmatpush.bf16.msra.mxu0 0
    %378 = vmatpush.bf16.msra.mxu0 0
    %379 = vmatpush.bf16.msra.mxu0 %v367
    %380 = vmatpush.bf16.msra.mxu0 %v366
    %381 = vmatmul.bf16.gmra.mxu0 %v371
    %v382 = vpop.f32.mrf.mxu0
    %v383 = vadd.f32 %v356, %v382
    %v384 = vpop.f32.mrf.mxu0
    %v385 = vadd.f32 %v356, %v384
    %386 = vdwg.mxu0
    %v387 = vld [vmem:[%s16] sm:$0x1]
    %v388 = vld [vmem:[%s17] sm:$0x1]
    %v389 = vsel %vm192, %v383, 0.0
    %390 = vadd.xlane.f32.xlu0 %v389
    %v391 = vpop.xlane.xlu0 %390
    %v392 = vsel %vm192, %v385, 0.0
    %393 = vadd.xlane.f32.xlu0 %v392
    %v394 = vpop.xlane.xlu0 %393
    %v395 = vmul.f32 %v391, %v224
    %v396 = vmul.f32 %v394, %v224
    %v397 = vsub.f32 %v383, %v395
    %v398 = vsub.f32 %v385, %v396
    %v399 = vmul.f32 %v397, %v397
    %v400 = vmul.f32 %v398, %v398
    %v401 = vsel %vm192, %v399, 0.0
    %402 = vadd.xlane.f32.xlu0 %v401
    %v403 = vpop.xlane.xlu0 %402
    %v404 = vsel %vm192, %v400, 0.0
    %405 = vadd.xlane.f32.xlu0 %v404
    %v406 = vpop.xlane.xlu0 %405
    %v407 = vmul.f32 %v403, %v224
    %v408 = vmul.f32 %v406, %v224
    %v409 = vadd.f32 %v407, 1e-05
    %v410 = vadd.f32 %v408, 1e-05
    %v411 = vrsqrt.pop %v409
    %v412 = vmul.f32 %v411, %v409
    %v413 = vmul.f32 %v412, %v411
    %v414 = vmul.f32 0.5, %v413
    %v415 = vsub.f32 1.5, %v414
    %v416 = vmul.f32 %v411, %v415
    %vm417 = vweird.f32 %v409
    %vm418 = vweird.f32 %v411
    %vm419 = vmor %vm417, %vm418
    %v420 = vsel %vm419, %v411, %v416
    %v421 = vrsqrt.pop %v410
    %v422 = vmul.f32 %v421, %v410
    %v423 = vmul.f32 %v422, %v421
    %v424 = vmul.f32 0.5, %v423
    %v425 = vsub.f32 1.5, %v424
    %v426 = vmul.f32 %v421, %v425
    %vm427 = vweird.f32 %v410
    %vm428 = vweird.f32 %v421
    %vm429 = vmor %vm427, %vm428
    %v430 = vsel %vm429, %v421, %v426
    %v431 = vmul.f32 %v397, %v420
    %v432 = vmul.f32 %v398, %v430
    %v434 = vperm.slane %v387, 0
    %v436 = vmul.f32 %v431, %v434
    %v437 = vmul.f32 %v432, %v434
    %v439 = vperm.slane %v388, 0
    %v441 = vadd.f32 %v436, %v439
    %v442 = vadd.f32 %v437, %v439
    %v443 = vld [vmem:[%s3] sm:$0xff]
    %v444 = vld [vmem:[%s3 + $0x8] sm:$0xff]
    %v445 = vadd.f32 %v441, %v443
    %v446 = vadd.f32 %v442, %v444
    %447 = vst.msk [vmem:[%s27] sm:$0xff] %vm192, %v445
    %448 = vst.msk [vmem:[%s27 + $0x8] sm:$0xff] %vm192, %v446
    %v449 = vld [vmem:[%s2] sm:$0xff]
    %v450 = vld [vmem:[%s2 + $0x8] sm:$0xff]
    %v451 = vld [vmem:[#allocation6] sm:$0x1]
    %v452 = vld [vmem:[%s19] sm:$0x1]
    %454 = vset.pattern.permute.xlu0 0
    %455 = vperm.xlu0 %454, %v449
    %v456 = vpop.permute.xlu0 %455
    %459 = vset.pattern.permute.xlu0 0
    %460 = vperm.xlu0 %459, %v450
    %v461 = vpop.permute.xlu0 %460
    %v464 = vperm.slane %v451, 0
    %v466 = vmul.f32 %v456, %v464
    %v467 = vmul.f32 %v461, %v464
    %v469 = vperm.slane %v452, 0
    %v471 = vadd.f32 %v466, %v469
    %v472 = vadd.f32 %v467, %v469
    %v473 = vtanh.pop %v471
    %v474 = vtanh.pop %v472
    %v475 = vld [vmem:[%s20] sm:$0xf]
    %v476 = vld [vmem:[%s20 + $0x4] sm:$0xf]
    %v477 = vld [vmem:[%s20 + $0x8] sm:$0xf]
    %v478 = vld [vmem:[%s20 + $0xc] sm:$0xf]
    %v479 = vld [vmem:[%s21] sm:$0x1]
    %v480 = vpack.c.bf16 %v474, %v473
    %v482 = vperm.slane %v479, 0
    %v488 = vunpack.c.l.b16 %v475
    %v489 = vunpack.c.l.b16 %v476
    %v490 = vunpack.c.l.b16 %v477
    %v491 = vunpack.c.l.b16 %v478
    %v492 = vpack.c.b16 %v489, %v488
    %v493 = vpack.c.b16 %v491, %v490
    %v497 = vsel %vm192, %v480, 0
    %499 = vmatpush.bf16.msra.mxu0 0
    %500 = vmatpush.bf16.msra.mxu0 0
    %501 = vmatpush.bf16.msra.mxu0 0
    %502 = vmatpush.bf16.msra.mxu0 0
    %503 = vmatpush.bf16.msra.mxu0 0
    %504 = vmatpush.bf16.msra.mxu0 0
    %505 = vmatpush.bf16.msra.mxu0 %v493
    %506 = vmatpush.bf16.msra.mxu0 %v492
    %507 = vmatmul.bf16.gmra.mxu0 %v497
    %v508 = vpop.f32.mrf.mxu0
    %v509 = vadd.f32 %v482, %v508
    %v510 = vpop.f32.mrf.mxu0
    %v511 = vadd.f32 %v482, %v510
    %512 = vdwg.mxu0
    %vm513 = vcmp.ge.f32.partialorder %v509, 0.0
    %vm514 = vcmp.ge.f32.partialorder %v511, 0.0
    %v515 = vmul.f32 %v509, 0.01
    %v516 = vmul.f32 %v511, 0.01
    %v517 = vsel %vm513, %v509, %v515
    %v518 = vsel %vm514, %v511, %v516
    %v519 = vld [vmem:[%s22] sm:$0xf]
    %v520 = vld [vmem:[%s22 + $0x4] sm:$0xf]
    %v521 = vld [vmem:[%s22 + $0x8] sm:$0xf]
    %v522 = vld [vmem:[%s22 + $0xc] sm:$0xf]
    %v523 = vld [vmem:[%s23] sm:$0x1]
    %v524 = vpack.c.bf16 %v518, %v517
    %v526 = vperm.slane %v523, 0
    %v532 = vunpack.c.l.b16 %v519
    %v533 = vunpack.c.l.b16 %v520
    %v534 = vunpack.c.l.b16 %v521
    %v535 = vunpack.c.l.b16 %v522
    %v536 = vpack.c.b16 %v533, %v532
    %v537 = vpack.c.b16 %v535, %v534
    %v541 = vsel %vm192, %v524, 0
    %543 = vmatpush.bf16.msra.mxu0 0
    %544 = vmatpush.bf16.msra.mxu0 0
    %545 = vmatpush.bf16.msra.mxu0 0
    %546 = vmatpush.bf16.msra.mxu0 0
    %547 = vmatpush.bf16.msra.mxu0 0
    %548 = vmatpush.bf16.msra.mxu0 0
    %549 = vmatpush.bf16.msra.mxu0 %v537
    %550 = vmatpush.bf16.msra.mxu0 %v536
    %551 = vmatmul.bf16.gmra.mxu0 %v541
    %v552 = vpop.f32.mrf.mxu0
    %v553 = vadd.f32 %v526, %v552
    %v554 = vpop.f32.mrf.mxu0
    %v555 = vadd.f32 %v526, %v554
    %556 = vdwg.mxu0
    %v557 = vld [vmem:[%s24] sm:$0x1]
    %v558 = vld [vmem:[%s25] sm:$0x1]
    %v559 = vsel %vm192, %v553, 0.0
    %560 = vadd.xlane.f32.xlu0 %v559
    %v561 = vpop.xlane.xlu0 %560
    %v562 = vsel %vm192, %v555, 0.0
    %563 = vadd.xlane.f32.xlu0 %v562
    %v564 = vpop.xlane.xlu0 %563
    %v565 = vmul.f32 %v561, %v224
    %v566 = vmul.f32 %v564, %v224
    %v567 = vsub.f32 %v553, %v565
    %v568 = vsub.f32 %v555, %v566
    %v569 = vmul.f32 %v567, %v567
    %v570 = vmul.f32 %v568, %v568
    %v571 = vsel %vm192, %v569, 0.0
    %572 = vadd.xlane.f32.xlu0 %v571
    %v573 = vpop.xlane.xlu0 %572
    %v574 = vsel %vm192, %v570, 0.0
    %575 = vadd.xlane.f32.xlu0 %v574
    %v576 = vpop.xlane.xlu0 %575
    %v577 = vmul.f32 %v573, %v224
    %v578 = vmul.f32 %v576, %v224
    %v579 = vadd.f32 %v577, 1e-05
    %v580 = vadd.f32 %v578, 1e-05
    %v581 = vrsqrt.pop %v579
    %v582 = vmul.f32 %v581, %v579
    %v583 = vmul.f32 %v582, %v581
    %v584 = vmul.f32 0.5, %v583
    %v585 = vsub.f32 1.5, %v584
    %v586 = vmul.f32 %v581, %v585
    %vm587 = vweird.f32 %v579
    %vm588 = vweird.f32 %v581
    %vm589 = vmor %vm587, %vm588
    %v590 = vsel %vm589, %v581, %v586
    %v591 = vrsqrt.pop %v580
    %v592 = vmul.f32 %v591, %v580
    %v593 = vmul.f32 %v592, %v591
    %v594 = vmul.f32 0.5, %v593
    %v595 = vsub.f32 1.5, %v594
    %v596 = vmul.f32 %v591, %v595
    %vm597 = vweird.f32 %v580
    %vm598 = vweird.f32 %v591
    %vm599 = vmor %vm597, %vm598
    %v600 = vsel %vm599, %v591, %v596
    %v601 = vmul.f32 %v567, %v590
    %v602 = vmul.f32 %v568, %v600
    %v604 = vperm.slane %v557, 0
    %v606 = vmul.f32 %v601, %v604
    %v607 = vmul.f32 %v602, %v604
    %v609 = vperm.slane %v558, 0
    %v611 = vadd.f32 %v606, %v609
    %v612 = vadd.f32 %v607, %v609
    %v613 = vld [vmem:[%s3] sm:$0xff]
    %v614 = vld [vmem:[%s3 + $0x8] sm:$0xff]
    %v615 = vadd.f32 %v611, %v613
    %v616 = vadd.f32 %v612, %v614
    %617 = vst.msk [vmem:[%s28] sm:$0xff] %vm192, %v615
    %618 = vst.msk [vmem:[%s28 + $0x8] sm:$0xff] %vm192, %v616
    // Predicated region
    $region118: #{_lambda_.3} parent=1 // pred_check
      _
    $region119: #{_lambda_.3} parent=1 // pred_check_branch
      %620 = sbr.rel (0) target = $region121
    $region120: #{_lambda_.3} parent=1 // pred_region
      _
    $region121: #{_lambda_.3} parent=1 // pred_fallthru
      _
    // Predicated region
    $region122: #{_lambda_.3} parent=1 // pred_check
      _
    $region123: #{_lambda_.3} parent=1 // pred_check_branch
      %622 = sbr.rel (0) target = $region125
    $region124: #{_lambda_.3} parent=1 // pred_region
      _
    $region125: #{_lambda_.3} parent=1 // pred_fallthru
      _
    // Predicated region
    $region126: #{_lambda_.3} parent=1 // pred_check
      _
    $region127: #{_lambda_.3} parent=1 // pred_check_branch
      %624 = sbr.rel (0) target = $region129
    $region128: #{_lambda_.3} parent=1 // pred_region
      _
    $region129: #{_lambda_.3} parent=1 // pred_fallthru
      _
    // Predicated region
    $region130: #{_lambda_.3} parent=1 // pred_check
      _
    $region131: #{_lambda_.3} parent=1 // pred_check_branch
      %626 = sbr.rel (0) target = $region133
    $region132: #{_lambda_.3} parent=1 // pred_region
      _
    $region133: #{_lambda_.3} parent=1 // pred_fallthru
      _
    // Predicated region
    $region134: #{_lambda_.3} parent=1 // pred_check
      _
    $region135: #{_lambda_.3} parent=1 // pred_check_branch
      %628 = sbr.rel (0) target = $region137
    $region136: #{_lambda_.3} parent=1 // pred_region
      _
    $region137: #{_lambda_.3} parent=1 // pred_fallthru
      _
    // Predicated region
    $region138: #{_lambda_.3} parent=1 // pred_check
      _
    $region139: #{_lambda_.3} parent=1 // pred_check_branch
      %630 = sbr.rel (0) target = $region141
    $region140: #{_lambda_.3} parent=1 // pred_region
      _
    $region141: #{_lambda_.3} parent=1 // pred_fallthru
      _
    %631 = vsyncpa [#allocation3], 1
    %632 = vsyncpa [#allocation5], 1

// kernel: _lambda_.5
$region0: #{_lambda_.5}
  #allocation0 [shape = 'u32[]', space=smem, size = 0x4, offset = 0x4, fixed_abs, tag = 'smem constant byte address 0x4 - core index']
  #allocation1 [shape = 'u32[72,128]{1,0:T(1,128)}', space=vmem, size = 0x9000, scoped, tag = 'internal scratch']
  #allocation2 [shape = 'f32[1,1]{1,0:T(1,128)S(1)}', space=vmem, size = 0x200, scoped, tag = 'scoped memory for _lambda_.5']
  #allocation3 [shape = 'f32[1,1]{1,0:T(1,128)S(1)}', space=vmem, size = 0x200, scoped, tag = 'scoped memory for _lambda_.5']
  %s0 = inlined_call_operand.vmem [shape: f32[16,32], index: 0, kind: input, shape index: {}]
  %s1 = inlined_call_operand.vmem [shape: f32[16,32], index: 1, kind: input, shape index: {}]
  %s2 = inlined_call_operand.vmem [shape: f32[16,32], index: 2, kind: input, shape index: {}]
  %s3 = inlined_call_operand.vmem [shape: bf16[32,32], index: 3, kind: input, shape index: {}]
  %s4 = inlined_call_operand.vmem [shape: f32[1,32], index: 4, kind: input, shape index: {}, may-alias: {4,8,12}]
  %s5 = inlined_call_operand.vmem [shape: bf16[32,1], index: 5, kind: input, shape index: {}]
  %s6 = inlined_call_operand.<no memory space> [shape: f32[1,1], index: 6, kind: input, shape index: {}, may-alias: {6,14}]
  %s7 = inlined_call_operand.vmem [shape: bf16[32,32], index: 7, kind: input, shape index: {}]
  %s8 = inlined_call_operand.vmem [shape: f32[1,32], index: 8, kind: input, shape index: {}, may-alias: {4,8,12}]
  %s9 = inlined_call_operand.vmem [shape: bf16[32,3], index: 9, kind: input, shape index: {}]
  %s10 = inlined_call_operand.vmem [shape: f32[1,3], index: 10, kind: input, shape index: {}]
  %s11 = inlined_call_operand.vmem [shape: bf16[32,32], index: 11, kind: input, shape index: {}]
  %s12 = inlined_call_operand.vmem [shape: f32[1,32], index: 12, kind: input, shape index: {}, may-alias: {4,8,12}]
  %s13 = inlined_call_operand.vmem [shape: bf16[32,1], index: 13, kind: input, shape index: {}]
  %s14 = inlined_call_operand.<no memory space> [shape: f32[1,1], index: 14, kind: input, shape index: {}, may-alias: {6,14}]
  %s15 = inlined_call_operand.vmem [shape: f32[16,1], index: 15, kind: output, shape index: {0}]
  %s16 = inlined_call_operand.vmem [shape: f32[16,3], index: 16, kind: output, shape index: {1}]
  %s17 = inlined_call_operand.vmem [shape: f32[16,1], index: 17, kind: output, shape index: {2}]
  %18 = xla_tuple %s15, %s16, %s17
  %s19 = sld [smem:[#allocation0]]
  $region86: #{_lambda_.5} parent=0
    _
  %s21 = ssub.s32 1, %s19
  %s22 = scalar_select 0, %s21, %s19
  %v23 = vstv %s6
  %24 = vst [vmem:[#allocation2] sm:$0x1] %v23
  %v25 = vstv %s14
  %26 = vst [vmem:[#allocation3] sm:$0x1] %v25
  // Predicated region
  $region2: #{_lambda_.5} parent=0 // pred_check
    _
  $region3: #{_lambda_.5} parent=0 // pred_check_branch
    %28 = sbr.rel (0) target = $region5
  $region4: #{_lambda_.5} parent=0 // pred_region
    _
  $region5: #{_lambda_.5} parent=0 // pred_fallthru
    _
  // Predicated region
  $region6: #{_lambda_.5} parent=0 // pred_check
    _
  $region7: #{_lambda_.5} parent=0 // pred_check_branch
    %30 = sbr.rel (0) target = $region9
  $region8: #{_lambda_.5} parent=0 // pred_region
    _
  $region9: #{_lambda_.5} parent=0 // pred_fallthru
    _
  // Predicated region
  $region10: #{_lambda_.5} parent=0 // pred_check
    _
  $region11: #{_lambda_.5} parent=0 // pred_check_branch
    %32 = sbr.rel (0) target = $region13
  $region12: #{_lambda_.5} parent=0 // pred_region
    _
  $region13: #{_lambda_.5} parent=0 // pred_fallthru
    _
  // Predicated region
  $region14: #{_lambda_.5} parent=0 // pred_check
    _
  $region15: #{_lambda_.5} parent=0 // pred_check_branch
    %34 = sbr.rel (0) target = $region17
  $region16: #{_lambda_.5} parent=0 // pred_region
    _
  $region17: #{_lambda_.5} parent=0 // pred_fallthru
    _
  // Predicated region
  $region18: #{_lambda_.5} parent=0 // pred_check
    _
  $region19: #{_lambda_.5} parent=0 // pred_check_branch
    %36 = sbr.rel (0) target = $region21
  $region20: #{_lambda_.5} parent=0 // pred_region
    _
  $region21: #{_lambda_.5} parent=0 // pred_fallthru
    _
  // Predicated region
  $region22: #{_lambda_.5} parent=0 // pred_check
    _
  $region23: #{_lambda_.5} parent=0 // pred_check_branch
    %38 = sbr.rel (0) target = $region25
  $region24: #{_lambda_.5} parent=0 // pred_region
    _
  $region25: #{_lambda_.5} parent=0 // pred_fallthru
    _
  // Predicated region
  $region26: #{_lambda_.5} parent=0 // pred_check
    _
  $region27: #{_lambda_.5} parent=0 // pred_check_branch
    %40 = sbr.rel (0) target = $region29
  $region28: #{_lambda_.5} parent=0 // pred_region
    _
  $region29: #{_lambda_.5} parent=0 // pred_fallthru
    _
  // Predicated region
  $region30: #{_lambda_.5} parent=0 // pred_check
    _
  $region31: #{_lambda_.5} parent=0 // pred_check_branch
    %42 = sbr.rel (0) target = $region33
  $region32: #{_lambda_.5} parent=0 // pred_region
    _
  $region33: #{_lambda_.5} parent=0 // pred_fallthru
    _
  // Predicated region
  $region34: #{_lambda_.5} parent=0 // pred_check
    _
  $region35: #{_lambda_.5} parent=0 // pred_check_branch
    %44 = sbr.rel (0) target = $region37
  $region36: #{_lambda_.5} parent=0 // pred_region
    _
  $region37: #{_lambda_.5} parent=0 // pred_fallthru
    _
  // Predicated region
  $region38: #{_lambda_.5} parent=0 // pred_check
    _
  $region39: #{_lambda_.5} parent=0 // pred_check_branch
    %46 = sbr.rel (0) target = $region41
  $region40: #{_lambda_.5} parent=0 // pred_region
    _
  $region41: #{_lambda_.5} parent=0 // pred_fallthru
    _
  // Predicated region
  $region42: #{_lambda_.5} parent=0 // pred_check
    _
  $region43: #{_lambda_.5} parent=0 // pred_check_branch
    %48 = sbr.rel (0) target = $region45
  $region44: #{_lambda_.5} parent=0 // pred_region
    _
  $region45: #{_lambda_.5} parent=0 // pred_fallthru
    _
  // Predicated region
  $region46: #{_lambda_.5} parent=0 // pred_check
    _
  $region47: #{_lambda_.5} parent=0 // pred_check_branch
    %50 = sbr.rel (0) target = $region49
  $region48: #{_lambda_.5} parent=0 // pred_region
    _
  $region49: #{_lambda_.5} parent=0 // pred_fallthru
    _
  // Predicated region
  $region50: #{_lambda_.5} parent=0 // pred_check
    _
  $region51: #{_lambda_.5} parent=0 // pred_check_branch
    %52 = sbr.rel (0) target = $region53
  $region52: #{_lambda_.5} parent=0 // pred_region
    _
  $region53: #{_lambda_.5} parent=0 // pred_fallthru
    _
  // Predicated region
  $region54: #{_lambda_.5} parent=0 // pred_check
    _
  $region55: #{_lambda_.5} parent=0 // pred_check_branch
    %54 = sbr.rel (0) target = $region57
  $region56: #{_lambda_.5} parent=0 // pred_region
    _
  $region57: #{_lambda_.5} parent=0 // pred_fallthru
    _
  // Predicated region
  $region58: #{_lambda_.5} parent=0 // pred_check
    _
  $region59: #{_lambda_.5} parent=0 // pred_check_branch
    %56 = sbr.rel (0) target = $region61
  $region60: #{_lambda_.5} parent=0 // pred_region
    _
  $region61: #{_lambda_.5} parent=0 // pred_fallthru
    _
  %v58 = vld [vmem:[%s0] sm:$0xff]
  %v59 = vld [vmem:[%s0 + $0x8] sm:$0xff]
  %v60 = vld [vmem:[%s3] sm:$0xf]
  %v61 = vld [vmem:[%s3 + $0x4] sm:$0xf]
  %v62 = vld [vmem:[%s3 + $0x8] sm:$0xf]
  %v63 = vld [vmem:[%s3 + $0xc] sm:$0xf]
  %v64 = vld [vmem:[%s4] sm:$0x1]
  %v65 = vpack.c.bf16 %v59, %v58
  %v67 = vperm.slane %v64, 0
  %v73 = vunpack.c.l.b16 %v60
  %v74 = vunpack.c.l.b16 %v61
  %v75 = vunpack.c.l.b16 %v62
  %v76 = vunpack.c.l.b16 %v63
  %v77 = vpack.c.b16 %v74, %v73
  %v78 = vpack.c.b16 %v76, %v75
  %vm81 = vcmask 261120
  %v83 = vsel %vm81, %v65, 0
  %85 = vmatpush.bf16.msra.mxu0 0
  %86 = vmatpush.bf16.msra.mxu0 0
  %87 = vmatpush.bf16.msra.mxu0 0
  %88 = vmatpush.bf16.msra.mxu0 0
  %89 = vmatpush.bf16.msra.mxu0 0
  %90 = vmatpush.bf16.msra.mxu0 0
  %91 = vmatpush.bf16.msra.mxu0 %v78
  %92 = vmatpush.bf16.msra.mxu0 %v77
  %93 = vmatmul.bf16.gmra.mxu0 %v83
  %v94 = vpop.f32.mrf.mxu0
  %v95 = vadd.f32 %v67, %v94
  %v96 = vpop.f32.mrf.mxu0
  %v97 = vadd.f32 %v67, %v96
  %98 = vdwg.mxu0
  %vm99 = vcmp.ge.f32.partialorder %v95, 0.0
  %vm100 = vcmp.ge.f32.partialorder %v97, 0.0
  %v101 = vmul.f32 %v95, 0.01
  %v102 = vmul.f32 %v97, 0.01
  %v103 = vsel %vm99, %v95, %v101
  %v104 = vsel %vm100, %v97, %v102
  %v105 = vld [vmem:[%s5] sm:$0xf]
  %v106 = vld [vmem:[%s5 + $0x4] sm:$0xf]
  %v107 = vld [vmem:[%s5 + $0x8] sm:$0xf]
  %v108 = vld [vmem:[%s5 + $0xc] sm:$0xf]
  %v109 = vld [vmem:[#allocation2] sm:$0x1]
  %v110 = vpack.c.bf16 %v104, %v103
  %v112 = vperm.slane %v109, 0
  %v118 = vunpack.c.l.b16 %v105
  %v119 = vunpack.c.l.b16 %v106
  %v120 = vunpack.c.l.b16 %v107
  %v121 = vunpack.c.l.b16 %v108
  %v122 = vpack.c.b16 %v119, %v118
  %v123 = vpack.c.b16 %v121, %v120
  %v127 = vsel %vm81, %v110, 0
  %129 = vmatpush.bf16.msra.mxu0 0
  %130 = vmatpush.bf16.msra.mxu0 0
  %131 = vmatpush.bf16.msra.mxu0 0
  %132 = vmatpush.bf16.msra.mxu0 0
  %133 = vmatpush.bf16.msra.mxu0 0
  %134 = vmatpush.bf16.msra.mxu0 0
  %135 = vmatpush.bf16.msra.mxu0 %v123
  %136 = vmatpush.bf16.msra.mxu0 %v122
  %137 = vmatmul.bf16.gmra.mxu0 %v127
  %v138 = vpop.f32.mrf.mxu0
  %v139 = vadd.f32 %v112, %v138
  %v140 = vpop.f32.mrf.mxu0
  %v141 = vadd.f32 %v112, %v140
  %142 = vdwg.mxu0
  %vm143 = vcmask 7168
  %144 = vst.msk [vmem:[%s15] sm:$0xff] %vm143, %v139
  %145 = vst.msk [vmem:[%s15 + $0x8] sm:$0xff] %vm143, %v141
  %v146 = vld [vmem:[%s1] sm:$0xff]
  %v147 = vld [vmem:[%s1 + $0x8] sm:$0xff]
  %v148 = vld [vmem:[%s7] sm:$0xf]
  %v149 = vld [vmem:[%s7 + $0x4] sm:$0xf]
  %v150 = vld [vmem:[%s7 + $0x8] sm:$0xf]
  %v151 = vld [vmem:[%s7 + $0xc] sm:$0xf]
  %v152 = vld [vmem:[%s8] sm:$0x1]
  %v153 = vpack.c.bf16 %v147, %v146
  %v155 = vperm.slane %v152, 0
  %v161 = vunpack.c.l.b16 %v148
  %v162 = vunpack.c.l.b16 %v149
  %v163 = vunpack.c.l.b16 %v150
  %v164 = vunpack.c.l.b16 %v151
  %v165 = vpack.c.b16 %v162, %v161
  %v166 = vpack.c.b16 %v164, %v163
  %v170 = vsel %vm81, %v153, 0
  %172 = vmatpush.bf16.msra.mxu0 0
  %173 = vmatpush.bf16.msra.mxu0 0
  %174 = vmatpush.bf16.msra.mxu0 0
  %175 = vmatpush.bf16.msra.mxu0 0
  %176 = vmatpush.bf16.msra.mxu0 0
  %177 = vmatpush.bf16.msra.mxu0 0
  %178 = vmatpush.bf16.msra.mxu0 %v166
  %179 = vmatpush.bf16.msra.mxu0 %v165
  %180 = vmatmul.bf16.gmra.mxu0 %v170
  %v181 = vpop.f32.mrf.mxu0
  %v182 = vadd.f32 %v155, %v181
  %v183 = vpop.f32.mrf.mxu0
  %v184 = vadd.f32 %v155, %v183
  %185 = vdwg.mxu0
  %vm186 = vcmp.ge.f32.partialorder %v182, 0.0
  %vm187 = vcmp.ge.f32.partialorder %v184, 0.0
  %v188 = vmul.f32 %v182, 0.01
  %v189 = vmul.f32 %v184, 0.01
  %v190 = vsel %vm186, %v182, %v188
  %v191 = vsel %vm187, %v184, %v189
  %v192 = vld [vmem:[%s9] sm:$0xf]
  %v193 = vld [vmem:[%s9 + $0x4] sm:$0xf]
  %v194 = vld [vmem:[%s9 + $0x8] sm:$0xf]
  %v195 = vld [vmem:[%s9 + $0xc] sm:$0xf]
  %v196 = vld [vmem:[%s10] sm:$0x1]
  %v197 = vpack.c.bf16 %v191, %v190
  %v199 = vperm.slane %v196, 0
  %v205 = vunpack.c.l.b16 %v192
  %v206 = vunpack.c.l.b16 %v193
  %v207 = vunpack.c.l.b16 %v194
  %v208 = vunpack.c.l.b16 %v195
  %v209 = vpack.c.b16 %v206, %v205
  %v210 = vpack.c.b16 %v208, %v207
  %v214 = vsel %vm81, %v197, 0
  %216 = vmatpush.bf16.msra.mxu0 0
  %217 = vmatpush.bf16.msra.mxu0 0
  %218 = vmatpush.bf16.msra.mxu0 0
  %219 = vmatpush.bf16.msra.mxu0 0
  %220 = vmatpush.bf16.msra.mxu0 0
  %221 = vmatpush.bf16.msra.mxu0 0
  %222 = vmatpush.bf16.msra.mxu0 %v210
  %223 = vmatpush.bf16.msra.mxu0 %v209
  %224 = vmatmul.bf16.gmra.mxu0 %v214
  %v225 = vpop.f32.mrf.mxu0
  %v226 = vadd.f32 %v199, %v225
  %v227 = vpop.f32.mrf.mxu0
  %v228 = vadd.f32 %v199, %v227
  %229 = vdwg.mxu0
  %vm230 = vcmask 23552
  %231 = vst.msk [vmem:[%s16] sm:$0xff] %vm230, %v226
  %232 = vst.msk [vmem:[%s16 + $0x8] sm:$0xff] %vm230, %v228
  %v233 = vld [vmem:[%s2] sm:$0xff]
  %v234 = vld [vmem:[%s2 + $0x8] sm:$0xff]
  %v235 = vld [vmem:[%s11] sm:$0xf]
  %v236 = vld [vmem:[%s11 + $0x4] sm:$0xf]
  %v237 = vld [vmem:[%s11 + $0x8] sm:$0xf]
  %v238 = vld [vmem:[%s11 + $0xc] sm:$0xf]
  %v239 = vld [vmem:[%s12] sm:$0x1]
  %v240 = vpack.c.bf16 %v234, %v233
  %v242 = vperm.slane %v239, 0
  %v248 = vunpack.c.l.b16 %v235
  %v249 = vunpack.c.l.b16 %v236
  %v250 = vunpack.c.l.b16 %v237
  %v251 = vunpack.c.l.b16 %v238
  %v252 = vpack.c.b16 %v249, %v248
  %v253 = vpack.c.b16 %v251, %v250
  %v257 = vsel %vm81, %v240, 0
  %259 = vmatpush.bf16.msra.mxu0 0
  %260 = vmatpush.bf16.msra.mxu0 0
  %261 = vmatpush.bf16.msra.mxu0 0
  %262 = vmatpush.bf16.msra.mxu0 0
  %263 = vmatpush.bf16.msra.mxu0 0
  %264 = vmatpush.bf16.msra.mxu0 0
  %265 = vmatpush.bf16.msra.mxu0 %v253
  %266 = vmatpush.bf16.msra.mxu0 %v252
  %267 = vmatmul.bf16.gmra.mxu0 %v257
  %v268 = vpop.f32.mrf.mxu0
  %v269 = vadd.f32 %v242, %v268
  %v270 = vpop.f32.mrf.mxu0
  %v271 = vadd.f32 %v242, %v270
  %272 = vdwg.mxu0
  %vm273 = vcmp.ge.f32.partialorder %v269, 0.0
  %vm274 = vcmp.ge.f32.partialorder %v271, 0.0
  %v275 = vmul.f32 %v269, 0.01
  %v276 = vmul.f32 %v271, 0.01
  %v277 = vsel %vm273, %v269, %v275
  %v278 = vsel %vm274, %v271, %v276
  %v279 = vld [vmem:[%s13] sm:$0xf]
  %v280 = vld [vmem:[%s13 + $0x4] sm:$0xf]
  %v281 = vld [vmem:[%s13 + $0x8] sm:$0xf]
  %v282 = vld [vmem:[%s13 + $0xc] sm:$0xf]
  %v283 = vld [vmem:[#allocation3] sm:$0x1]
  %v284 = vpack.c.bf16 %v278, %v277
  %v286 = vperm.slane %v283, 0
  %v292 = vunpack.c.l.b16 %v279
  %v293 = vunpack.c.l.b16 %v280
  %v294 = vunpack.c.l.b16 %v281
  %v295 = vunpack.c.l.b16 %v282
  %v296 = vpack.c.b16 %v293, %v292
  %v297 = vpack.c.b16 %v295, %v294
  %v301 = vsel %vm81, %v284, 0
  %303 = vmatpush.bf16.msra.mxu0 0
  %304 = vmatpush.bf16.msra.mxu0 0
  %305 = vmatpush.bf16.msra.mxu0 0
  %306 = vmatpush.bf16.msra.mxu0 0
  %307 = vmatpush.bf16.msra.mxu0 0
  %308 = vmatpush.bf16.msra.mxu0 0
  %309 = vmatpush.bf16.msra.mxu0 %v297
  %310 = vmatpush.bf16.msra.mxu0 %v296
  %311 = vmatmul.bf16.gmra.mxu0 %v301
  %v312 = vpop.f32.mrf.mxu0
  %v313 = vadd.f32 %v286, %v312
  %v314 = vpop.f32.mrf.mxu0
  %v315 = vadd.f32 %v286, %v314
  %316 = vdwg.mxu0
  %317 = vst.msk [vmem:[%s17] sm:$0xff] %vm143, %v313
  %318 = vst.msk [vmem:[%s17 + $0x8] sm:$0xff] %vm143, %v315
  // Predicated region
  $region62: #{_lambda_.5} parent=0 // pred_check
    _
  $region63: #{_lambda_.5} parent=0 // pred_check_branch
    %320 = sbr.rel (0) target = $region65
  $region64: #{_lambda_.5} parent=0 // pred_region
    _
  $region65: #{_lambda_.5} parent=0 // pred_fallthru
    _
  // Predicated region
  $region66: #{_lambda_.5} parent=0 // pred_check
    _
  $region67: #{_lambda_.5} parent=0 // pred_check_branch
    %322 = sbr.rel (0) target = $region69
  $region68: #{_lambda_.5} parent=0 // pred_region
    _
  $region69: #{_lambda_.5} parent=0 // pred_fallthru
    _
  // Predicated region
  $region70: #{_lambda_.5} parent=0 // pred_check
    _
  $region71: #{_lambda_.5} parent=0 // pred_check_branch
    %324 = sbr.rel (0) target = $region73
  $region72: #{_lambda_.5} parent=0 // pred_region
    _
  $region73: #{_lambda_.5} parent=0 // pred_fallthru
    _
  // Predicated region
  $region74: #{_lambda_.5} parent=0 // pred_check
    _
  $region75: #{_lambda_.5} parent=0 // pred_check_branch
    %326 = sbr.rel (0) target = $region77
  $region76: #{_lambda_.5} parent=0 // pred_region
    _
  $region77: #{_lambda_.5} parent=0 // pred_fallthru
    _
  // Predicated region
  $region78: #{_lambda_.5} parent=0 // pred_check
    _
  $region79: #{_lambda_.5} parent=0 // pred_check_branch
    %328 = sbr.rel (0) target = $region81
  $region80: #{_lambda_.5} parent=0 // pred_region
    _
  $region81: #{_lambda_.5} parent=0 // pred_fallthru
    _
  // Predicated region
  $region82: #{_lambda_.5} parent=0 // pred_check
    _
  $region83: #{_lambda_.5} parent=0 // pred_check_branch
    %330 = sbr.rel (0) target = $region85
  $region84: #{_lambda_.5} parent=0 // pred_region
    _
  $region85: #{_lambda_.5} parent=0 // pred_fallthru
    _

// kernel: _lambda_.4
$region0: #{_lambda_.4}
  #allocation0 [shape = 'u32[]', space=smem, size = 0x4, offset = 0x4, fixed_abs, tag = 'smem constant byte address 0x4 - core index']
  #allocation1 [shape = 'u32[72,128]{1,0:T(1,128)}', space=vmem, size = 0x9000, scoped, tag = 'internal scratch']
  %s0 = inlined_call_operand.vmem [shape: f32[80,32], index: 0, kind: input, shape index: {}]
  %s1 = inlined_call_operand.vmem [shape: f32[80,80], index: 1, kind: input, shape index: {}]
  %s2 = inlined_call_operand.vmem [shape: bf16[2,32,96], index: 2, kind: input, shape index: {}]
  %s3 = inlined_call_operand.vmem [shape: f32[2,1,96], index: 3, kind: input, shape index: {}]
  %s4 = inlined_call_operand.vmem [shape: bf16[2,32,32], index: 4, kind: input, shape index: {}]
  %s5 = inlined_call_operand.vmem [shape: f32[2,1,32], index: 5, kind: input, shape index: {}, may-alias: {5,9,11,13}]
  %s6 = inlined_call_operand.vmem [shape: bf16[2,32,64], index: 6, kind: input, shape index: {}]
  %s7 = inlined_call_operand.vmem [shape: f32[2,1,64], index: 7, kind: input, shape index: {}]
  %s8 = inlined_call_operand.vmem [shape: bf16[2,64,32], index: 8, kind: input, shape index: {}]
  %s9 = inlined_call_operand.vmem [shape: f32[2,1,32], index: 9, kind: input, shape index: {}, may-alias: {5,9,11,13}]
  %s10 = inlined_call_operand.vmem [shape: f32[2,1,32], index: 10, kind: input, shape index: {}, may-alias: {10,12}]
  %s11 = inlined_call_operand.vmem [shape: f32[2,1,32], index: 11, kind: input, shape index: {}, may-alias: {5,9,11,13}]
  %s12 = inlined_call_operand.vmem [shape: f32[2,1,32], index: 12, kind: input, shape index: {}, may-alias: {10,12}]
  %s13 = inlined_call_operand.vmem [shape: f32[2,1,32], index: 13, kind: input, shape index: {}, may-alias: {5,9,11,13}]
  %s14 = inlined_call_operand.vmem [shape: f32[80,32], index: 14, kind: output, shape index: {}]
  %s15 = sld [smem:[#allocation0]]
  $region66: #{_lambda_.4} parent=0
    _
  %s17 = ssub.s32 1, %s15
  %s18 = scalar_select 0, %s17, %s15
  // Predicated region
  $region2: #{_lambda_.4} parent=0 // pred_check
    _
  $region3: #{_lambda_.4} parent=0 // pred_check_branch
    %20 = sbr.rel (0) target = $region5
  $region4: #{_lambda_.4} parent=0 // pred_region
    _
  $region5: #{_lambda_.4} parent=0 // pred_fallthru
    _
  // Predicated region
  $region6: #{_lambda_.4} parent=0 // pred_check
    _
  $region7: #{_lambda_.4} parent=0 // pred_check_branch
    %22 = sbr.rel (0) target = $region9
  $region8: #{_lambda_.4} parent=0 // pred_region
    _
  $region9: #{_lambda_.4} parent=0 // pred_fallthru
    _
  // Predicated region
  $region10: #{_lambda_.4} parent=0 // pred_check
    _
  $region11: #{_lambda_.4} parent=0 // pred_check_branch
    %24 = sbr.rel (0) target = $region13
  $region12: #{_lambda_.4} parent=0 // pred_region
    _
  $region13: #{_lambda_.4} parent=0 // pred_fallthru
    _
  // Predicated region
  $region14: #{_lambda_.4} parent=0 // pred_check
    _
  $region15: #{_lambda_.4} parent=0 // pred_check_branch
    %26 = sbr.rel (0) target = $region17
  $region16: #{_lambda_.4} parent=0 // pred_region
    _
  $region17: #{_lambda_.4} parent=0 // pred_fallthru
    _
  // Predicated region
  $region18: #{_lambda_.4} parent=0 // pred_check
    _
  $region19: #{_lambda_.4} parent=0 // pred_check_branch
    %28 = sbr.rel (0) target = $region21
  $region20: #{_lambda_.4} parent=0 // pred_region
    _
  $region21: #{_lambda_.4} parent=0 // pred_fallthru
    _
  // Predicated region
  $region22: #{_lambda_.4} parent=0 // pred_check
    _
  $region23: #{_lambda_.4} parent=0 // pred_check_branch
    %30 = sbr.rel (0) target = $region25
  $region24: #{_lambda_.4} parent=0 // pred_region
    _
  $region25: #{_lambda_.4} parent=0 // pred_fallthru
    _
  // Predicated region
  $region26: #{_lambda_.4} parent=0 // pred_check
    _
  $region27: #{_lambda_.4} parent=0 // pred_check_branch
    %32 = sbr.rel (0) target = $region29
  $region28: #{_lambda_.4} parent=0 // pred_region
    _
  $region29: #{_lambda_.4} parent=0 // pred_fallthru
    _
  // Predicated region
  $region30: #{_lambda_.4} parent=0 // pred_check
    _
  $region31: #{_lambda_.4} parent=0 // pred_check_branch
    %34 = sbr.rel (0) target = $region33
  $region32: #{_lambda_.4} parent=0 // pred_region
    _
  $region33: #{_lambda_.4} parent=0 // pred_fallthru
    _
  // Predicated region
  $region34: #{_lambda_.4} parent=0 // pred_check
    _
  $region35: #{_lambda_.4} parent=0 // pred_check_branch
    %36 = sbr.rel (0) target = $region37
  $region36: #{_lambda_.4} parent=0 // pred_region
    _
  $region37: #{_lambda_.4} parent=0 // pred_fallthru
    _
  // Predicated region
  $region38: #{_lambda_.4} parent=0 // pred_check
    _
  $region39: #{_lambda_.4} parent=0 // pred_check_branch
    %38 = sbr.rel (0) target = $region41
  $region40: #{_lambda_.4} parent=0 // pred_region
    _
  $region41: #{_lambda_.4} parent=0 // pred_fallthru
    _
  // Predicated region
  $region42: #{_lambda_.4} parent=0 // pred_check
    _
  $region43: #{_lambda_.4} parent=0 // pred_check_branch
    %40 = sbr.rel (0) target = $region45
  $region44: #{_lambda_.4} parent=0 // pred_region
    _
  $region45: #{_lambda_.4} parent=0 // pred_fallthru
    _
  // Predicated region
  $region46: #{_lambda_.4} parent=0 // pred_check
    _
  $region47: #{_lambda_.4} parent=0 // pred_check_branch
    %42 = sbr.rel (0) target = $region49
  $region48: #{_lambda_.4} parent=0 // pred_region
    _
  $region49: #{_lambda_.4} parent=0 // pred_fallthru
    _
  // Predicated region
  $region50: #{_lambda_.4} parent=0 // pred_check
    _
  $region51: #{_lambda_.4} parent=0 // pred_check_branch
    %44 = sbr.rel (0) target = $region53
  $region52: #{_lambda_.4} parent=0 // pred_region
    _
  $region53: #{_lambda_.4} parent=0 // pred_fallthru
    _
  // Predicated region
  $region54: #{_lambda_.4} parent=0 // pred_check
    _
  $region55: #{_lambda_.4} parent=0 // pred_check_branch
    %46 = sbr.rel (0) target = $region57
  $region56: #{_lambda_.4} parent=0 // pred_region
    _
  $region57: #{_lambda_.4} parent=0 // pred_fallthru
    _
  %v48 = vld [vmem:[%s0] sm:$0xff]
  %v49 = vld [vmem:[%s0 + $0x8] sm:$0xff]
  %v50 = vld [vmem:[%s0 + $0x10] sm:$0xff]
  %v51 = vld [vmem:[%s0 + $0x18] sm:$0xff]
  %v52 = vld [vmem:[%s0 + $0x20] sm:$0xff]
  %v53 = vld [vmem:[%s0 + $0x28] sm:$0xff]
  %v54 = vld [vmem:[%s0 + $0x30] sm:$0xff]
  %v55 = vld [vmem:[%s0 + $0x38] sm:$0xff]
  %v56 = vld [vmem:[%s0 + $0x40] sm:$0xff]
  %v57 = vld [vmem:[%s0 + $0x48] sm:$0xff]
  %v58 = vld [vmem:[%s1] sm:$0xff]
  %v59 = vld [vmem:[%s1 + $0x8] sm:$0xff]
  %v60 = vld [vmem:[%s1 + $0x10] sm:$0xff]
  %v61 = vld [vmem:[%s1 + $0x18] sm:$0xff]
  %v62 = vld [vmem:[%s1 + $0x20] sm:$0xff]
  %v63 = vld [vmem:[%s1 + $0x28] sm:$0xff]
  %v64 = vld [vmem:[%s1 + $0x30] sm:$0xff]
  %v65 = vld [vmem:[%s1 + $0x38] sm:$0xff]
  %v66 = vld [vmem:[%s1 + $0x40] sm:$0xff]
  %v67 = vld [vmem:[%s1 + $0x48] sm:$0xff]
  %v68 = vpack.c.bf16 %v49, %v48
  %v69 = vpack.c.bf16 %v51, %v50
  %v70 = vpack.c.bf16 %v53, %v52
  %v71 = vpack.c.bf16 %v55, %v54
  %v72 = vpack.c.bf16 %v57, %v56
  %v73 = vld [vmem:[%s2] sm:$0xf]
  %v74 = vld [vmem:[%s2 + $0x4] sm:$0xf]
  %v75 = vld [vmem:[%s2 + $0x8] sm:$0xf]
  %v76 = vld [vmem:[%s2 + $0xc] sm:$0xf]
  %v77 = vld [vmem:[%s3] sm:$0x1]
  %v79 = vperm.slane %v77, 0
  %v85 = vunpack.c.l.b16 %v73
  %v86 = vunpack.c.l.b16 %v74
  %v87 = vunpack.c.l.b16 %v75
  %v88 = vunpack.c.l.b16 %v76
  %v89 = vpack.c.b16 %v86, %v85
  %v90 = vpack.c.b16 %v88, %v87
  %vm93 = vcmask 261120
  %v95 = vsel %vm93, %v68, 0
  %v98 = vsel %vm93, %v69, 0
  %v101 = vsel %vm93, %v70, 0
  %v104 = vsel %vm93, %v71, 0
  %v107 = vsel %vm93, %v72, 0
  %109 = vmatpush.bf16.msra.mxu0 0
  %110 = vmatpush.bf16.msra.mxu0 0
  %111 = vmatpush.bf16.msra.mxu0 0
  %112 = vmatpush.bf16.msra.mxu0 0
  %113 = vmatpush.bf16.msra.mxu0 0
  %114 = vmatpush.bf16.msra.mxu0 0
  %115 = vmatpush.bf16.msra.mxu0 %v90
  %116 = vmatpush.bf16.msra.mxu0 %v89
  %117 = vmatmul.bf16.gmra.mxu0 %v95
  %v118 = vpop.f32.mrf.mxu0
  %v119 = vadd.f32 %v79, %v118
  %v120 = vpop.f32.mrf.mxu0
  %v121 = vadd.f32 %v79, %v120
  %122 = vmatmul.bf16.gmra.mxu0 %v98
  %v123 = vpop.f32.mrf.mxu0
  %v124 = vadd.f32 %v79, %v123
  %v125 = vpop.f32.mrf.mxu0
  %v126 = vadd.f32 %v79, %v125
  %127 = vmatmul.bf16.gmra.mxu0 %v101
  %v128 = vpop.f32.mrf.mxu0
  %v129 = vadd.f32 %v79, %v128
  %v130 = vpop.f32.mrf.mxu0
  %v131 = vadd.f32 %v79, %v130
  %132 = vmatmul.bf16.gmra.mxu0 %v104
  %v133 = vpop.f32.mrf.mxu0
  %v134 = vadd.f32 %v79, %v133
  %v135 = vpop.f32.mrf.mxu0
  %v136 = vadd.f32 %v79, %v135
  %137 = vmatmul.bf16.gmra.mxu0 %v107
  %v138 = vpop.f32.mrf.mxu0
  %v139 = vadd.f32 %v79, %v138
  %v140 = vpop.f32.mrf.mxu0
  %v141 = vadd.f32 %v79, %v140
  %142 = vdwg.mxu0
  %v143 = vpack.c.bf16 %v121, %v119
  %v144 = vpack.c.bf16 %v126, %v124
  %v145 = vpack.c.bf16 %v131, %v129
  %v146 = vpack.c.bf16 %v136, %v134
  %v147 = vpack.c.bf16 %v141, %v139
  %153 = vrot.lane.b32.xlu0 %v143, 96
  %v154 = vpop.permute.xlu0 %153
  %155 = vrot.lane.b32.xlu0 %v144, 96
  %v156 = vpop.permute.xlu0 %155
  %157 = vrot.lane.b32.xlu0 %v145, 96
  %v158 = vpop.permute.xlu0 %157
  %159 = vrot.lane.b32.xlu0 %v146, 96
  %v160 = vpop.permute.xlu0 %159
  %161 = vrot.lane.b32.xlu0 %v147, 96
  %v162 = vpop.permute.xlu0 %161
  %vm163 = vcmask 130048
  %v165 = vsel %vm163, %v143, 0
  %v168 = vsel %vm163, %v144, 0
  %v171 = vsel %vm163, %v145, 0
  %v174 = vsel %vm163, %v146, 0
  %v177 = vsel %vm163, %v147, 0
  %v180 = vsel %vm163, %v154, 0
  %v183 = vsel %vm163, %v156, 0
  %v186 = vsel %vm163, %v158, 0
  %v189 = vsel %vm163, %v160, 0
  %v192 = vsel %vm163, %v162, 0
  %194 = vmatpush.bf16.xpose.msra.mxu0 0
  %195 = vmatpush.bf16.xpose.msra.mxu0 0
  %196 = vmatpush.bf16.xpose.msra.mxu0 0
  %197 = vmatpush.bf16.xpose.msra.mxu0 %v192
  %198 = vmatpush.bf16.xpose.msra.mxu0 %v189
  %199 = vmatpush.bf16.xpose.msra.mxu0 %v186
  %200 = vmatpush.bf16.xpose.msra.mxu0 %v183
  %201 = vmatpush.bf16.xpose.msra.mxu0 %v180
  %202 = vmatmul.bf16.gmra.mxu0 %v165
  %v203 = vpop.f32.mrf.mxu0
  %v204 = vadd.f32 0.0, %v203
  %v205 = vpop.f32.mrf.mxu0
  %v206 = vadd.f32 0.0, %v205
  %207 = vmatmul.bf16.gmra.mxu0 %v168
  %v208 = vpop.f32.mrf.mxu0
  %v209 = vadd.f32 0.0, %v208
  %v210 = vpop.f32.mrf.mxu0
  %v211 = vadd.f32 0.0, %v210
  %212 = vmatmul.bf16.gmra.mxu0 %v171
  %v213 = vpop.f32.mrf.mxu0
  %v214 = vadd.f32 0.0, %v213
  %v215 = vpop.f32.mrf.mxu0
  %v216 = vadd.f32 0.0, %v215
  %217 = vmatmul.bf16.gmra.mxu0 %v174
  %v218 = vpop.f32.mrf.mxu0
  %v219 = vadd.f32 0.0, %v218
  %v220 = vpop.f32.mrf.mxu0
  %v221 = vadd.f32 0.0, %v220
  %222 = vmatmul.bf16.gmra.mxu0 %v177
  %v223 = vpop.f32.mrf.mxu0
  %v224 = vadd.f32 0.0, %v223
  %v225 = vpop.f32.mrf.mxu0
  %v226 = vadd.f32 0.0, %v225
  %227 = vdwg.mxu0
  %v228 = vmul.f32 %v204, 0.25
  %v229 = vmul.f32 %v206, 0.25
  %v230 = vmul.f32 %v209, 0.25
  %v231 = vmul.f32 %v211, 0.25
  %v232 = vmul.f32 %v214, 0.25
  %v233 = vmul.f32 %v216, 0.25
  %v234 = vmul.f32 %v219, 0.25
  %v235 = vmul.f32 %v221, 0.25
  %v236 = vmul.f32 %v224, 0.25
  %v237 = vmul.f32 %v226, 0.25
  %v238 = vadd.f32 %v228, %v58
  %v239 = vadd.f32 %v229, %v59
  %v240 = vadd.f32 %v230, %v60
  %v241 = vadd.f32 %v231, %v61
  %v242 = vadd.f32 %v232, %v62
  %v243 = vadd.f32 %v233, %v63
  %v244 = vadd.f32 %v234, %v64
  %v245 = vadd.f32 %v235, %v65
  %v246 = vadd.f32 %v236, %v66
  %v247 = vadd.f32 %v237, %v67
  %vm248 = vcmask 654336
  %v249 = vsel %vm248, %v238, -inf
  %250 = vmax.xlane.f32.xlu0 %v249
  %v251 = vpop.xlane.xlu0 %250
  %v252 = vsel %vm248, %v239, -inf
  %253 = vmax.xlane.f32.xlu0 %v252
  %v254 = vpop.xlane.xlu0 %253
  %v255 = vsel %vm248, %v240, -inf
  %256 = vmax.xlane.f32.xlu0 %v255
  %v257 = vpop.xlane.xlu0 %256
  %v258 = vsel %vm248, %v241, -inf
  %259 = vmax.xlane.f32.xlu0 %v258
  %v260 = vpop.xlane.xlu0 %259
  %v261 = vsel %vm248, %v242, -inf
  %262 = vmax.xlane.f32.xlu0 %v261
  %v263 = vpop.xlane.xlu0 %262
  %v264 = vsel %vm248, %v243, -inf
  %265 = vmax.xlane.f32.xlu0 %v264
  %v266 = vpop.xlane.xlu0 %265
  %v267 = vsel %vm248, %v244, -inf
  %268 = vmax.xlane.f32.xlu0 %v267
  %v269 = vpop.xlane.xlu0 %268
  %v270 = vsel %vm248, %v245, -inf
  %271 = vmax.xlane.f32.xlu0 %v270
  %v272 = vpop.xlane.xlu0 %271
  %v273 = vsel %vm248, %v246, -inf
  %274 = vmax.xlane.f32.xlu0 %v273
  %v275 = vpop.xlane.xlu0 %274
  %v276 = vsel %vm248, %v247, -inf
  %277 = vmax.xlane.f32.xlu0 %v276
  %v278 = vpop.xlane.xlu0 %277
  %v279 = vsub.f32 %v238, %v251
  %v280 = vsub.f32 %v239, %v254
  %v281 = vsub.f32 %v240, %v257
  %v282 = vsub.f32 %v241, %v260
  %v283 = vsub.f32 %v242, %v263
  %v284 = vsub.f32 %v243, %v266
  %v285 = vsub.f32 %v244, %v269
  %v286 = vsub.f32 %v245, %v272
  %v287 = vsub.f32 %v246, %v275
  %v288 = vsub.f32 %v247, %v278
  %v289 = vmul.f32 %v279, 1.442695
  %v290 = vpow.pop %v289
  %v291 = vmul.f32 %v280, 1.442695
  %v292 = vpow.pop %v291
  %v293 = vmul.f32 %v281, 1.442695
  %v294 = vpow.pop %v293
  %v295 = vmul.f32 %v282, 1.442695
  %v296 = vpow.pop %v295
  %v297 = vmul.f32 %v283, 1.442695
  %v298 = vpow.pop %v297
  %v299 = vmul.f32 %v284, 1.442695
  %v300 = vpow.pop %v299
  %v301 = vmul.f32 %v285, 1.442695
  %v302 = vpow.pop %v301
  %v303 = vmul.f32 %v286, 1.442695
  %v304 = vpow.pop %v303
  %v305 = vmul.f32 %v287, 1.442695
  %v306 = vpow.pop %v305
  %v307 = vmul.f32 %v288, 1.442695
  %v308 = vpow.pop %v307
  %v309 = vsel %vm248, %v290, 0.0
  %310 = vadd.xlane.f32.xlu0 %v309
  %v311 = vpop.xlane.xlu0 %310
  %v312 = vsel %vm248, %v292, 0.0
  %313 = vadd.xlane.f32.xlu0 %v312
  %v314 = vpop.xlane.xlu0 %313
  %v315 = vsel %vm248, %v294, 0.0
  %316 = vadd.xlane.f32.xlu0 %v315
  %v317 = vpop.xlane.xlu0 %316
  %v318 = vsel %vm248, %v296, 0.0
  %319 = vadd.xlane.f32.xlu0 %v318
  %v320 = vpop.xlane.xlu0 %319
  %v321 = vsel %vm248, %v298, 0.0
  %322 = vadd.xlane.f32.xlu0 %v321
  %v323 = vpop.xlane.xlu0 %322
  %v324 = vsel %vm248, %v300, 0.0
  %325 = vadd.xlane.f32.xlu0 %v324
  %v326 = vpop.xlane.xlu0 %325
  %v327 = vsel %vm248, %v302, 0.0
  %328 = vadd.xlane.f32.xlu0 %v327
  %v329 = vpop.xlane.xlu0 %328
  %v330 = vsel %vm248, %v304, 0.0
  %331 = vadd.xlane.f32.xlu0 %v330
  %v332 = vpop.xlane.xlu0 %331
  %v333 = vsel %vm248, %v306, 0.0
  %334 = vadd.xlane.f32.xlu0 %v333
  %v335 = vpop.xlane.xlu0 %334
  %v336 = vsel %vm248, %v308, 0.0
  %337 = vadd.xlane.f32.xlu0 %v336
  %v338 = vpop.xlane.xlu0 %337
  %v339 = vrcp.pop %v311
  %v340 = vrcp.pop %v314
  %v341 = vrcp.pop %v317
  %v342 = vrcp.pop %v320
  %v343 = vrcp.pop %v323
  %v344 = vrcp.pop %v326
  %v345 = vrcp.pop %v329
  %v346 = vrcp.pop %v332
  %v347 = vrcp.pop %v335
  %v348 = vrcp.pop %v338
  %v349 = vmul.f32 %v290, %v339
  %v350 = vmul.f32 %v292, %v340
  %v351 = vmul.f32 %v294, %v341
  %v352 = vmul.f32 %v296, %v342
  %v353 = vmul.f32 %v298, %v343
  %v354 = vmul.f32 %v300, %v344
  %v355 = vmul.f32 %v302, %v345
  %v356 = vmul.f32 %v304, %v346
  %v357 = vmul.f32 %v306, %v347
  %v358 = vmul.f32 %v308, %v348
  %v359 = vpack.c.bf16 %v350, %v349
  %v360 = vpack.c.bf16 %v352, %v351
  %v361 = vpack.c.bf16 %v354, %v353
  %v362 = vpack.c.bf16 %v356, %v355
  %v363 = vpack.c.bf16 %v358, %v357
  %364 = vrot.lane.b32.xlu0 %v143, 64
  %v365 = vpop.permute.xlu0 %364
  %366 = vrot.lane.b32.xlu0 %v144, 64
  %v367 = vpop.permute.xlu0 %366
  %368 = vrot.lane.b32.xlu0 %v145, 64
  %v369 = vpop.permute.xlu0 %368
  %370 = vrot.lane.b32.xlu0 %v146, 64
  %v371 = vpop.permute.xlu0 %370
  %372 = vrot.lane.b32.xlu0 %v147, 64
  %v373 = vpop.permute.xlu0 %372
  %v380 = vsel %vm248, %v359, 0
  %v383 = vsel %vm248, %v360, 0
  %v386 = vsel %vm248, %v361, 0
  %v389 = vsel %vm248, %v362, 0
  %v392 = vsel %vm248, %v363, 0
  %394 = vmatpush.bf16.msra.mxu0 0
  %395 = vmatpush.bf16.msra.mxu0 0
  %396 = vmatpush.bf16.msra.mxu0 0
  %397 = vmatpush.bf16.msra.mxu0 %v373
  %398 = vmatpush.bf16.msra.mxu0 %v371
  %399 = vmatpush.bf16.msra.mxu0 %v369
  %400 = vmatpush.bf16.msra.mxu0 %v367
  %401 = vmatpush.bf16.msra.mxu0 %v365
  %402 = vmatmul.bf16.gmra.mxu0 %v380
  %v403 = vpop.f32.mrf.mxu0
  %v404 = vadd.f32 0.0, %v403
  %v405 = vpop.f32.mrf.mxu0
  %v406 = vadd.f32 0.0, %v405
  %407 = vmatmul.bf16.gmra.mxu0 %v383
  %v408 = vpop.f32.mrf.mxu0
  %v409 = vadd.f32 0.0, %v408
  %v410 = vpop.f32.mrf.mxu0
  %v411 = vadd.f32 0.0, %v410
  %412 = vmatmul.bf16.gmra.mxu0 %v386
  %v413 = vpop.f32.mrf.mxu0
  %v414 = vadd.f32 0.0, %v413
  %v415 = vpop.f32.mrf.mxu0
  %v416 = vadd.f32 0.0, %v415
  %417 = vmatmul.bf16.gmra.mxu0 %v389
  %v418 = vpop.f32.mrf.mxu0
  %v419 = vadd.f32 0.0, %v418
  %v420 = vpop.f32.mrf.mxu0
  %v421 = vadd.f32 0.0, %v420
  %422 = vmatmul.bf16.gmra.mxu0 %v392
  %v423 = vpop.f32.mrf.mxu0
  %v424 = vadd.f32 0.0, %v423
  %v425 = vpop.f32.mrf.mxu0
  %v426 = vadd.f32 0.0, %v425
  %427 = vdwg.mxu0
  %428 = vrot.lane.b32.xlu0 %v143, 112
  %v429 = vpop.permute.xlu0 %428
  %430 = vrot.lane.b32.xlu0 %v144, 112
  %v431 = vpop.permute.xlu0 %430
  %432 = vrot.lane.b32.xlu0 %v145, 112
  %v433 = vpop.permute.xlu0 %432
  %434 = vrot.lane.b32.xlu0 %v146, 112
  %v435 = vpop.permute.xlu0 %434
  %436 = vrot.lane.b32.xlu0 %v147, 112
  %v437 = vpop.permute.xlu0 %436
  %438 = vrot.lane.b32.xlu0 %v143, 80
  %v439 = vpop.permute.xlu0 %438
  %440 = vrot.lane.b32.xlu0 %v144, 80
  %v441 = vpop.permute.xlu0 %440
  %442 = vrot.lane.b32.xlu0 %v145, 80
  %v443 = vpop.permute.xlu0 %442
  %444 = vrot.lane.b32.xlu0 %v146, 80
  %v445 = vpop.permute.xlu0 %444
  %446 = vrot.lane.b32.xlu0 %v147, 80
  %v447 = vpop.permute.xlu0 %446
  %v449 = vsel %vm163, %v429, 0
  %v452 = vsel %vm163, %v431, 0
  %v455 = vsel %vm163, %v433, 0
  %v458 = vsel %vm163, %v435, 0
  %v461 = vsel %vm163, %v437, 0
  %v464 = vsel %vm163, %v439, 0
  %v467 = vsel %vm163, %v441, 0
  %v470 = vsel %vm163, %v443, 0
  %v473 = vsel %vm163, %v445, 0
  %v476 = vsel %vm163, %v447, 0
  %478 = vmatpush.bf16.xpose.msra.mxu0 0
  %479 = vmatpush.bf16.xpose.msra.mxu0 0
  %480 = vmatpush.bf16.xpose.msra.mxu0 0
  %481 = vmatpush.bf16.xpose.msra.mxu0 %v476
  %482 = vmatpush.bf16.xpose.msra.mxu0 %v473
  %483 = vmatpush.bf16.xpose.msra.mxu0 %v470
  %484 = vmatpush.bf16.xpose.msra.mxu0 %v467
  %485 = vmatpush.bf16.xpose.msra.mxu0 %v464
  %486 = vmatmul.bf16.gmra.mxu0 %v449
  %v487 = vpop.f32.mrf.mxu0
  %v488 = vadd.f32 0.0, %v487
  %v489 = vpop.f32.mrf.mxu0
  %v490 = vadd.f32 0.0, %v489
  %491 = vmatmul.bf16.gmra.mxu0 %v452
  %v492 = vpop.f32.mrf.mxu0
  %v493 = vadd.f32 0.0, %v492
  %v494 = vpop.f32.mrf.mxu0
  %v495 = vadd.f32 0.0, %v494
  %496 = vmatmul.bf16.gmra.mxu0 %v455
  %v497 = vpop.f32.mrf.mxu0
  %v498 = vadd.f32 0.0, %v497
  %v499 = vpop.f32.mrf.mxu0
  %v500 = vadd.f32 0.0, %v499
  %501 = vmatmul.bf16.gmra.mxu0 %v458
  %v502 = vpop.f32.mrf.mxu0
  %v503 = vadd.f32 0.0, %v502
  %v504 = vpop.f32.mrf.mxu0
  %v505 = vadd.f32 0.0, %v504
  %506 = vmatmul.bf16.gmra.mxu0 %v461
  %v507 = vpop.f32.mrf.mxu0
  %v508 = vadd.f32 0.0, %v507
  %v509 = vpop.f32.mrf.mxu0
  %v510 = vadd.f32 0.0, %v509
  %511 = vdwg.mxu0
  %v512 = vmul.f32 %v488, 0.25
  %v513 = vmul.f32 %v490, 0.25
  %v514 = vmul.f32 %v493, 0.25
  %v515 = vmul.f32 %v495, 0.25
  %v516 = vmul.f32 %v498, 0.25
  %v517 = vmul.f32 %v500, 0.25
  %v518 = vmul.f32 %v503, 0.25
  %v519 = vmul.f32 %v505, 0.25
  %v520 = vmul.f32 %v508, 0.25
  %v521 = vmul.f32 %v510, 0.25
  %v522 = vadd.f32 %v512, %v58
  %v523 = vadd.f32 %v513, %v59
  %v524 = vadd.f32 %v514, %v60
  %v525 = vadd.f32 %v515, %v61
  %v526 = vadd.f32 %v516, %v62
  %v527 = vadd.f32 %v517, %v63
  %v528 = vadd.f32 %v518, %v64
  %v529 = vadd.f32 %v519, %v65
  %v530 = vadd.f32 %v520, %v66
  %v531 = vadd.f32 %v521, %v67
  %v532 = vsel %vm248, %v522, -inf
  %533 = vmax.xlane.f32.xlu0 %v532
  %v534 = vpop.xlane.xlu0 %533
  %v535 = vsel %vm248, %v523, -inf
  %536 = vmax.xlane.f32.xlu0 %v535
  %v537 = vpop.xlane.xlu0 %536
  %v538 = vsel %vm248, %v524, -inf
  %539 = vmax.xlane.f32.xlu0 %v538
  %v540 = vpop.xlane.xlu0 %539
  %v541 = vsel %vm248, %v525, -inf
  %542 = vmax.xlane.f32.xlu0 %v541
  %v543 = vpop.xlane.xlu0 %542
  %v544 = vsel %vm248, %v526, -inf
  %545 = vmax.xlane.f32.xlu0 %v544
  %v546 = vpop.xlane.xlu0 %545
  %v547 = vsel %vm248, %v527, -inf
  %548 = vmax.xlane.f32.xlu0 %v547
  %v549 = vpop.xlane.xlu0 %548
  %v550 = vsel %vm248, %v528, -inf
  %551 = vmax.xlane.f32.xlu0 %v550
  %v552 = vpop.xlane.xlu0 %551
  %v553 = vsel %vm248, %v529, -inf
  %554 = vmax.xlane.f32.xlu0 %v553
  %v555 = vpop.xlane.xlu0 %554
  %v556 = vsel %vm248, %v530, -inf
  %557 = vmax.xlane.f32.xlu0 %v556
  %v558 = vpop.xlane.xlu0 %557
  %v559 = vsel %vm248, %v531, -inf
  %560 = vmax.xlane.f32.xlu0 %v559
  %v561 = vpop.xlane.xlu0 %560
  %v562 = vsub.f32 %v522, %v534
  %v563 = vsub.f32 %v523, %v537
  %v564 = vsub.f32 %v524, %v540
  %v565 = vsub.f32 %v525, %v543
  %v566 = vsub.f32 %v526, %v546
  %v567 = vsub.f32 %v527, %v549
  %v568 = vsub.f32 %v528, %v552
  %v569 = vsub.f32 %v529, %v555
  %v570 = vsub.f32 %v530, %v558
  %v571 = vsub.f32 %v531, %v561
  %v572 = vmul.f32 %v562, 1.442695
  %v573 = vpow.pop %v572
  %v574 = vmul.f32 %v563, 1.442695
  %v575 = vpow.pop %v574
  %v576 = vmul.f32 %v564, 1.442695
  %v577 = vpow.pop %v576
  %v578 = vmul.f32 %v565, 1.442695
  %v579 = vpow.pop %v578
  %v580 = vmul.f32 %v566, 1.442695
  %v581 = vpow.pop %v580
  %v582 = vmul.f32 %v567, 1.442695
  %v583 = vpow.pop %v582
  %v584 = vmul.f32 %v568, 1.442695
  %v585 = vpow.pop %v584
  %v586 = vmul.f32 %v569, 1.442695
  %v587 = vpow.pop %v586
  %v588 = vmul.f32 %v570, 1.442695
  %v589 = vpow.pop %v588
  %v590 = vmul.f32 %v571, 1.442695
  %v591 = vpow.pop %v590
  %v592 = vsel %vm248, %v573, 0.0
  %593 = vadd.xlane.f32.xlu0 %v592
  %v594 = vpop.xlane.xlu0 %593
  %v595 = vsel %vm248, %v575, 0.0
  %596 = vadd.xlane.f32.xlu0 %v595
  %v597 = vpop.xlane.xlu0 %596
  %v598 = vsel %vm248, %v577, 0.0
  %599 = vadd.xlane.f32.xlu0 %v598
  %v600 = vpop.xlane.xlu0 %599
  %v601 = vsel %vm248, %v579, 0.0
  %602 = vadd.xlane.f32.xlu0 %v601
  %v603 = vpop.xlane.xlu0 %602
  %v604 = vsel %vm248, %v581, 0.0
  %605 = vadd.xlane.f32.xlu0 %v604
  %v606 = vpop.xlane.xlu0 %605
  %v607 = vsel %vm248, %v583, 0.0
  %608 = vadd.xlane.f32.xlu0 %v607
  %v609 = vpop.xlane.xlu0 %608
  %v610 = vsel %vm248, %v585, 0.0
  %611 = vadd.xlane.f32.xlu0 %v610
  %v612 = vpop.xlane.xlu0 %611
  %v613 = vsel %vm248, %v587, 0.0
  %614 = vadd.xlane.f32.xlu0 %v613
  %v615 = vpop.xlane.xlu0 %614
  %v616 = vsel %vm248, %v589, 0.0
  %617 = vadd.xlane.f32.xlu0 %v616
  %v618 = vpop.xlane.xlu0 %617
  %v619 = vsel %vm248, %v591, 0.0
  %620 = vadd.xlane.f32.xlu0 %v619
  %v621 = vpop.xlane.xlu0 %620
  %v622 = vrcp.pop %v594
  %v623 = vrcp.pop %v597
  %v624 = vrcp.pop %v600
  %v625 = vrcp.pop %v603
  %v626 = vrcp.pop %v606
  %v627 = vrcp.pop %v609
  %v628 = vrcp.pop %v612
  %v629 = vrcp.pop %v615
  %v630 = vrcp.pop %v618
  %v631 = vrcp.pop %v621
  %v632 = vmul.f32 %v573, %v622
  %v633 = vmul.f32 %v575, %v623
  %v634 = vmul.f32 %v577, %v624
  %v635 = vmul.f32 %v579, %v625
  %v636 = vmul.f32 %v581, %v626
  %v637 = vmul.f32 %v583, %v627
  %v638 = vmul.f32 %v585, %v628
  %v639 = vmul.f32 %v587, %v629
  %v640 = vmul.f32 %v589, %v630
  %v641 = vmul.f32 %v591, %v631
  %v642 = vpack.c.bf16 %v633, %v632
  %v643 = vpack.c.bf16 %v635, %v634
  %v644 = vpack.c.bf16 %v637, %v636
  %v645 = vpack.c.bf16 %v639, %v638
  %v646 = vpack.c.bf16 %v641, %v640
  %647 = vrot.lane.b32.xlu0 %v143, 48
  %v648 = vpop.permute.xlu0 %647
  %649 = vrot.lane.b32.xlu0 %v144, 48
  %v650 = vpop.permute.xlu0 %649
  %651 = vrot.lane.b32.xlu0 %v145, 48
  %v652 = vpop.permute.xlu0 %651
  %653 = vrot.lane.b32.xlu0 %v146, 48
  %v654 = vpop.permute.xlu0 %653
  %655 = vrot.lane.b32.xlu0 %v147, 48
  %v656 = vpop.permute.xlu0 %655
  %v663 = vsel %vm248, %v642, 0
  %v666 = vsel %vm248, %v643, 0
  %v669 = vsel %vm248, %v644, 0
  %v672 = vsel %vm248, %v645, 0
  %v675 = vsel %vm248, %v646, 0
  %677 = vmatpush.bf16.msra.mxu0 0
  %678 = vmatpush.bf16.msra.mxu0 0
  %679 = vmatpush.bf16.msra.mxu0 0
  %680 = vmatpush.bf16.msra.mxu0 %v656
  %681 = vmatpush.bf16.msra.mxu0 %v654
  %682 = vmatpush.bf16.msra.mxu0 %v652
  %683 = vmatpush.bf16.msra.mxu0 %v650
  %684 = vmatpush.bf16.msra.mxu0 %v648
  %685 = vmatmul.bf16.gmra.mxu0 %v663
  %v686 = vpop.f32.mrf.mxu0
  %v687 = vadd.f32 0.0, %v686
  %v688 = vpop.f32.mrf.mxu0
  %v689 = vadd.f32 0.0, %v688
  %690 = vmatmul.bf16.gmra.mxu0 %v666
  %v691 = vpop.f32.mrf.mxu0
  %v692 = vadd.f32 0.0, %v691
  %v693 = vpop.f32.mrf.mxu0
  %v694 = vadd.f32 0.0, %v693
  %695 = vmatmul.bf16.gmra.mxu0 %v669
  %v696 = vpop.f32.mrf.mxu0
  %v697 = vadd.f32 0.0, %v696
  %v698 = vpop.f32.mrf.mxu0
  %v699 = vadd.f32 0.0, %v698
  %700 = vmatmul.bf16.gmra.mxu0 %v672
  %v701 = vpop.f32.mrf.mxu0
  %v702 = vadd.f32 0.0, %v701
  %v703 = vpop.f32.mrf.mxu0
  %v704 = vadd.f32 0.0, %v703
  %705 = vmatmul.bf16.gmra.mxu0 %v675
  %v706 = vpop.f32.mrf.mxu0
  %v707 = vadd.f32 0.0, %v706
  %v708 = vpop.f32.mrf.mxu0
  %v709 = vadd.f32 0.0, %v708
  %710 = vdwg.mxu0
  %721 = vrot.lane.b32.xlu0 %v687, 16
  %v722 = vpop.permute.xlu0 %721
  %723 = vrot.lane.b32.xlu0 %v689, 16
  %v724 = vpop.permute.xlu0 %723
  %725 = vrot.lane.b32.xlu0 %v692, 16
  %v726 = vpop.permute.xlu0 %725
  %727 = vrot.lane.b32.xlu0 %v694, 16
  %v728 = vpop.permute.xlu0 %727
  %729 = vrot.lane.b32.xlu0 %v697, 16
  %v730 = vpop.permute.xlu0 %729
  %731 = vrot.lane.b32.xlu0 %v699, 16
  %v732 = vpop.permute.xlu0 %731
  %733 = vrot.lane.b32.xlu0 %v702, 16
  %v734 = vpop.permute.xlu0 %733
  %735 = vrot.lane.b32.xlu0 %v704, 16
  %v736 = vpop.permute.xlu0 %735
  %737 = vrot.lane.b32.xlu0 %v707, 16
  %v738 = vpop.permute.xlu0 %737
  %739 = vrot.lane.b32.xlu0 %v709, 16
  %v740 = vpop.permute.xlu0 %739
  %v751 = vsel %vm163, %v404, %v722
  %v752 = vsel %vm163, %v406, %v724
  %v753 = vsel %vm163, %v409, %v726
  %v754 = vsel %vm163, %v411, %v728
  %v755 = vsel %vm163, %v414, %v730
  %v756 = vsel %vm163, %v416, %v732
  %v757 = vsel %vm163, %v419, %v734
  %v758 = vsel %vm163, %v421, %v736
  %v759 = vsel %vm163, %v424, %v738
  %v760 = vsel %vm163, %v426, %v740
  %v761 = vpack.c.bf16 %v752, %v751
  %v762 = vpack.c.bf16 %v754, %v753
  %v763 = vpack.c.bf16 %v756, %v755
  %v764 = vpack.c.bf16 %v758, %v757
  %v765 = vpack.c.bf16 %v760, %v759
  %v766 = vld [vmem:[%s4] sm:$0xf]
  %v767 = vld [vmem:[%s4 + $0x4] sm:$0xf]
  %v768 = vld [vmem:[%s4 + $0x8] sm:$0xf]
  %v769 = vld [vmem:[%s4 + $0xc] sm:$0xf]
  %v770 = vld [vmem:[%s5] sm:$0x1]
  %v772 = vperm.slane %v770, 0
  %v778 = vunpack.c.l.b16 %v766
  %v779 = vunpack.c.l.b16 %v767
  %v780 = vunpack.c.l.b16 %v768
  %v781 = vunpack.c.l.b16 %v769
  %v782 = vpack.c.b16 %v779, %v778
  %v783 = vpack.c.b16 %v781, %v780
  %v787 = vsel %vm93, %v761, 0
  %v790 = vsel %vm93, %v762, 0
  %v793 = vsel %vm93, %v763, 0
  %v796 = vsel %vm93, %v764, 0
  %v799 = vsel %vm93, %v765, 0
  %801 = vmatpush.bf16.msra.mxu0 0
  %802 = vmatpush.bf16.msra.mxu0 0
  %803 = vmatpush.bf16.msra.mxu0 0
  %804 = vmatpush.bf16.msra.mxu0 0
  %805 = vmatpush.bf16.msra.mxu0 0
  %806 = vmatpush.bf16.msra.mxu0 0
  %807 = vmatpush.bf16.msra.mxu0 %v783
  %808 = vmatpush.bf16.msra.mxu0 %v782
  %809 = vmatmul.bf16.gmra.mxu0 %v787
  %v810 = vpop.f32.mrf.mxu0
  %v811 = vadd.f32 %v772, %v810
  %v812 = vpop.f32.mrf.mxu0
  %v813 = vadd.f32 %v772, %v812
  %814 = vmatmul.bf16.gmra.mxu0 %v790
  %v815 = vpop.f32.mrf.mxu0
  %v816 = vadd.f32 %v772, %v815
  %v817 = vpop.f32.mrf.mxu0
  %v818 = vadd.f32 %v772, %v817
  %819 = vmatmul.bf16.gmra.mxu0 %v793
  %v820 = vpop.f32.mrf.mxu0
  %v821 = vadd.f32 %v772, %v820
  %v822 = vpop.f32.mrf.mxu0
  %v823 = vadd.f32 %v772, %v822
  %824 = vmatmul.bf16.gmra.mxu0 %v796
  %v825 = vpop.f32.mrf.mxu0
  %v826 = vadd.f32 %v772, %v825
  %v827 = vpop.f32.mrf.mxu0
  %v828 = vadd.f32 %v772, %v827
  %829 = vmatmul.bf16.gmra.mxu0 %v799
  %v830 = vpop.f32.mrf.mxu0
  %v831 = vadd.f32 %v772, %v830
  %v832 = vpop.f32.mrf.mxu0
  %v833 = vadd.f32 %v772, %v832
  %834 = vdwg.mxu0
  %v835 = vadd.f32 %v48, %v811
  %v836 = vadd.f32 %v49, %v813
  %v837 = vadd.f32 %v50, %v816
  %v838 = vadd.f32 %v51, %v818
  %v839 = vadd.f32 %v52, %v821
  %v840 = vadd.f32 %v53, %v823
  %v841 = vadd.f32 %v54, %v826
  %v842 = vadd.f32 %v55, %v828
  %v843 = vadd.f32 %v56, %v831
  %v844 = vadd.f32 %v57, %v833
  %v845 = vld [vmem:[%s10] sm:$0x1]
  %v846 = vld [vmem:[%s11] sm:$0x1]
  %v847 = vsel %vm93, %v835, 0.0
  %848 = vadd.xlane.f32.xlu0 %v847
  %v849 = vpop.xlane.xlu0 %848
  %v850 = vsel %vm93, %v836, 0.0
  %851 = vadd.xlane.f32.xlu0 %v850
  %v852 = vpop.xlane.xlu0 %851
  %v853 = vsel %vm93, %v837, 0.0
  %854 = vadd.xlane.f32.xlu0 %v853
  %v855 = vpop.xlane.xlu0 %854
  %v856 = vsel %vm93, %v838, 0.0
  %857 = vadd.xlane.f32.xlu0 %v856
  %v858 = vpop.xlane.xlu0 %857
  %v859 = vsel %vm93, %v839, 0.0
  %860 = vadd.xlane.f32.xlu0 %v859
  %v861 = vpop.xlane.xlu0 %860
  %v862 = vsel %vm93, %v840, 0.0
  %863 = vadd.xlane.f32.xlu0 %v862
  %v864 = vpop.xlane.xlu0 %863
  %v865 = vsel %vm93, %v841, 0.0
  %866 = vadd.xlane.f32.xlu0 %v865
  %v867 = vpop.xlane.xlu0 %866
  %v868 = vsel %vm93, %v842, 0.0
  %869 = vadd.xlane.f32.xlu0 %v868
  %v870 = vpop.xlane.xlu0 %869
  %v871 = vsel %vm93, %v843, 0.0
  %872 = vadd.xlane.f32.xlu0 %v871
  %v873 = vpop.xlane.xlu0 %872
  %v874 = vsel %vm93, %v844, 0.0
  %875 = vadd.xlane.f32.xlu0 %v874
  %v876 = vpop.xlane.xlu0 %875
  %v877 = vrcp.pop 32.0
  %v878 = vmul.f32 32.0, %v877
  %v879 = vsub.f32 1.0, %v878
  %v880 = vmul.f32 %v877, %v879
  %v881 = vadd.f32 %v877, %v880
  %vm882 = vweird.f32 %v877
  %v883 = vsel %vm882, %v877, %v881
  %v884 = vmul.f32 %v849, %v883
  %v885 = vmul.f32 %v852, %v883
  %v886 = vmul.f32 %v855, %v883
  %v887 = vmul.f32 %v858, %v883
  %v888 = vmul.f32 %v861, %v883
  %v889 = vmul.f32 %v864, %v883
  %v890 = vmul.f32 %v867, %v883
  %v891 = vmul.f32 %v870, %v883
  %v892 = vmul.f32 %v873, %v883
  %v893 = vmul.f32 %v876, %v883
  %v894 = vsub.f32 %v835, %v884
  %v895 = vsub.f32 %v836, %v885
  %v896 = vsub.f32 %v837, %v886
  %v897 = vsub.f32 %v838, %v887
  %v898 = vsub.f32 %v839, %v888
  %v899 = vsub.f32 %v840, %v889
  %v900 = vsub.f32 %v841, %v890
  %v901 = vsub.f32 %v842, %v891
  %v902 = vsub.f32 %v843, %v892
  %v903 = vsub.f32 %v844, %v893
  %v904 = vmul.f32 %v894, %v894
  %v905 = vmul.f32 %v895, %v895
  %v906 = vmul.f32 %v896, %v896
  %v907 = vmul.f32 %v897, %v897
  %v908 = vmul.f32 %v898, %v898
  %v909 = vmul.f32 %v899, %v899
  %v910 = vmul.f32 %v900, %v900
  %v911 = vmul.f32 %v901, %v901
  %v912 = vmul.f32 %v902, %v902
  %v913 = vmul.f32 %v903, %v903
  %v914 = vsel %vm93, %v904, 0.0
  %915 = vadd.xlane.f32.xlu0 %v914
  %v916 = vpop.xlane.xlu0 %915
  %v917 = vsel %vm93, %v905, 0.0
  %918 = vadd.xlane.f32.xlu0 %v917
  %v919 = vpop.xlane.xlu0 %918
  %v920 = vsel %vm93, %v906, 0.0
  %921 = vadd.xlane.f32.xlu0 %v920
  %v922 = vpop.xlane.xlu0 %921
  %v923 = vsel %vm93, %v907, 0.0
  %924 = vadd.xlane.f32.xlu0 %v923
  %v925 = vpop.xlane.xlu0 %924
  %v926 = vsel %vm93, %v908, 0.0
  %927 = vadd.xlane.f32.xlu0 %v926
  %v928 = vpop.xlane.xlu0 %927
  %v929 = vsel %vm93, %v909, 0.0
  %930 = vadd.xlane.f32.xlu0 %v929
  %v931 = vpop.xlane.xlu0 %930
  %v932 = vsel %vm93, %v910, 0.0
  %933 = vadd.xlane.f32.xlu0 %v932
  %v934 = vpop.xlane.xlu0 %933
  %v935 = vsel %vm93, %v911, 0.0
  %936 = vadd.xlane.f32.xlu0 %v935
  %v937 = vpop.xlane.xlu0 %936
  %v938 = vsel %vm93, %v912, 0.0
  %939 = vadd.xlane.f32.xlu0 %v938
  %v940 = vpop.xlane.xlu0 %939
  %v941 = vsel %vm93, %v913, 0.0
  %942 = vadd.xlane.f32.xlu0 %v941
  %v943 = vpop.xlane.xlu0 %942
  %v944 = vmul.f32 %v916, %v883
  %v945 = vmul.f32 %v919, %v883
  %v946 = vmul.f32 %v922, %v883
  %v947 = vmul.f32 %v925, %v883
  %v948 = vmul.f32 %v928, %v883
  %v949 = vmul.f32 %v931, %v883
  %v950 = vmul.f32 %v934, %v883
  %v951 = vmul.f32 %v937, %v883
  %v952 = vmul.f32 %v940, %v883
  %v953 = vmul.f32 %v943, %v883
  %v954 = vadd.f32 %v944, 1e-05
  %v955 = vadd.f32 %v945, 1e-05
  %v956 = vadd.f32 %v946, 1e-05
  %v957 = vadd.f32 %v947, 1e-05
  %v958 = vadd.f32 %v948, 1e-05
  %v959 = vadd.f32 %v949, 1e-05
  %v960 = vadd.f32 %v950, 1e-05
  %v961 = vadd.f32 %v951, 1e-05
  %v962 = vadd.f32 %v952, 1e-05
  %v963 = vadd.f32 %v953, 1e-05
  %v964 = vrsqrt.pop %v954
  %v965 = vmul.f32 %v964, %v954
  %v966 = vmul.f32 %v965, %v964
  %v967 = vmul.f32 0.5, %v966
  %v968 = vsub.f32 1.5, %v967
  %v969 = vmul.f32 %v964, %v968
  %vm970 = vweird.f32 %v954
  %vm971 = vweird.f32 %v964
  %vm972 = vmor %vm970, %vm971
  %v973 = vsel %vm972, %v964, %v969
  %v974 = vrsqrt.pop %v955
  %v975 = vmul.f32 %v974, %v955
  %v976 = vmul.f32 %v975, %v974
  %v977 = vmul.f32 0.5, %v976
  %v978 = vsub.f32 1.5, %v977
  %v979 = vmul.f32 %v974, %v978
  %vm980 = vweird.f32 %v955
  %vm981 = vweird.f32 %v974
  %vm982 = vmor %vm980, %vm981
  %v983 = vsel %vm982, %v974, %v979
  %v984 = vrsqrt.pop %v956
  %v985 = vmul.f32 %v984, %v956
  %v986 = vmul.f32 %v985, %v984
  %v987 = vmul.f32 0.5, %v986
  %v988 = vsub.f32 1.5, %v987
  %v989 = vmul.f32 %v984, %v988
  %vm990 = vweird.f32 %v956
  %vm991 = vweird.f32 %v984
  %vm992 = vmor %vm990, %vm991
  %v993 = vsel %vm992, %v984, %v989
  %v994 = vrsqrt.pop %v957
  %v995 = vmul.f32 %v994, %v957
  %v996 = vmul.f32 %v995, %v994
  %v997 = vmul.f32 0.5, %v996
  %v998 = vsub.f32 1.5, %v997
  %v999 = vmul.f32 %v994, %v998
  %vm1000 = vweird.f32 %v957
  %vm1001 = vweird.f32 %v994
  %vm1002 = vmor %vm1000, %vm1001
  %v1003 = vsel %vm1002, %v994, %v999
  %v1004 = vrsqrt.pop %v958
  %v1005 = vmul.f32 %v1004, %v958
  %v1006 = vmul.f32 %v1005, %v1004
  %v1007 = vmul.f32 0.5, %v1006
  %v1008 = vsub.f32 1.5, %v1007
  %v1009 = vmul.f32 %v1004, %v1008
  %vm1010 = vweird.f32 %v958
  %vm1011 = vweird.f32 %v1004
  %vm1012 = vmor %vm1010, %vm1011
  %v1013 = vsel %vm1012, %v1004, %v1009
  %v1014 = vrsqrt.pop %v959
  %v1015 = vmul.f32 %v1014, %v959
  %v1016 = vmul.f32 %v1015, %v1014
  %v1017 = vmul.f32 0.5, %v1016
  %v1018 = vsub.f32 1.5, %v1017
  %v1019 = vmul.f32 %v1014, %v1018
  %vm1020 = vweird.f32 %v959
  %vm1021 = vweird.f32 %v1014
  %vm1022 = vmor %vm1020, %vm1021
  %v1023 = vsel %vm1022, %v1014, %v1019
  %v1024 = vrsqrt.pop %v960
  %v1025 = vmul.f32 %v1024, %v960
  %v1026 = vmul.f32 %v1025, %v1024
  %v1027 = vmul.f32 0.5, %v1026
  %v1028 = vsub.f32 1.5, %v1027
  %v1029 = vmul.f32 %v1024, %v1028
  %vm1030 = vweird.f32 %v960
  %vm1031 = vweird.f32 %v1024
  %vm1032 = vmor %vm1030, %vm1031
  %v1033 = vsel %vm1032, %v1024, %v1029
  %v1034 = vrsqrt.pop %v961
  %v1035 = vmul.f32 %v1034, %v961
  %v1036 = vmul.f32 %v1035, %v1034
  %v1037 = vmul.f32 0.5, %v1036
  %v1038 = vsub.f32 1.5, %v1037
  %v1039 = vmul.f32 %v1034, %v1038
  %vm1040 = vweird.f32 %v961
  %vm1041 = vweird.f32 %v1034
  %vm1042 = vmor %vm1040, %vm1041
  %v1043 = vsel %vm1042, %v1034, %v1039
  %v1044 = vrsqrt.pop %v962
  %v1045 = vmul.f32 %v1044, %v962
  %v1046 = vmul.f32 %v1045, %v1044
  %v1047 = vmul.f32 0.5, %v1046
  %v1048 = vsub.f32 1.5, %v1047
  %v1049 = vmul.f32 %v1044, %v1048
  %vm1050 = vweird.f32 %v962
  %vm1051 = vweird.f32 %v1044
  %vm1052 = vmor %vm1050, %vm1051
  %v1053 = vsel %vm1052, %v1044, %v1049
  %v1054 = vrsqrt.pop %v963
  %v1055 = vmul.f32 %v1054, %v963
  %v1056 = vmul.f32 %v1055, %v1054
  %v1057 = vmul.f32 0.5, %v1056
  %v1058 = vsub.f32 1.5, %v1057
  %v1059 = vmul.f32 %v1054, %v1058
  %vm1060 = vweird.f32 %v963
  %vm1061 = vweird.f32 %v1054
  %vm1062 = vmor %vm1060, %vm1061
  %v1063 = vsel %vm1062, %v1054, %v1059
  %v1064 = vmul.f32 %v894, %v973
  %v1065 = vmul.f32 %v895, %v983
  %v1066 = vmul.f32 %v896, %v993
  %v1067 = vmul.f32 %v897, %v1003
  %v1068 = vmul.f32 %v898, %v1013
  %v1069 = vmul.f32 %v899, %v1023
  %v1070 = vmul.f32 %v900, %v1033
  %v1071 = vmul.f32 %v901, %v1043
  %v1072 = vmul.f32 %v902, %v1053
  %v1073 = vmul.f32 %v903, %v1063
  %v1075 = vperm.slane %v845, 0
  %v1077 = vmul.f32 %v1064, %v1075
  %v1078 = vmul.f32 %v1065, %v1075
  %v1079 = vmul.f32 %v1066, %v1075
  %v1080 = vmul.f32 %v1067, %v1075
  %v1081 = vmul.f32 %v1068, %v1075
  %v1082 = vmul.f32 %v1069, %v1075
  %v1083 = vmul.f32 %v1070, %v1075
  %v1084 = vmul.f32 %v1071, %v1075
  %v1085 = vmul.f32 %v1072, %v1075
  %v1086 = vmul.f32 %v1073, %v1075
  %v1088 = vperm.slane %v846, 0
  %v1090 = vadd.f32 %v1077, %v1088
  %v1091 = vadd.f32 %v1078, %v1088
  %v1092 = vadd.f32 %v1079, %v1088
  %v1093 = vadd.f32 %v1080, %v1088
  %v1094 = vadd.f32 %v1081, %v1088
  %v1095 = vadd.f32 %v1082, %v1088
  %v1096 = vadd.f32 %v1083, %v1088
  %v1097 = vadd.f32 %v1084, %v1088
  %v1098 = vadd.f32 %v1085, %v1088
  %v1099 = vadd.f32 %v1086, %v1088
  %v1100 = vpack.c.bf16 %v1091, %v1090
  %v1101 = vpack.c.bf16 %v1093, %v1092
  %v1102 = vpack.c.bf16 %v1095, %v1094
  %v1103 = vpack.c.bf16 %v1097, %v1096
  %v1104 = vpack.c.bf16 %v1099, %v1098
  %v1105 = vld [vmem:[%s6] sm:$0xf]
  %v1106 = vld [vmem:[%s6 + $0x4] sm:$0xf]
  %v1107 = vld [vmem:[%s6 + $0x8] sm:$0xf]
  %v1108 = vld [vmem:[%s6 + $0xc] sm:$0xf]
  %v1109 = vld [vmem:[%s7] sm:$0x1]
  %v1111 = vperm.slane %v1109, 0
  %v1117 = vunpack.c.l.b16 %v1105
  %v1118 = vunpack.c.l.b16 %v1106
  %v1119 = vunpack.c.l.b16 %v1107
  %v1120 = vunpack.c.l.b16 %v1108
  %v1121 = vpack.c.b16 %v1118, %v1117
  %v1122 = vpack.c.b16 %v1120, %v1119
  %v1126 = vsel %vm93, %v1100, 0
  %v1129 = vsel %vm93, %v1101, 0
  %v1132 = vsel %vm93, %v1102, 0
  %v1135 = vsel %vm93, %v1103, 0
  %v1138 = vsel %vm93, %v1104, 0
  %1140 = vmatpush.bf16.msra.mxu0 0
  %1141 = vmatpush.bf16.msra.mxu0 0
  %1142 = vmatpush.bf16.msra.mxu0 0
  %1143 = vmatpush.bf16.msra.mxu0 0
  %1144 = vmatpush.bf16.msra.mxu0 0
  %1145 = vmatpush.bf16.msra.mxu0 0
  %1146 = vmatpush.bf16.msra.mxu0 %v1122
  %1147 = vmatpush.bf16.msra.mxu0 %v1121
  %1148 = vmatmul.bf16.gmra.mxu0 %v1126
  %v1149 = vpop.f32.mrf.mxu0
  %v1150 = vadd.f32 %v1111, %v1149
  %v1151 = vpop.f32.mrf.mxu0
  %v1152 = vadd.f32 %v1111, %v1151
  %1153 = vmatmul.bf16.gmra.mxu0 %v1129
  %v1154 = vpop.f32.mrf.mxu0
  %v1155 = vadd.f32 %v1111, %v1154
  %v1156 = vpop.f32.mrf.mxu0
  %v1157 = vadd.f32 %v1111, %v1156
  %1158 = vmatmul.bf16.gmra.mxu0 %v1132
  %v1159 = vpop.f32.mrf.mxu0
  %v1160 = vadd.f32 %v1111, %v1159
  %v1161 = vpop.f32.mrf.mxu0
  %v1162 = vadd.f32 %v1111, %v1161
  %1163 = vmatmul.bf16.gmra.mxu0 %v1135
  %v1164 = vpop.f32.mrf.mxu0
  %v1165 = vadd.f32 %v1111, %v1164
  %v1166 = vpop.f32.mrf.mxu0
  %v1167 = vadd.f32 %v1111, %v1166
  %1168 = vmatmul.bf16.gmra.mxu0 %v1138
  %v1169 = vpop.f32.mrf.mxu0
  %v1170 = vadd.f32 %v1111, %v1169
  %v1171 = vpop.f32.mrf.mxu0
  %v1172 = vadd.f32 %v1111, %v1171
  %1173 = vdwg.mxu0
  %v1174 = vmax.f32 %v1150, 0.0
  %v1175 = vmax.f32 %v1152, 0.0
  %v1176 = vmax.f32 %v1155, 0.0
  %v1177 = vmax.f32 %v1157, 0.0
  %v1178 = vmax.f32 %v1160, 0.0
  %v1179 = vmax.f32 %v1162, 0.0
  %v1180 = vmax.f32 %v1165, 0.0
  %v1181 = vmax.f32 %v1167, 0.0
  %v1182 = vmax.f32 %v1170, 0.0
  %v1183 = vmax.f32 %v1172, 0.0
  %v1184 = vpack.c.bf16 %v1175, %v1174
  %v1185 = vpack.c.bf16 %v1177, %v1176
  %v1186 = vpack.c.bf16 %v1179, %v1178
  %v1187 = vpack.c.bf16 %v1181, %v1180
  %v1188 = vpack.c.bf16 %v1183, %v1182
  %v1189 = vld [vmem:[%s8] sm:$0xf]
  %v1190 = vld [vmem:[%s8 + $0x4] sm:$0xf]
  %v1191 = vld [vmem:[%s8 + $0x8] sm:$0xf]
  %v1192 = vld [vmem:[%s8 + $0xc] sm:$0xf]
  %v1193 = vld [vmem:[%s8 + $0x10] sm:$0xf]
  %v1194 = vld [vmem:[%s8 + $0x14] sm:$0xf]
  %v1195 = vld [vmem:[%s8 + $0x18] sm:$0xf]
  %v1196 = vld [vmem:[%s8 + $0x1c] sm:$0xf]
  %v1197 = vld [vmem:[%s9] sm:$0x1]
  %v1199 = vperm.slane %v1197, 0
  %v1209 = vunpack.c.l.b16 %v1189
  %v1210 = vunpack.c.l.b16 %v1190
  %v1211 = vunpack.c.l.b16 %v1191
  %v1212 = vunpack.c.l.b16 %v1192
  %v1213 = vunpack.c.l.b16 %v1193
  %v1214 = vunpack.c.l.b16 %v1194
  %v1215 = vunpack.c.l.b16 %v1195
  %v1216 = vunpack.c.l.b16 %v1196
  %v1217 = vpack.c.b16 %v1210, %v1209
  %v1218 = vpack.c.b16 %v1212, %v1211
  %v1219 = vpack.c.b16 %v1214, %v1213
  %v1220 = vpack.c.b16 %v1216, %v1215
  %vm1225 = vcmask 523264
  %v1227 = vsel %vm1225, %v1184, 0
  %v1230 = vsel %vm1225, %v1185, 0
  %v1233 = vsel %vm1225, %v1186, 0
  %v1236 = vsel %vm1225, %v1187, 0
  %v1239 = vsel %vm1225, %v1188, 0
  %1241 = vmatpush.bf16.msra.mxu0 0
  %1242 = vmatpush.bf16.msra.mxu0 0
  %1243 = vmatpush.bf16.msra.mxu0 0
  %1244 = vmatpush.bf16.msra.mxu0 0
  %1245 = vmatpush.bf16.msra.mxu0 %v1220
  %1246 = vmatpush.bf16.msra.mxu0 %v1219
  %1247 = vmatpush.bf16.msra.mxu0 %v1218
  %1248 = vmatpush.bf16.msra.mxu0 %v1217
  %1249 = vmatmul.bf16.gmra.mxu0 %v1227
  %v1250 = vpop.f32.mrf.mxu0
  %v1251 = vadd.f32 %v1199, %v1250
  %v1252 = vpop.f32.mrf.mxu0
  %v1253 = vadd.f32 %v1199, %v1252
  %1254 = vmatmul.bf16.gmra.mxu0 %v1230
  %v1255 = vpop.f32.mrf.mxu0
  %v1256 = vadd.f32 %v1199, %v1255
  %v1257 = vpop.f32.mrf.mxu0
  %v1258 = vadd.f32 %v1199, %v1257
  %1259 = vmatmul.bf16.gmra.mxu0 %v1233
  %v1260 = vpop.f32.mrf.mxu0
  %v1261 = vadd.f32 %v1199, %v1260
  %v1262 = vpop.f32.mrf.mxu0
  %v1263 = vadd.f32 %v1199, %v1262
  %1264 = vmatmul.bf16.gmra.mxu0 %v1236
  %v1265 = vpop.f32.mrf.mxu0
  %v1266 = vadd.f32 %v1199, %v1265
  %v1267 = vpop.f32.mrf.mxu0
  %v1268 = vadd.f32 %v1199, %v1267
  %1269 = vmatmul.bf16.gmra.mxu0 %v1239
  %v1270 = vpop.f32.mrf.mxu0
  %v1271 = vadd.f32 %v1199, %v1270
  %v1272 = vpop.f32.mrf.mxu0
  %v1273 = vadd.f32 %v1199, %v1272
  %1274 = vdwg.mxu0
  %v1275 = vadd.f32 %v1090, %v1251
  %v1276 = vadd.f32 %v1091, %v1253
  %v1277 = vadd.f32 %v1092, %v1256
  %v1278 = vadd.f32 %v1093, %v1258
  %v1279 = vadd.f32 %v1094, %v1261
  %v1280 = vadd.f32 %v1095, %v1263
  %v1281 = vadd.f32 %v1096, %v1266
  %v1282 = vadd.f32 %v1097, %v1268
  %v1283 = vadd.f32 %v1098, %v1271
  %v1284 = vadd.f32 %v1099, %v1273
  %v1285 = vld [vmem:[%s12] sm:$0x1]
  %v1286 = vld [vmem:[%s13] sm:$0x1]
  %v1287 = vsel %vm93, %v1275, 0.0
  %1288 = vadd.xlane.f32.xlu0 %v1287
  %v1289 = vpop.xlane.xlu0 %1288
  %v1290 = vsel %vm93, %v1276, 0.0
  %1291 = vadd.xlane.f32.xlu0 %v1290
  %v1292 = vpop.xlane.xlu0 %1291
  %v1293 = vsel %vm93, %v1277, 0.0
  %1294 = vadd.xlane.f32.xlu0 %v1293
  %v1295 = vpop.xlane.xlu0 %1294
  %v1296 = vsel %vm93, %v1278, 0.0
  %1297 = vadd.xlane.f32.xlu0 %v1296
  %v1298 = vpop.xlane.xlu0 %1297
  %v1299 = vsel %vm93, %v1279, 0.0
  %1300 = vadd.xlane.f32.xlu0 %v1299
  %v1301 = vpop.xlane.xlu0 %1300
  %v1302 = vsel %vm93, %v1280, 0.0
  %1303 = vadd.xlane.f32.xlu0 %v1302
  %v1304 = vpop.xlane.xlu0 %1303
  %v1305 = vsel %vm93, %v1281, 0.0
  %1306 = vadd.xlane.f32.xlu0 %v1305
  %v1307 = vpop.xlane.xlu0 %1306
  %v1308 = vsel %vm93, %v1282, 0.0
  %1309 = vadd.xlane.f32.xlu0 %v1308
  %v1310 = vpop.xlane.xlu0 %1309
  %v1311 = vsel %vm93, %v1283, 0.0
  %1312 = vadd.xlane.f32.xlu0 %v1311
  %v1313 = vpop.xlane.xlu0 %1312
  %v1314 = vsel %vm93, %v1284, 0.0
  %1315 = vadd.xlane.f32.xlu0 %v1314
  %v1316 = vpop.xlane.xlu0 %1315
  %v1317 = vmul.f32 %v1289, %v883
  %v1318 = vmul.f32 %v1292, %v883
  %v1319 = vmul.f32 %v1295, %v883
  %v1320 = vmul.f32 %v1298, %v883
  %v1321 = vmul.f32 %v1301, %v883
  %v1322 = vmul.f32 %v1304, %v883
  %v1323 = vmul.f32 %v1307, %v883
  %v1324 = vmul.f32 %v1310, %v883
  %v1325 = vmul.f32 %v1313, %v883
  %v1326 = vmul.f32 %v1316, %v883
  %v1327 = vsub.f32 %v1275, %v1317
  %v1328 = vsub.f32 %v1276, %v1318
  %v1329 = vsub.f32 %v1277, %v1319
  %v1330 = vsub.f32 %v1278, %v1320
  %v1331 = vsub.f32 %v1279, %v1321
  %v1332 = vsub.f32 %v1280, %v1322
  %v1333 = vsub.f32 %v1281, %v1323
  %v1334 = vsub.f32 %v1282, %v1324
  %v1335 = vsub.f32 %v1283, %v1325
  %v1336 = vsub.f32 %v1284, %v1326
  %v1337 = vmul.f32 %v1327, %v1327
  %v1338 = vmul.f32 %v1328, %v1328
  %v1339 = vmul.f32 %v1329, %v1329
  %v1340 = vmul.f32 %v1330, %v1330
  %v1341 = vmul.f32 %v1331, %v1331
  %v1342 = vmul.f32 %v1332, %v1332
  %v1343 = vmul.f32 %v1333, %v1333
  %v1344 = vmul.f32 %v1334, %v1334
  %v1345 = vmul.f32 %v1335, %v1335
  %v1346 = vmul.f32 %v1336, %v1336
  %v1347 = vsel %vm93, %v1337, 0.0
  %1348 = vadd.xlane.f32.xlu0 %v1347
  %v1349 = vpop.xlane.xlu0 %1348
  %v1350 = vsel %vm93, %v1338, 0.0
  %1351 = vadd.xlane.f32.xlu0 %v1350
  %v1352 = vpop.xlane.xlu0 %1351
  %v1353 = vsel %vm93, %v1339, 0.0
  %1354 = vadd.xlane.f32.xlu0 %v1353
  %v1355 = vpop.xlane.xlu0 %1354
  %v1356 = vsel %vm93, %v1340, 0.0
  %1357 = vadd.xlane.f32.xlu0 %v1356
  %v1358 = vpop.xlane.xlu0 %1357
  %v1359 = vsel %vm93, %v1341, 0.0
  %1360 = vadd.xlane.f32.xlu0 %v1359
  %v1361 = vpop.xlane.xlu0 %1360
  %v1362 = vsel %vm93, %v1342, 0.0
  %1363 = vadd.xlane.f32.xlu0 %v1362
  %v1364 = vpop.xlane.xlu0 %1363
  %v1365 = vsel %vm93, %v1343, 0.0
  %1366 = vadd.xlane.f32.xlu0 %v1365
  %v1367 = vpop.xlane.xlu0 %1366
  %v1368 = vsel %vm93, %v1344, 0.0
  %1369 = vadd.xlane.f32.xlu0 %v1368
  %v1370 = vpop.xlane.xlu0 %1369
  %v1371 = vsel %vm93, %v1345, 0.0
  %1372 = vadd.xlane.f32.xlu0 %v1371
  %v1373 = vpop.xlane.xlu0 %1372
  %v1374 = vsel %vm93, %v1346, 0.0
  %1375 = vadd.xlane.f32.xlu0 %v1374
  %v1376 = vpop.xlane.xlu0 %1375
  %v1377 = vmul.f32 %v1349, %v883
  %v1378 = vmul.f32 %v1352, %v883
  %v1379 = vmul.f32 %v1355, %v883
  %v1380 = vmul.f32 %v1358, %v883
  %v1381 = vmul.f32 %v1361, %v883
  %v1382 = vmul.f32 %v1364, %v883
  %v1383 = vmul.f32 %v1367, %v883
  %v1384 = vmul.f32 %v1370, %v883
  %v1385 = vmul.f32 %v1373, %v883
  %v1386 = vmul.f32 %v1376, %v883
  %v1387 = vadd.f32 %v1377, 1e-05
  %v1388 = vadd.f32 %v1378, 1e-05
  %v1389 = vadd.f32 %v1379, 1e-05
  %v1390 = vadd.f32 %v1380, 1e-05
  %v1391 = vadd.f32 %v1381, 1e-05
  %v1392 = vadd.f32 %v1382, 1e-05
  %v1393 = vadd.f32 %v1383, 1e-05
  %v1394 = vadd.f32 %v1384, 1e-05
  %v1395 = vadd.f32 %v1385, 1e-05
  %v1396 = vadd.f32 %v1386, 1e-05
  %v1397 = vrsqrt.pop %v1387
  %v1398 = vmul.f32 %v1397, %v1387
  %v1399 = vmul.f32 %v1398, %v1397
  %v1400 = vmul.f32 0.5, %v1399
  %v1401 = vsub.f32 1.5, %v1400
  %v1402 = vmul.f32 %v1397, %v1401
  %vm1403 = vweird.f32 %v1387
  %vm1404 = vweird.f32 %v1397
  %vm1405 = vmor %vm1403, %vm1404
  %v1406 = vsel %vm1405, %v1397, %v1402
  %v1407 = vrsqrt.pop %v1388
  %v1408 = vmul.f32 %v1407, %v1388
  %v1409 = vmul.f32 %v1408, %v1407
  %v1410 = vmul.f32 0.5, %v1409
  %v1411 = vsub.f32 1.5, %v1410
  %v1412 = vmul.f32 %v1407, %v1411
  %vm1413 = vweird.f32 %v1388
  %vm1414 = vweird.f32 %v1407
  %vm1415 = vmor %vm1413, %vm1414
  %v1416 = vsel %vm1415, %v1407, %v1412
  %v1417 = vrsqrt.pop %v1389
  %v1418 = vmul.f32 %v1417, %v1389
  %v1419 = vmul.f32 %v1418, %v1417
  %v1420 = vmul.f32 0.5, %v1419
  %v1421 = vsub.f32 1.5, %v1420
  %v1422 = vmul.f32 %v1417, %v1421
  %vm1423 = vweird.f32 %v1389
  %vm1424 = vweird.f32 %v1417
  %vm1425 = vmor %vm1423, %vm1424
  %v1426 = vsel %vm1425, %v1417, %v1422
  %v1427 = vrsqrt.pop %v1390
  %v1428 = vmul.f32 %v1427, %v1390
  %v1429 = vmul.f32 %v1428, %v1427
  %v1430 = vmul.f32 0.5, %v1429
  %v1431 = vsub.f32 1.5, %v1430
  %v1432 = vmul.f32 %v1427, %v1431
  %vm1433 = vweird.f32 %v1390
  %vm1434 = vweird.f32 %v1427
  %vm1435 = vmor %vm1433, %vm1434
  %v1436 = vsel %vm1435, %v1427, %v1432
  %v1437 = vrsqrt.pop %v1391
  %v1438 = vmul.f32 %v1437, %v1391
  %v1439 = vmul.f32 %v1438, %v1437
  %v1440 = vmul.f32 0.5, %v1439
  %v1441 = vsub.f32 1.5, %v1440
  %v1442 = vmul.f32 %v1437, %v1441
  %vm1443 = vweird.f32 %v1391
  %vm1444 = vweird.f32 %v1437
  %vm1445 = vmor %vm1443, %vm1444
  %v1446 = vsel %vm1445, %v1437, %v1442
  %v1447 = vrsqrt.pop %v1392
  %v1448 = vmul.f32 %v1447, %v1392
  %v1449 = vmul.f32 %v1448, %v1447
  %v1450 = vmul.f32 0.5, %v1449
  %v1451 = vsub.f32 1.5, %v1450
  %v1452 = vmul.f32 %v1447, %v1451
  %vm1453 = vweird.f32 %v1392
  %vm1454 = vweird.f32 %v1447
  %vm1455 = vmor %vm1453, %vm1454
  %v1456 = vsel %vm1455, %v1447, %v1452
  %v1457 = vrsqrt.pop %v1393
  %v1458 = vmul.f32 %v1457, %v1393
  %v1459 = vmul.f32 %v1458, %v1457
  %v1460 = vmul.f32 0.5, %v1459
  %v1461 = vsub.f32 1.5, %v1460
  %v1462 = vmul.f32 %v1457, %v1461
  %vm1463 = vweird.f32 %v1393
  %vm1464 = vweird.f32 %v1457
  %vm1465 = vmor %vm1463, %vm1464
  %v1466 = vsel %vm1465, %v1457, %v1462
  %v1467 = vrsqrt.pop %v1394
  %v1468 = vmul.f32 %v1467, %v1394
  %v1469 = vmul.f32 %v1468, %v1467
  %v1470 = vmul.f32 0.5, %v1469
  %v1471 = vsub.f32 1.5, %v1470
  %v1472 = vmul.f32 %v1467, %v1471
  %vm1473 = vweird.f32 %v1394
  %vm1474 = vweird.f32 %v1467
  %vm1475 = vmor %vm1473, %vm1474
  %v1476 = vsel %vm1475, %v1467, %v1472
  %v1477 = vrsqrt.pop %v1395
  %v1478 = vmul.f32 %v1477, %v1395
  %v1479 = vmul.f32 %v1478, %v1477
  %v1480 = vmul.f32 0.5, %v1479
  %v1481 = vsub.f32 1.5, %v1480
  %v1482 = vmul.f32 %v1477, %v1481
  %vm1483 = vweird.f32 %v1395
  %vm1484 = vweird.f32 %v1477
  %vm1485 = vmor %vm1483, %vm1484
  %v1486 = vsel %vm1485, %v1477, %v1482
  %v1487 = vrsqrt.pop %v1396
  %v1488 = vmul.f32 %v1487, %v1396
  %v1489 = vmul.f32 %v1488, %v1487
  %v1490 = vmul.f32 0.5, %v1489
  %v1491 = vsub.f32 1.5, %v1490
  %v1492 = vmul.f32 %v1487, %v1491
  %vm1493 = vweird.f32 %v1396
  %vm1494 = vweird.f32 %v1487
  %vm1495 = vmor %vm1493, %vm1494
  %v1496 = vsel %vm1495, %v1487, %v1492
  %v1497 = vmul.f32 %v1327, %v1406
  %v1498 = vmul.f32 %v1328, %v1416
  %v1499 = vmul.f32 %v1329, %v1426
  %v1500 = vmul.f32 %v1330, %v1436
  %v1501 = vmul.f32 %v1331, %v1446
  %v1502 = vmul.f32 %v1332, %v1456
  %v1503 = vmul.f32 %v1333, %v1466
  %v1504 = vmul.f32 %v1334, %v1476
  %v1505 = vmul.f32 %v1335, %v1486
  %v1506 = vmul.f32 %v1336, %v1496
  %v1508 = vperm.slane %v1285, 0
  %v1510 = vmul.f32 %v1497, %v1508
  %v1511 = vmul.f32 %v1498, %v1508
  %v1512 = vmul.f32 %v1499, %v1508
  %v1513 = vmul.f32 %v1500, %v1508
  %v1514 = vmul.f32 %v1501, %v1508
  %v1515 = vmul.f32 %v1502, %v1508
  %v1516 = vmul.f32 %v1503, %v1508
  %v1517 = vmul.f32 %v1504, %v1508
  %v1518 = vmul.f32 %v1505, %v1508
  %v1519 = vmul.f32 %v1506, %v1508
  %v1521 = vperm.slane %v1286, 0
  %v1523 = vadd.f32 %v1510, %v1521
  %v1524 = vadd.f32 %v1511, %v1521
  %v1525 = vadd.f32 %v1512, %v1521
  %v1526 = vadd.f32 %v1513, %v1521
  %v1527 = vadd.f32 %v1514, %v1521
  %v1528 = vadd.f32 %v1515, %v1521
  %v1529 = vadd.f32 %v1516, %v1521
  %v1530 = vadd.f32 %v1517, %v1521
  %v1531 = vadd.f32 %v1518, %v1521
  %v1532 = vadd.f32 %v1519, %v1521
  %v1533 = vpack.c.bf16 %v1524, %v1523
  %v1534 = vpack.c.bf16 %v1526, %v1525
  %v1535 = vpack.c.bf16 %v1528, %v1527
  %v1536 = vpack.c.bf16 %v1530, %v1529
  %v1537 = vpack.c.bf16 %v1532, %v1531
  %s1538 = scalar_lea.vmem %s2, 16
  %v1539 = vld [vmem:[%s1538] sm:$0xf]
  %v1540 = vld [vmem:[%s1538 + $0x4] sm:$0xf]
  %v1541 = vld [vmem:[%s1538 + $0x8] sm:$0xf]
  %v1542 = vld [vmem:[%s1538 + $0xc] sm:$0xf]
  %s1543 = scalar_lea.vmem %s3, 1
  %v1544 = vld [vmem:[%s1543] sm:$0x1]
  %v1546 = vperm.slane %v1544, 0
  %v1552 = vunpack.c.l.b16 %v1539
  %v1553 = vunpack.c.l.b16 %v1540
  %v1554 = vunpack.c.l.b16 %v1541
  %v1555 = vunpack.c.l.b16 %v1542
  %v1556 = vpack.c.b16 %v1553, %v1552
  %v1557 = vpack.c.b16 %v1555, %v1554
  %v1561 = vsel %vm93, %v1533, 0
  %v1564 = vsel %vm93, %v1534, 0
  %v1567 = vsel %vm93, %v1535, 0
  %v1570 = vsel %vm93, %v1536, 0
  %v1573 = vsel %vm93, %v1537, 0
  %1575 = vmatpush.bf16.msra.mxu0 0
  %1576 = vmatpush.bf16.msra.mxu0 0
  %1577 = vmatpush.bf16.msra.mxu0 0
  %1578 = vmatpush.bf16.msra.mxu0 0
  %1579 = vmatpush.bf16.msra.mxu0 0
  %1580 = vmatpush.bf16.msra.mxu0 0
  %1581 = vmatpush.bf16.msra.mxu0 %v1557
  %1582 = vmatpush.bf16.msra.mxu0 %v1556
  %1583 = vmatmul.bf16.gmra.mxu0 %v1561
  %v1584 = vpop.f32.mrf.mxu0
  %v1585 = vadd.f32 %v1546, %v1584
  %v1586 = vpop.f32.mrf.mxu0
  %v1587 = vadd.f32 %v1546, %v1586
  %1588 = vmatmul.bf16.gmra.mxu0 %v1564
  %v1589 = vpop.f32.mrf.mxu0
  %v1590 = vadd.f32 %v1546, %v1589
  %v1591 = vpop.f32.mrf.mxu0
  %v1592 = vadd.f32 %v1546, %v1591
  %1593 = vmatmul.bf16.gmra.mxu0 %v1567
  %v1594 = vpop.f32.mrf.mxu0
  %v1595 = vadd.f32 %v1546, %v1594
  %v1596 = vpop.f32.mrf.mxu0
  %v1597 = vadd.f32 %v1546, %v1596
  %1598 = vmatmul.bf16.gmra.mxu0 %v1570
  %v1599 = vpop.f32.mrf.mxu0
  %v1600 = vadd.f32 %v1546, %v1599
  %v1601 = vpop.f32.mrf.mxu0
  %v1602 = vadd.f32 %v1546, %v1601
  %1603 = vmatmul.bf16.gmra.mxu0 %v1573
  %v1604 = vpop.f32.mrf.mxu0
  %v1605 = vadd.f32 %v1546, %v1604
  %v1606 = vpop.f32.mrf.mxu0
  %v1607 = vadd.f32 %v1546, %v1606
  %1608 = vdwg.mxu0
  %v1609 = vpack.c.bf16 %v1587, %v1585
  %v1610 = vpack.c.bf16 %v1592, %v1590
  %v1611 = vpack.c.bf16 %v1597, %v1595
  %v1612 = vpack.c.bf16 %v1602, %v1600
  %v1613 = vpack.c.bf16 %v1607, %v1605
  %1619 = vrot.lane.b32.xlu0 %v1609, 96
  %v1620 = vpop.permute.xlu0 %1619
  %1621 = vrot.lane.b32.xlu0 %v1610, 96
  %v1622 = vpop.permute.xlu0 %1621
  %1623 = vrot.lane.b32.xlu0 %v1611, 96
  %v1624 = vpop.permute.xlu0 %1623
  %1625 = vrot.lane.b32.xlu0 %v1612, 96
  %v1626 = vpop.permute.xlu0 %1625
  %1627 = vrot.lane.b32.xlu0 %v1613, 96
  %v1628 = vpop.permute.xlu0 %1627
  %v1630 = vsel %vm163, %v1609, 0
  %v1633 = vsel %vm163, %v1610, 0
  %v1636 = vsel %vm163, %v1611, 0
  %v1639 = vsel %vm163, %v1612, 0
  %v1642 = vsel %vm163, %v1613, 0
  %v1645 = vsel %vm163, %v1620, 0
  %v1648 = vsel %vm163, %v1622, 0
  %v1651 = vsel %vm163, %v1624, 0
  %v1654 = vsel %vm163, %v1626, 0
  %v1657 = vsel %vm163, %v1628, 0
  %1659 = vmatpush.bf16.xpose.msra.mxu0 0
  %1660 = vmatpush.bf16.xpose.msra.mxu0 0
  %1661 = vmatpush.bf16.xpose.msra.mxu0 0
  %1662 = vmatpush.bf16.xpose.msra.mxu0 %v1657
  %1663 = vmatpush.bf16.xpose.msra.mxu0 %v1654
  %1664 = vmatpush.bf16.xpose.msra.mxu0 %v1651
  %1665 = vmatpush.bf16.xpose.msra.mxu0 %v1648
  %1666 = vmatpush.bf16.xpose.msra.mxu0 %v1645
  %1667 = vmatmul.bf16.gmra.mxu0 %v1630
  %v1668 = vpop.f32.mrf.mxu0
  %v1669 = vadd.f32 0.0, %v1668
  %v1670 = vpop.f32.mrf.mxu0
  %v1671 = vadd.f32 0.0, %v1670
  %1672 = vmatmul.bf16.gmra.mxu0 %v1633
  %v1673 = vpop.f32.mrf.mxu0
  %v1674 = vadd.f32 0.0, %v1673
  %v1675 = vpop.f32.mrf.mxu0
  %v1676 = vadd.f32 0.0, %v1675
  %1677 = vmatmul.bf16.gmra.mxu0 %v1636
  %v1678 = vpop.f32.mrf.mxu0
  %v1679 = vadd.f32 0.0, %v1678
  %v1680 = vpop.f32.mrf.mxu0
  %v1681 = vadd.f32 0.0, %v1680
  %1682 = vmatmul.bf16.gmra.mxu0 %v1639
  %v1683 = vpop.f32.mrf.mxu0
  %v1684 = vadd.f32 0.0, %v1683
  %v1685 = vpop.f32.mrf.mxu0
  %v1686 = vadd.f32 0.0, %v1685
  %1687 = vmatmul.bf16.gmra.mxu0 %v1642
  %v1688 = vpop.f32.mrf.mxu0
  %v1689 = vadd.f32 0.0, %v1688
  %v1690 = vpop.f32.mrf.mxu0
  %v1691 = vadd.f32 0.0, %v1690
  %1692 = vdwg.mxu0
  %v1693 = vmul.f32 %v1669, 0.25
  %v1694 = vmul.f32 %v1671, 0.25
  %v1695 = vmul.f32 %v1674, 0.25
  %v1696 = vmul.f32 %v1676, 0.25
  %v1697 = vmul.f32 %v1679, 0.25
  %v1698 = vmul.f32 %v1681, 0.25
  %v1699 = vmul.f32 %v1684, 0.25
  %v1700 = vmul.f32 %v1686, 0.25
  %v1701 = vmul.f32 %v1689, 0.25
  %v1702 = vmul.f32 %v1691, 0.25
  %v1703 = vadd.f32 %v1693, %v58
  %v1704 = vadd.f32 %v1694, %v59
  %v1705 = vadd.f32 %v1695, %v60
  %v1706 = vadd.f32 %v1696, %v61
  %v1707 = vadd.f32 %v1697, %v62
  %v1708 = vadd.f32 %v1698, %v63
  %v1709 = vadd.f32 %v1699, %v64
  %v1710 = vadd.f32 %v1700, %v65
  %v1711 = vadd.f32 %v1701, %v66
  %v1712 = vadd.f32 %v1702, %v67
  %v1713 = vsel %vm248, %v1703, -inf
  %1714 = vmax.xlane.f32.xlu0 %v1713
  %v1715 = vpop.xlane.xlu0 %1714
  %v1716 = vsel %vm248, %v1704, -inf
  %1717 = vmax.xlane.f32.xlu0 %v1716
  %v1718 = vpop.xlane.xlu0 %1717
  %v1719 = vsel %vm248, %v1705, -inf
  %1720 = vmax.xlane.f32.xlu0 %v1719
  %v1721 = vpop.xlane.xlu0 %1720
  %v1722 = vsel %vm248, %v1706, -inf
  %1723 = vmax.xlane.f32.xlu0 %v1722
  %v1724 = vpop.xlane.xlu0 %1723
  %v1725 = vsel %vm248, %v1707, -inf
  %1726 = vmax.xlane.f32.xlu0 %v1725
  %v1727 = vpop.xlane.xlu0 %1726
  %v1728 = vsel %vm248, %v1708, -inf
  %1729 = vmax.xlane.f32.xlu0 %v1728
  %v1730 = vpop.xlane.xlu0 %1729
  %v1731 = vsel %vm248, %v1709, -inf
  %1732 = vmax.xlane.f32.xlu0 %v1731
  %v1733 = vpop.xlane.xlu0 %1732
  %v1734 = vsel %vm248, %v1710, -inf
  %1735 = vmax.xlane.f32.xlu0 %v1734
  %v1736 = vpop.xlane.xlu0 %1735
  %v1737 = vsel %vm248, %v1711, -inf
  %1738 = vmax.xlane.f32.xlu0 %v1737
  %v1739 = vpop.xlane.xlu0 %1738
  %v1740 = vsel %vm248, %v1712, -inf
  %1741 = vmax.xlane.f32.xlu0 %v1740
  %v1742 = vpop.xlane.xlu0 %1741
  %v1743 = vsub.f32 %v1703, %v1715
  %v1744 = vsub.f32 %v1704, %v1718
  %v1745 = vsub.f32 %v1705, %v1721
  %v1746 = vsub.f32 %v1706, %v1724
  %v1747 = vsub.f32 %v1707, %v1727
  %v1748 = vsub.f32 %v1708, %v1730
  %v1749 = vsub.f32 %v1709, %v1733
  %v1750 = vsub.f32 %v1710, %v1736
  %v1751 = vsub.f32 %v1711, %v1739
  %v1752 = vsub.f32 %v1712, %v1742
  %v1753 = vmul.f32 %v1743, 1.442695
  %v1754 = vpow.pop %v1753
  %v1755 = vmul.f32 %v1744, 1.442695
  %v1756 = vpow.pop %v1755
  %v1757 = vmul.f32 %v1745, 1.442695
  %v1758 = vpow.pop %v1757
  %v1759 = vmul.f32 %v1746, 1.442695
  %v1760 = vpow.pop %v1759
  %v1761 = vmul.f32 %v1747, 1.442695
  %v1762 = vpow.pop %v1761
  %v1763 = vmul.f32 %v1748, 1.442695
  %v1764 = vpow.pop %v1763
  %v1765 = vmul.f32 %v1749, 1.442695
  %v1766 = vpow.pop %v1765
  %v1767 = vmul.f32 %v1750, 1.442695
  %v1768 = vpow.pop %v1767
  %v1769 = vmul.f32 %v1751, 1.442695
  %v1770 = vpow.pop %v1769
  %v1771 = vmul.f32 %v1752, 1.442695
  %v1772 = vpow.pop %v1771
  %v1773 = vsel %vm248, %v1754, 0.0
  %1774 = vadd.xlane.f32.xlu0 %v1773
  %v1775 = vpop.xlane.xlu0 %1774
  %v1776 = vsel %vm248, %v1756, 0.0
  %1777 = vadd.xlane.f32.xlu0 %v1776
  %v1778 = vpop.xlane.xlu0 %1777
  %v1779 = vsel %vm248, %v1758, 0.0
  %1780 = vadd.xlane.f32.xlu0 %v1779
  %v1781 = vpop.xlane.xlu0 %1780
  %v1782 = vsel %vm248, %v1760, 0.0
  %1783 = vadd.xlane.f32.xlu0 %v1782
  %v1784 = vpop.xlane.xlu0 %1783
  %v1785 = vsel %vm248, %v1762, 0.0
  %1786 = vadd.xlane.f32.xlu0 %v1785
  %v1787 = vpop.xlane.xlu0 %1786
  %v1788 = vsel %vm248, %v1764, 0.0
  %1789 = vadd.xlane.f32.xlu0 %v1788
  %v1790 = vpop.xlane.xlu0 %1789
  %v1791 = vsel %vm248, %v1766, 0.0
  %1792 = vadd.xlane.f32.xlu0 %v1791
  %v1793 = vpop.xlane.xlu0 %1792
  %v1794 = vsel %vm248, %v1768, 0.0
  %1795 = vadd.xlane.f32.xlu0 %v1794
  %v1796 = vpop.xlane.xlu0 %1795
  %v1797 = vsel %vm248, %v1770, 0.0
  %1798 = vadd.xlane.f32.xlu0 %v1797
  %v1799 = vpop.xlane.xlu0 %1798
  %v1800 = vsel %vm248, %v1772, 0.0
  %1801 = vadd.xlane.f32.xlu0 %v1800
  %v1802 = vpop.xlane.xlu0 %1801
  %v1803 = vrcp.pop %v1775
  %v1804 = vrcp.pop %v1778
  %v1805 = vrcp.pop %v1781
  %v1806 = vrcp.pop %v1784
  %v1807 = vrcp.pop %v1787
  %v1808 = vrcp.pop %v1790
  %v1809 = vrcp.pop %v1793
  %v1810 = vrcp.pop %v1796
  %v1811 = vrcp.pop %v1799
  %v1812 = vrcp.pop %v1802
  %v1813 = vmul.f32 %v1754, %v1803
  %v1814 = vmul.f32 %v1756, %v1804
  %v1815 = vmul.f32 %v1758, %v1805
  %v1816 = vmul.f32 %v1760, %v1806
  %v1817 = vmul.f32 %v1762, %v1807
  %v1818 = vmul.f32 %v1764, %v1808
  %v1819 = vmul.f32 %v1766, %v1809
  %v1820 = vmul.f32 %v1768, %v1810
  %v1821 = vmul.f32 %v1770, %v1811
  %v1822 = vmul.f32 %v1772, %v1812
  %v1823 = vpack.c.bf16 %v1814, %v1813
  %v1824 = vpack.c.bf16 %v1816, %v1815
  %v1825 = vpack.c.bf16 %v1818, %v1817
  %v1826 = vpack.c.bf16 %v1820, %v1819
  %v1827 = vpack.c.bf16 %v1822, %v1821
  %1828 = vrot.lane.b32.xlu0 %v1609, 64
  %v1829 = vpop.permute.xlu0 %1828
  %1830 = vrot.lane.b32.xlu0 %v1610, 64
  %v1831 = vpop.permute.xlu0 %1830
  %1832 = vrot.lane.b32.xlu0 %v1611, 64
  %v1833 = vpop.permute.xlu0 %1832
  %1834 = vrot.lane.b32.xlu0 %v1612, 64
  %v1835 = vpop.permute.xlu0 %1834
  %1836 = vrot.lane.b32.xlu0 %v1613, 64
  %v1837 = vpop.permute.xlu0 %1836
  %v1844 = vsel %vm248, %v1823, 0
  %v1847 = vsel %vm248, %v1824, 0
  %v1850 = vsel %vm248, %v1825, 0
  %v1853 = vsel %vm248, %v1826, 0
  %v1856 = vsel %vm248, %v1827, 0
  %1858 = vmatpush.bf16.msra.mxu0 0
  %1859 = vmatpush.bf16.msra.mxu0 0
  %1860 = vmatpush.bf16.msra.mxu0 0
  %1861 = vmatpush.bf16.msra.mxu0 %v1837
  %1862 = vmatpush.bf16.msra.mxu0 %v1835
  %1863 = vmatpush.bf16.msra.mxu0 %v1833
  %1864 = vmatpush.bf16.msra.mxu0 %v1831
  %1865 = vmatpush.bf16.msra.mxu0 %v1829
  %1866 = vmatmul.bf16.gmra.mxu0 %v1844
  %v1867 = vpop.f32.mrf.mxu0
  %v1868 = vadd.f32 0.0, %v1867
  %v1869 = vpop.f32.mrf.mxu0
  %v1870 = vadd.f32 0.0, %v1869
  %1871 = vmatmul.bf16.gmra.mxu0 %v1847
  %v1872 = vpop.f32.mrf.mxu0
  %v1873 = vadd.f32 0.0, %v1872
  %v1874 = vpop.f32.mrf.mxu0
  %v1875 = vadd.f32 0.0, %v1874
  %1876 = vmatmul.bf16.gmra.mxu0 %v1850
  %v1877 = vpop.f32.mrf.mxu0
  %v1878 = vadd.f32 0.0, %v1877
  %v1879 = vpop.f32.mrf.mxu0
  %v1880 = vadd.f32 0.0, %v1879
  %1881 = vmatmul.bf16.gmra.mxu0 %v1853
  %v1882 = vpop.f32.mrf.mxu0
  %v1883 = vadd.f32 0.0, %v1882
  %v1884 = vpop.f32.mrf.mxu0
  %v1885 = vadd.f32 0.0, %v1884
  %1886 = vmatmul.bf16.gmra.mxu0 %v1856
  %v1887 = vpop.f32.mrf.mxu0
  %v1888 = vadd.f32 0.0, %v1887
  %v1889 = vpop.f32.mrf.mxu0
  %v1890 = vadd.f32 0.0, %v1889
  %1891 = vdwg.mxu0
  %1892 = vrot.lane.b32.xlu0 %v1609, 112
  %v1893 = vpop.permute.xlu0 %1892
  %1894 = vrot.lane.b32.xlu0 %v1610, 112
  %v1895 = vpop.permute.xlu0 %1894
  %1896 = vrot.lane.b32.xlu0 %v1611, 112
  %v1897 = vpop.permute.xlu0 %1896
  %1898 = vrot.lane.b32.xlu0 %v1612, 112
  %v1899 = vpop.permute.xlu0 %1898
  %1900 = vrot.lane.b32.xlu0 %v1613, 112
  %v1901 = vpop.permute.xlu0 %1900
  %1902 = vrot.lane.b32.xlu0 %v1609, 80
  %v1903 = vpop.permute.xlu0 %1902
  %1904 = vrot.lane.b32.xlu0 %v1610, 80
  %v1905 = vpop.permute.xlu0 %1904
  %1906 = vrot.lane.b32.xlu0 %v1611, 80
  %v1907 = vpop.permute.xlu0 %1906
  %1908 = vrot.lane.b32.xlu0 %v1612, 80
  %v1909 = vpop.permute.xlu0 %1908
  %1910 = vrot.lane.b32.xlu0 %v1613, 80
  %v1911 = vpop.permute.xlu0 %1910
  %v1913 = vsel %vm163, %v1893, 0
  %v1916 = vsel %vm163, %v1895, 0
  %v1919 = vsel %vm163, %v1897, 0
  %v1922 = vsel %vm163, %v1899, 0
  %v1925 = vsel %vm163, %v1901, 0
  %v1928 = vsel %vm163, %v1903, 0
  %v1931 = vsel %vm163, %v1905, 0
  %v1934 = vsel %vm163, %v1907, 0
  %v1937 = vsel %vm163, %v1909, 0
  %v1940 = vsel %vm163, %v1911, 0
  %1942 = vmatpush.bf16.xpose.msra.mxu0 0
  %1943 = vmatpush.bf16.xpose.msra.mxu0 0
  %1944 = vmatpush.bf16.xpose.msra.mxu0 0
  %1945 = vmatpush.bf16.xpose.msra.mxu0 %v1940
  %1946 = vmatpush.bf16.xpose.msra.mxu0 %v1937
  %1947 = vmatpush.bf16.xpose.msra.mxu0 %v1934
  %1948 = vmatpush.bf16.xpose.msra.mxu0 %v1931
  %1949 = vmatpush.bf16.xpose.msra.mxu0 %v1928
  %1950 = vmatmul.bf16.gmra.mxu0 %v1913
  %v1951 = vpop.f32.mrf.mxu0
  %v1952 = vadd.f32 0.0, %v1951
  %v1953 = vpop.f32.mrf.mxu0
  %v1954 = vadd.f32 0.0, %v1953
  %1955 = vmatmul.bf16.gmra.mxu0 %v1916
  %v1956 = vpop.f32.mrf.mxu0
  %v1957 = vadd.f32 0.0, %v1956
  %v1958 = vpop.f32.mrf.mxu0
  %v1959 = vadd.f32 0.0, %v1958
  %1960 = vmatmul.bf16.gmra.mxu0 %v1919
  %v1961 = vpop.f32.mrf.mxu0
  %v1962 = vadd.f32 0.0, %v1961
  %v1963 = vpop.f32.mrf.mxu0
  %v1964 = vadd.f32 0.0, %v1963
  %1965 = vmatmul.bf16.gmra.mxu0 %v1922
  %v1966 = vpop.f32.mrf.mxu0
  %v1967 = vadd.f32 0.0, %v1966
  %v1968 = vpop.f32.mrf.mxu0
  %v1969 = vadd.f32 0.0, %v1968
  %1970 = vmatmul.bf16.gmra.mxu0 %v1925
  %v1971 = vpop.f32.mrf.mxu0
  %v1972 = vadd.f32 0.0, %v1971
  %v1973 = vpop.f32.mrf.mxu0
  %v1974 = vadd.f32 0.0, %v1973
  %1975 = vdwg.mxu0
  %v1976 = vmul.f32 %v1952, 0.25
  %v1977 = vmul.f32 %v1954, 0.25
  %v1978 = vmul.f32 %v1957, 0.25
  %v1979 = vmul.f32 %v1959, 0.25
  %v1980 = vmul.f32 %v1962, 0.25
  %v1981 = vmul.f32 %v1964, 0.25
  %v1982 = vmul.f32 %v1967, 0.25
  %v1983 = vmul.f32 %v1969, 0.25
  %v1984 = vmul.f32 %v1972, 0.25
  %v1985 = vmul.f32 %v1974, 0.25
  %v1986 = vadd.f32 %v1976, %v58
  %v1987 = vadd.f32 %v1977, %v59
  %v1988 = vadd.f32 %v1978, %v60
  %v1989 = vadd.f32 %v1979, %v61
  %v1990 = vadd.f32 %v1980, %v62
  %v1991 = vadd.f32 %v1981, %v63
  %v1992 = vadd.f32 %v1982, %v64
  %v1993 = vadd.f32 %v1983, %v65
  %v1994 = vadd.f32 %v1984, %v66
  %v1995 = vadd.f32 %v1985, %v67
  %v1996 = vsel %vm248, %v1986, -inf
  %1997 = vmax.xlane.f32.xlu0 %v1996
  %v1998 = vpop.xlane.xlu0 %1997
  %v1999 = vsel %vm248, %v1987, -inf
  %2000 = vmax.xlane.f32.xlu0 %v1999
  %v2001 = vpop.xlane.xlu0 %2000
  %v2002 = vsel %vm248, %v1988, -inf
  %2003 = vmax.xlane.f32.xlu0 %v2002
  %v2004 = vpop.xlane.xlu0 %2003
  %v2005 = vsel %vm248, %v1989, -inf
  %2006 = vmax.xlane.f32.xlu0 %v2005
  %v2007 = vpop.xlane.xlu0 %2006
  %v2008 = vsel %vm248, %v1990, -inf
  %2009 = vmax.xlane.f32.xlu0 %v2008
  %v2010 = vpop.xlane.xlu0 %2009
  %v2011 = vsel %vm248, %v1991, -inf
  %2012 = vmax.xlane.f32.xlu0 %v2011
  %v2013 = vpop.xlane.xlu0 %2012
  %v2014 = vsel %vm248, %v1992, -inf
  %2015 = vmax.xlane.f32.xlu0 %v2014
  %v2016 = vpop.xlane.xlu0 %2015
  %v2017 = vsel %vm248, %v1993, -inf
  %2018 = vmax.xlane.f32.xlu0 %v2017
  %v2019 = vpop.xlane.xlu0 %2018
  %v2020 = vsel %vm248, %v1994, -inf
  %2021 = vmax.xlane.f32.xlu0 %v2020
  %v2022 = vpop.xlane.xlu0 %2021
  %v2023 = vsel %vm248, %v1995, -inf
  %2024 = vmax.xlane.f32.xlu0 %v2023
  %v2025 = vpop.xlane.xlu0 %2024
  %v2026 = vsub.f32 %v1986, %v1998
  %v2027 = vsub.f32 %v1987, %v2001
  %v2028 = vsub.f32 %v1988, %v2004
  %v2029 = vsub.f32 %v1989, %v2007
  %v2030 = vsub.f32 %v1990, %v2010
  %v2031 = vsub.f32 %v1991, %v2013
  %v2032 = vsub.f32 %v1992, %v2016
  %v2033 = vsub.f32 %v1993, %v2019
  %v2034 = vsub.f32 %v1994, %v2022
  %v2035 = vsub.f32 %v1995, %v2025
  %v2036 = vmul.f32 %v2026, 1.442695
  %v2037 = vpow.pop %v2036
  %v2038 = vmul.f32 %v2027, 1.442695
  %v2039 = vpow.pop %v2038
  %v2040 = vmul.f32 %v2028, 1.442695
  %v2041 = vpow.pop %v2040
  %v2042 = vmul.f32 %v2029, 1.442695
  %v2043 = vpow.pop %v2042
  %v2044 = vmul.f32 %v2030, 1.442695
  %v2045 = vpow.pop %v2044
  %v2046 = vmul.f32 %v2031, 1.442695
  %v2047 = vpow.pop %v2046
  %v2048 = vmul.f32 %v2032, 1.442695
  %v2049 = vpow.pop %v2048
  %v2050 = vmul.f32 %v2033, 1.442695
  %v2051 = vpow.pop %v2050
  %v2052 = vmul.f32 %v2034, 1.442695
  %v2053 = vpow.pop %v2052
  %v2054 = vmul.f32 %v2035, 1.442695
  %v2055 = vpow.pop %v2054
  %v2056 = vsel %vm248, %v2037, 0.0
  %2057 = vadd.xlane.f32.xlu0 %v2056
  %v2058 = vpop.xlane.xlu0 %2057
  %v2059 = vsel %vm248, %v2039, 0.0
  %2060 = vadd.xlane.f32.xlu0 %v2059
  %v2061 = vpop.xlane.xlu0 %2060
  %v2062 = vsel %vm248, %v2041, 0.0
  %2063 = vadd.xlane.f32.xlu0 %v2062
  %v2064 = vpop.xlane.xlu0 %2063
  %v2065 = vsel %vm248, %v2043, 0.0
  %2066 = vadd.xlane.f32.xlu0 %v2065
  %v2067 = vpop.xlane.xlu0 %2066
  %v2068 = vsel %vm248, %v2045, 0.0
  %2069 = vadd.xlane.f32.xlu0 %v2068
  %v2070 = vpop.xlane.xlu0 %2069
  %v2071 = vsel %vm248, %v2047, 0.0
  %2072 = vadd.xlane.f32.xlu0 %v2071
  %v2073 = vpop.xlane.xlu0 %2072
  %v2074 = vsel %vm248, %v2049, 0.0
  %2075 = vadd.xlane.f32.xlu0 %v2074
  %v2076 = vpop.xlane.xlu0 %2075
  %v2077 = vsel %vm248, %v2051, 0.0
  %2078 = vadd.xlane.f32.xlu0 %v2077
  %v2079 = vpop.xlane.xlu0 %2078
  %v2080 = vsel %vm248, %v2053, 0.0
  %2081 = vadd.xlane.f32.xlu0 %v2080
  %v2082 = vpop.xlane.xlu0 %2081
  %v2083 = vsel %vm248, %v2055, 0.0
  %2084 = vadd.xlane.f32.xlu0 %v2083
  %v2085 = vpop.xlane.xlu0 %2084
  %v2086 = vrcp.pop %v2058
  %v2087 = vrcp.pop %v2061
  %v2088 = vrcp.pop %v2064
  %v2089 = vrcp.pop %v2067
  %v2090 = vrcp.pop %v2070
  %v2091 = vrcp.pop %v2073
  %v2092 = vrcp.pop %v2076
  %v2093 = vrcp.pop %v2079
  %v2094 = vrcp.pop %v2082
  %v2095 = vrcp.pop %v2085
  %v2096 = vmul.f32 %v2037, %v2086
  %v2097 = vmul.f32 %v2039, %v2087
  %v2098 = vmul.f32 %v2041, %v2088
  %v2099 = vmul.f32 %v2043, %v2089
  %v2100 = vmul.f32 %v2045, %v2090
  %v2101 = vmul.f32 %v2047, %v2091
  %v2102 = vmul.f32 %v2049, %v2092
  %v2103 = vmul.f32 %v2051, %v2093
  %v2104 = vmul.f32 %v2053, %v2094
  %v2105 = vmul.f32 %v2055, %v2095
  %v2106 = vpack.c.bf16 %v2097, %v2096
  %v2107 = vpack.c.bf16 %v2099, %v2098
  %v2108 = vpack.c.bf16 %v2101, %v2100
  %v2109 = vpack.c.bf16 %v2103, %v2102
  %v2110 = vpack.c.bf16 %v2105, %v2104
  %2111 = vrot.lane.b32.xlu0 %v1609, 48
  %v2112 = vpop.permute.xlu0 %2111
  %2113 = vrot.lane.b32.xlu0 %v1610, 48
  %v2114 = vpop.permute.xlu0 %2113
  %2115 = vrot.lane.b32.xlu0 %v1611, 48
  %v2116 = vpop.permute.xlu0 %2115
  %2117 = vrot.lane.b32.xlu0 %v1612, 48
  %v2118 = vpop.permute.xlu0 %2117
  %2119 = vrot.lane.b32.xlu0 %v1613, 48
  %v2120 = vpop.permute.xlu0 %2119
  %v2127 = vsel %vm248, %v2106, 0
  %v2130 = vsel %vm248, %v2107, 0
  %v2133 = vsel %vm248, %v2108, 0
  %v2136 = vsel %vm248, %v2109, 0
  %v2139 = vsel %vm248, %v2110, 0
  %2141 = vmatpush.bf16.msra.mxu0 0
  %2142 = vmatpush.bf16.msra.mxu0 0
  %2143 = vmatpush.bf16.msra.mxu0 0
  %2144 = vmatpush.bf16.msra.mxu0 %v2120
  %2145 = vmatpush.bf16.msra.mxu0 %v2118
  %2146 = vmatpush.bf16.msra.mxu0 %v2116
  %2147 = vmatpush.bf16.msra.mxu0 %v2114
  %2148 = vmatpush.bf16.msra.mxu0 %v2112
  %2149 = vmatmul.bf16.gmra.mxu0 %v2127
  %v2150 = vpop.f32.mrf.mxu0
  %v2151 = vadd.f32 0.0, %v2150
  %v2152 = vpop.f32.mrf.mxu0
  %v2153 = vadd.f32 0.0, %v2152
  %2154 = vmatmul.bf16.gmra.mxu0 %v2130
  %v2155 = vpop.f32.mrf.mxu0
  %v2156 = vadd.f32 0.0, %v2155
  %v2157 = vpop.f32.mrf.mxu0
  %v2158 = vadd.f32 0.0, %v2157
  %2159 = vmatmul.bf16.gmra.mxu0 %v2133
  %v2160 = vpop.f32.mrf.mxu0
  %v2161 = vadd.f32 0.0, %v2160
  %v2162 = vpop.f32.mrf.mxu0
  %v2163 = vadd.f32 0.0, %v2162
  %2164 = vmatmul.bf16.gmra.mxu0 %v2136
  %v2165 = vpop.f32.mrf.mxu0
  %v2166 = vadd.f32 0.0, %v2165
  %v2167 = vpop.f32.mrf.mxu0
  %v2168 = vadd.f32 0.0, %v2167
  %2169 = vmatmul.bf16.gmra.mxu0 %v2139
  %v2170 = vpop.f32.mrf.mxu0
  %v2171 = vadd.f32 0.0, %v2170
  %v2172 = vpop.f32.mrf.mxu0
  %v2173 = vadd.f32 0.0, %v2172
  %2174 = vdwg.mxu0
  %2185 = vrot.lane.b32.xlu0 %v2151, 16
  %v2186 = vpop.permute.xlu0 %2185
  %2187 = vrot.lane.b32.xlu0 %v2153, 16
  %v2188 = vpop.permute.xlu0 %2187
  %2189 = vrot.lane.b32.xlu0 %v2156, 16
  %v2190 = vpop.permute.xlu0 %2189
  %2191 = vrot.lane.b32.xlu0 %v2158, 16
  %v2192 = vpop.permute.xlu0 %2191
  %2193 = vrot.lane.b32.xlu0 %v2161, 16
  %v2194 = vpop.permute.xlu0 %2193
  %2195 = vrot.lane.b32.xlu0 %v2163, 16
  %v2196 = vpop.permute.xlu0 %2195
  %2197 = vrot.lane.b32.xlu0 %v2166, 16
  %v2198 = vpop.permute.xlu0 %2197
  %2199 = vrot.lane.b32.xlu0 %v2168, 16
  %v2200 = vpop.permute.xlu0 %2199
  %2201 = vrot.lane.b32.xlu0 %v2171, 16
  %v2202 = vpop.permute.xlu0 %2201
  %2203 = vrot.lane.b32.xlu0 %v2173, 16
  %v2204 = vpop.permute.xlu0 %2203
  %v2215 = vsel %vm163, %v1868, %v2186
  %v2216 = vsel %vm163, %v1870, %v2188
  %v2217 = vsel %vm163, %v1873, %v2190
  %v2218 = vsel %vm163, %v1875, %v2192
  %v2219 = vsel %vm163, %v1878, %v2194
  %v2220 = vsel %vm163, %v1880, %v2196
  %v2221 = vsel %vm163, %v1883, %v2198
  %v2222 = vsel %vm163, %v1885, %v2200
  %v2223 = vsel %vm163, %v1888, %v2202
  %v2224 = vsel %vm163, %v1890, %v2204
  %v2225 = vpack.c.bf16 %v2216, %v2215
  %v2226 = vpack.c.bf16 %v2218, %v2217
  %v2227 = vpack.c.bf16 %v2220, %v2219
  %v2228 = vpack.c.bf16 %v2222, %v2221
  %v2229 = vpack.c.bf16 %v2224, %v2223
  %s2230 = scalar_lea.vmem %s4, 16
  %v2231 = vld [vmem:[%s2230] sm:$0xf]
  %v2232 = vld [vmem:[%s2230 + $0x4] sm:$0xf]
  %v2233 = vld [vmem:[%s2230 + $0x8] sm:$0xf]
  %v2234 = vld [vmem:[%s2230 + $0xc] sm:$0xf]
  %s2235 = scalar_lea.vmem %s5, 1
  %v2236 = vld [vmem:[%s2235] sm:$0x1]
  %v2238 = vperm.slane %v2236, 0
  %v2244 = vunpack.c.l.b16 %v2231
  %v2245 = vunpack.c.l.b16 %v2232
  %v2246 = vunpack.c.l.b16 %v2233
  %v2247 = vunpack.c.l.b16 %v2234
  %v2248 = vpack.c.b16 %v2245, %v2244
  %v2249 = vpack.c.b16 %v2247, %v2246
  %v2253 = vsel %vm93, %v2225, 0
  %v2256 = vsel %vm93, %v2226, 0
  %v2259 = vsel %vm93, %v2227, 0
  %v2262 = vsel %vm93, %v2228, 0
  %v2265 = vsel %vm93, %v2229, 0
  %2267 = vmatpush.bf16.msra.mxu0 0
  %2268 = vmatpush.bf16.msra.mxu0 0
  %2269 = vmatpush.bf16.msra.mxu0 0
  %2270 = vmatpush.bf16.msra.mxu0 0
  %2271 = vmatpush.bf16.msra.mxu0 0
  %2272 = vmatpush.bf16.msra.mxu0 0
  %2273 = vmatpush.bf16.msra.mxu0 %v2249
  %2274 = vmatpush.bf16.msra.mxu0 %v2248
  %2275 = vmatmul.bf16.gmra.mxu0 %v2253
  %v2276 = vpop.f32.mrf.mxu0
  %v2277 = vadd.f32 %v2238, %v2276
  %v2278 = vpop.f32.mrf.mxu0
  %v2279 = vadd.f32 %v2238, %v2278
  %2280 = vmatmul.bf16.gmra.mxu0 %v2256
  %v2281 = vpop.f32.mrf.mxu0
  %v2282 = vadd.f32 %v2238, %v2281
  %v2283 = vpop.f32.mrf.mxu0
  %v2284 = vadd.f32 %v2238, %v2283
  %2285 = vmatmul.bf16.gmra.mxu0 %v2259
  %v2286 = vpop.f32.mrf.mxu0
  %v2287 = vadd.f32 %v2238, %v2286
  %v2288 = vpop.f32.mrf.mxu0
  %v2289 = vadd.f32 %v2238, %v2288
  %2290 = vmatmul.bf16.gmra.mxu0 %v2262
  %v2291 = vpop.f32.mrf.mxu0
  %v2292 = vadd.f32 %v2238, %v2291
  %v2293 = vpop.f32.mrf.mxu0
  %v2294 = vadd.f32 %v2238, %v2293
  %2295 = vmatmul.bf16.gmra.mxu0 %v2265
  %v2296 = vpop.f32.mrf.mxu0
  %v2297 = vadd.f32 %v2238, %v2296
  %v2298 = vpop.f32.mrf.mxu0
  %v2299 = vadd.f32 %v2238, %v2298
  %2300 = vdwg.mxu0
  %v2301 = vadd.f32 %v1523, %v2277
  %v2302 = vadd.f32 %v1524, %v2279
  %v2303 = vadd.f32 %v1525, %v2282
  %v2304 = vadd.f32 %v1526, %v2284
  %v2305 = vadd.f32 %v1527, %v2287
  %v2306 = vadd.f32 %v1528, %v2289
  %v2307 = vadd.f32 %v1529, %v2292
  %v2308 = vadd.f32 %v1530, %v2294
  %v2309 = vadd.f32 %v1531, %v2297
  %v2310 = vadd.f32 %v1532, %v2299
  %s2311 = scalar_lea.vmem %s10, 1
  %v2312 = vld [vmem:[%s2311] sm:$0x1]
  %s2313 = scalar_lea.vmem %s11, 1
  %v2314 = vld [vmem:[%s2313] sm:$0x1]
  %v2315 = vsel %vm93, %v2301, 0.0
  %2316 = vadd.xlane.f32.xlu0 %v2315
  %v2317 = vpop.xlane.xlu0 %2316
  %v2318 = vsel %vm93, %v2302, 0.0
  %2319 = vadd.xlane.f32.xlu0 %v2318
  %v2320 = vpop.xlane.xlu0 %2319
  %v2321 = vsel %vm93, %v2303, 0.0
  %2322 = vadd.xlane.f32.xlu0 %v2321
  %v2323 = vpop.xlane.xlu0 %2322
  %v2324 = vsel %vm93, %v2304, 0.0
  %2325 = vadd.xlane.f32.xlu0 %v2324
  %v2326 = vpop.xlane.xlu0 %2325
  %v2327 = vsel %vm93, %v2305, 0.0
  %2328 = vadd.xlane.f32.xlu0 %v2327
  %v2329 = vpop.xlane.xlu0 %2328
  %v2330 = vsel %vm93, %v2306, 0.0
  %2331 = vadd.xlane.f32.xlu0 %v2330
  %v2332 = vpop.xlane.xlu0 %2331
  %v2333 = vsel %vm93, %v2307, 0.0
  %2334 = vadd.xlane.f32.xlu0 %v2333
  %v2335 = vpop.xlane.xlu0 %2334
  %v2336 = vsel %vm93, %v2308, 0.0
  %2337 = vadd.xlane.f32.xlu0 %v2336
  %v2338 = vpop.xlane.xlu0 %2337
  %v2339 = vsel %vm93, %v2309, 0.0
  %2340 = vadd.xlane.f32.xlu0 %v2339
  %v2341 = vpop.xlane.xlu0 %2340
  %v2342 = vsel %vm93, %v2310, 0.0
  %2343 = vadd.xlane.f32.xlu0 %v2342
  %v2344 = vpop.xlane.xlu0 %2343
  %v2345 = vmul.f32 %v2317, %v883
  %v2346 = vmul.f32 %v2320, %v883
  %v2347 = vmul.f32 %v2323, %v883
  %v2348 = vmul.f32 %v2326, %v883
  %v2349 = vmul.f32 %v2329, %v883
  %v2350 = vmul.f32 %v2332, %v883
  %v2351 = vmul.f32 %v2335, %v883
  %v2352 = vmul.f32 %v2338, %v883
  %v2353 = vmul.f32 %v2341, %v883
  %v2354 = vmul.f32 %v2344, %v883
  %v2355 = vsub.f32 %v2301, %v2345
  %v2356 = vsub.f32 %v2302, %v2346
  %v2357 = vsub.f32 %v2303, %v2347
  %v2358 = vsub.f32 %v2304, %v2348
  %v2359 = vsub.f32 %v2305, %v2349
  %v2360 = vsub.f32 %v2306, %v2350
  %v2361 = vsub.f32 %v2307, %v2351
  %v2362 = vsub.f32 %v2308, %v2352
  %v2363 = vsub.f32 %v2309, %v2353
  %v2364 = vsub.f32 %v2310, %v2354
  %v2365 = vmul.f32 %v2355, %v2355
  %v2366 = vmul.f32 %v2356, %v2356
  %v2367 = vmul.f32 %v2357, %v2357
  %v2368 = vmul.f32 %v2358, %v2358
  %v2369 = vmul.f32 %v2359, %v2359
  %v2370 = vmul.f32 %v2360, %v2360
  %v2371 = vmul.f32 %v2361, %v2361
  %v2372 = vmul.f32 %v2362, %v2362
  %v2373 = vmul.f32 %v2363, %v2363
  %v2374 = vmul.f32 %v2364, %v2364
  %v2375 = vsel %vm93, %v2365, 0.0
  %2376 = vadd.xlane.f32.xlu0 %v2375
  %v2377 = vpop.xlane.xlu0 %2376
  %v2378 = vsel %vm93, %v2366, 0.0
  %2379 = vadd.xlane.f32.xlu0 %v2378
  %v2380 = vpop.xlane.xlu0 %2379
  %v2381 = vsel %vm93, %v2367, 0.0
  %2382 = vadd.xlane.f32.xlu0 %v2381
  %v2383 = vpop.xlane.xlu0 %2382
  %v2384 = vsel %vm93, %v2368, 0.0
  %2385 = vadd.xlane.f32.xlu0 %v2384
  %v2386 = vpop.xlane.xlu0 %2385
  %v2387 = vsel %vm93, %v2369, 0.0
  %2388 = vadd.xlane.f32.xlu0 %v2387
  %v2389 = vpop.xlane.xlu0 %2388
  %v2390 = vsel %vm93, %v2370, 0.0
  %2391 = vadd.xlane.f32.xlu0 %v2390
  %v2392 = vpop.xlane.xlu0 %2391
  %v2393 = vsel %vm93, %v2371, 0.0
  %2394 = vadd.xlane.f32.xlu0 %v2393
  %v2395 = vpop.xlane.xlu0 %2394
  %v2396 = vsel %vm93, %v2372, 0.0
  %2397 = vadd.xlane.f32.xlu0 %v2396
  %v2398 = vpop.xlane.xlu0 %2397
  %v2399 = vsel %vm93, %v2373, 0.0
  %2400 = vadd.xlane.f32.xlu0 %v2399
  %v2401 = vpop.xlane.xlu0 %2400
  %v2402 = vsel %vm93, %v2374, 0.0
  %2403 = vadd.xlane.f32.xlu0 %v2402
  %v2404 = vpop.xlane.xlu0 %2403
  %v2405 = vmul.f32 %v2377, %v883
  %v2406 = vmul.f32 %v2380, %v883
  %v2407 = vmul.f32 %v2383, %v883
  %v2408 = vmul.f32 %v2386, %v883
  %v2409 = vmul.f32 %v2389, %v883
  %v2410 = vmul.f32 %v2392, %v883
  %v2411 = vmul.f32 %v2395, %v883
  %v2412 = vmul.f32 %v2398, %v883
  %v2413 = vmul.f32 %v2401, %v883
  %v2414 = vmul.f32 %v2404, %v883
  %v2415 = vadd.f32 %v2405, 1e-05
  %v2416 = vadd.f32 %v2406, 1e-05
  %v2417 = vadd.f32 %v2407, 1e-05
  %v2418 = vadd.f32 %v2408, 1e-05
  %v2419 = vadd.f32 %v2409, 1e-05
  %v2420 = vadd.f32 %v2410, 1e-05
  %v2421 = vadd.f32 %v2411, 1e-05
  %v2422 = vadd.f32 %v2412, 1e-05
  %v2423 = vadd.f32 %v2413, 1e-05
  %v2424 = vadd.f32 %v2414, 1e-05
  %v2425 = vrsqrt.pop %v2415
  %v2426 = vmul.f32 %v2425, %v2415
  %v2427 = vmul.f32 %v2426, %v2425
  %v2428 = vmul.f32 0.5, %v2427
  %v2429 = vsub.f32 1.5, %v2428
  %v2430 = vmul.f32 %v2425, %v2429
  %vm2431 = vweird.f32 %v2415
  %vm2432 = vweird.f32 %v2425
  %vm2433 = vmor %vm2431, %vm2432
  %v2434 = vsel %vm2433, %v2425, %v2430
  %v2435 = vrsqrt.pop %v2416
  %v2436 = vmul.f32 %v2435, %v2416
  %v2437 = vmul.f32 %v2436, %v2435
  %v2438 = vmul.f32 0.5, %v2437
  %v2439 = vsub.f32 1.5, %v2438
  %v2440 = vmul.f32 %v2435, %v2439
  %vm2441 = vweird.f32 %v2416
  %vm2442 = vweird.f32 %v2435
  %vm2443 = vmor %vm2441, %vm2442
  %v2444 = vsel %vm2443, %v2435, %v2440
  %v2445 = vrsqrt.pop %v2417
  %v2446 = vmul.f32 %v2445, %v2417
  %v2447 = vmul.f32 %v2446, %v2445
  %v2448 = vmul.f32 0.5, %v2447
  %v2449 = vsub.f32 1.5, %v2448
  %v2450 = vmul.f32 %v2445, %v2449
  %vm2451 = vweird.f32 %v2417
  %vm2452 = vweird.f32 %v2445
  %vm2453 = vmor %vm2451, %vm2452
  %v2454 = vsel %vm2453, %v2445, %v2450
  %v2455 = vrsqrt.pop %v2418
  %v2456 = vmul.f32 %v2455, %v2418
  %v2457 = vmul.f32 %v2456, %v2455
  %v2458 = vmul.f32 0.5, %v2457
  %v2459 = vsub.f32 1.5, %v2458
  %v2460 = vmul.f32 %v2455, %v2459
  %vm2461 = vweird.f32 %v2418
  %vm2462 = vweird.f32 %v2455
  %vm2463 = vmor %vm2461, %vm2462
  %v2464 = vsel %vm2463, %v2455, %v2460
  %v2465 = vrsqrt.pop %v2419
  %v2466 = vmul.f32 %v2465, %v2419
  %v2467 = vmul.f32 %v2466, %v2465
  %v2468 = vmul.f32 0.5, %v2467
  %v2469 = vsub.f32 1.5, %v2468
  %v2470 = vmul.f32 %v2465, %v2469
  %vm2471 = vweird.f32 %v2419
  %vm2472 = vweird.f32 %v2465
  %vm2473 = vmor %vm2471, %vm2472
  %v2474 = vsel %vm2473, %v2465, %v2470
  %v2475 = vrsqrt.pop %v2420
  %v2476 = vmul.f32 %v2475, %v2420
  %v2477 = vmul.f32 %v2476, %v2475
  %v2478 = vmul.f32 0.5, %v2477
  %v2479 = vsub.f32 1.5, %v2478
  %v2480 = vmul.f32 %v2475, %v2479
  %vm2481 = vweird.f32 %v2420
  %vm2482 = vweird.f32 %v2475
  %vm2483 = vmor %vm2481, %vm2482
  %v2484 = vsel %vm2483, %v2475, %v2480
  %v2485 = vrsqrt.pop %v2421
  %v2486 = vmul.f32 %v2485, %v2421
  %v2487 = vmul.f32 %v2486, %v2485
  %v2488 = vmul.f32 0.5, %v2487
  %v2489 = vsub.f32 1.5, %v2488
  %v2490 = vmul.f32 %v2485, %v2489
  %vm2491 = vweird.f32 %v2421
  %vm2492 = vweird.f32 %v2485
  %vm2493 = vmor %vm2491, %vm2492
  %v2494 = vsel %vm2493, %v2485, %v2490
  %v2495 = vrsqrt.pop %v2422
  %v2496 = vmul.f32 %v2495, %v2422
  %v2497 = vmul.f32 %v2496, %v2495
  %v2498 = vmul.f32 0.5, %v2497
  %v2499 = vsub.f32 1.5, %v2498
  %v2500 = vmul.f32 %v2495, %v2499
  %vm2501 = vweird.f32 %v2422
  %vm2502 = vweird.f32 %v2495
  %vm2503 = vmor %vm2501, %vm2502
  %v2504 = vsel %vm2503, %v2495, %v2500
  %v2505 = vrsqrt.pop %v2423
  %v2506 = vmul.f32 %v2505, %v2423
  %v2507 = vmul.f32 %v2506, %v2505
  %v2508 = vmul.f32 0.5, %v2507
  %v2509 = vsub.f32 1.5, %v2508
  %v2510 = vmul.f32 %v2505, %v2509
  %vm2511 = vweird.f32 %v2423
  %vm2512 = vweird.f32 %v2505
  %vm2513 = vmor %vm2511, %vm2512
  %v2514 = vsel %vm2513, %v2505, %v2510
  %v2515 = vrsqrt.pop %v2424
  %v2516 = vmul.f32 %v2515, %v2424
  %v2517 = vmul.f32 %v2516, %v2515
  %v2518 = vmul.f32 0.5, %v2517
  %v2519 = vsub.f32 1.5, %v2518
  %v2520 = vmul.f32 %v2515, %v2519
  %vm2521 = vweird.f32 %v2424
  %vm2522 = vweird.f32 %v2515
  %vm2523 = vmor %vm2521, %vm2522
  %v2524 = vsel %vm2523, %v2515, %v2520
  %v2525 = vmul.f32 %v2355, %v2434
  %v2526 = vmul.f32 %v2356, %v2444
  %v2527 = vmul.f32 %v2357, %v2454
  %v2528 = vmul.f32 %v2358, %v2464
  %v2529 = vmul.f32 %v2359, %v2474
  %v2530 = vmul.f32 %v2360, %v2484
  %v2531 = vmul.f32 %v2361, %v2494
  %v2532 = vmul.f32 %v2362, %v2504
  %v2533 = vmul.f32 %v2363, %v2514
  %v2534 = vmul.f32 %v2364, %v2524
  %v2536 = vperm.slane %v2312, 0
  %v2538 = vmul.f32 %v2525, %v2536
  %v2539 = vmul.f32 %v2526, %v2536
  %v2540 = vmul.f32 %v2527, %v2536
  %v2541 = vmul.f32 %v2528, %v2536
  %v2542 = vmul.f32 %v2529, %v2536
  %v2543 = vmul.f32 %v2530, %v2536
  %v2544 = vmul.f32 %v2531, %v2536
  %v2545 = vmul.f32 %v2532, %v2536
  %v2546 = vmul.f32 %v2533, %v2536
  %v2547 = vmul.f32 %v2534, %v2536
  %v2549 = vperm.slane %v2314, 0
  %v2551 = vadd.f32 %v2538, %v2549
  %v2552 = vadd.f32 %v2539, %v2549
  %v2553 = vadd.f32 %v2540, %v2549
  %v2554 = vadd.f32 %v2541, %v2549
  %v2555 = vadd.f32 %v2542, %v2549
  %v2556 = vadd.f32 %v2543, %v2549
  %v2557 = vadd.f32 %v2544, %v2549
  %v2558 = vadd.f32 %v2545, %v2549
  %v2559 = vadd.f32 %v2546, %v2549
  %v2560 = vadd.f32 %v2547, %v2549
  %v2561 = vpack.c.bf16 %v2552, %v2551
  %v2562 = vpack.c.bf16 %v2554, %v2553
  %v2563 = vpack.c.bf16 %v2556, %v2555
  %v2564 = vpack.c.bf16 %v2558, %v2557
  %v2565 = vpack.c.bf16 %v2560, %v2559
  %s2566 = scalar_lea.vmem %s6, 16
  %v2567 = vld [vmem:[%s2566] sm:$0xf]
  %v2568 = vld [vmem:[%s2566 + $0x4] sm:$0xf]
  %v2569 = vld [vmem:[%s2566 + $0x8] sm:$0xf]
  %v2570 = vld [vmem:[%s2566 + $0xc] sm:$0xf]
  %s2571 = scalar_lea.vmem %s7, 1
  %v2572 = vld [vmem:[%s2571] sm:$0x1]
  %v2574 = vperm.slane %v2572, 0
  %v2580 = vunpack.c.l.b16 %v2567
  %v2581 = vunpack.c.l.b16 %v2568
  %v2582 = vunpack.c.l.b16 %v2569
  %v2583 = vunpack.c.l.b16 %v2570
  %v2584 = vpack.c.b16 %v2581, %v2580
  %v2585 = vpack.c.b16 %v2583, %v2582
  %v2589 = vsel %vm93, %v2561, 0
  %v2592 = vsel %vm93, %v2562, 0
  %v2595 = vsel %vm93, %v2563, 0
  %v2598 = vsel %vm93, %v2564, 0
  %v2601 = vsel %vm93, %v2565, 0
  %2603 = vmatpush.bf16.msra.mxu0 0
  %2604 = vmatpush.bf16.msra.mxu0 0
  %2605 = vmatpush.bf16.msra.mxu0 0
  %2606 = vmatpush.bf16.msra.mxu0 0
  %2607 = vmatpush.bf16.msra.mxu0 0
  %2608 = vmatpush.bf16.msra.mxu0 0
  %2609 = vmatpush.bf16.msra.mxu0 %v2585
  %2610 = vmatpush.bf16.msra.mxu0 %v2584
  %2611 = vmatmul.bf16.gmra.mxu0 %v2589
  %v2612 = vpop.f32.mrf.mxu0
  %v2613 = vadd.f32 %v2574, %v2612
  %v2614 = vpop.f32.mrf.mxu0
  %v2615 = vadd.f32 %v2574, %v2614
  %2616 = vmatmul.bf16.gmra.mxu0 %v2592
  %v2617 = vpop.f32.mrf.mxu0
  %v2618 = vadd.f32 %v2574, %v2617
  %v2619 = vpop.f32.mrf.mxu0
  %v2620 = vadd.f32 %v2574, %v2619
  %2621 = vmatmul.bf16.gmra.mxu0 %v2595
  %v2622 = vpop.f32.mrf.mxu0
  %v2623 = vadd.f32 %v2574, %v2622
  %v2624 = vpop.f32.mrf.mxu0
  %v2625 = vadd.f32 %v2574, %v2624
  %2626 = vmatmul.bf16.gmra.mxu0 %v2598
  %v2627 = vpop.f32.mrf.mxu0
  %v2628 = vadd.f32 %v2574, %v2627
  %v2629 = vpop.f32.mrf.mxu0
  %v2630 = vadd.f32 %v2574, %v2629
  %2631 = vmatmul.bf16.gmra.mxu0 %v2601
  %v2632 = vpop.f32.mrf.mxu0
  %v2633 = vadd.f32 %v2574, %v2632
  %v2634 = vpop.f32.mrf.mxu0
  %v2635 = vadd.f32 %v2574, %v2634
  %2636 = vdwg.mxu0
  %v2637 = vmax.f32 %v2613, 0.0
  %v2638 = vmax.f32 %v2615, 0.0
  %v2639 = vmax.f32 %v2618, 0.0
  %v2640 = vmax.f32 %v2620, 0.0
  %v2641 = vmax.f32 %v2623, 0.0
  %v2642 = vmax.f32 %v2625, 0.0
  %v2643 = vmax.f32 %v2628, 0.0
  %v2644 = vmax.f32 %v2630, 0.0
  %v2645 = vmax.f32 %v2633, 0.0
  %v2646 = vmax.f32 %v2635, 0.0
  %v2647 = vpack.c.bf16 %v2638, %v2637
  %v2648 = vpack.c.bf16 %v2640, %v2639
  %v2649 = vpack.c.bf16 %v2642, %v2641
  %v2650 = vpack.c.bf16 %v2644, %v2643
  %v2651 = vpack.c.bf16 %v2646, %v2645
  %s2652 = scalar_lea.vmem %s8, 32
  %v2653 = vld [vmem:[%s2652] sm:$0xf]
  %v2654 = vld [vmem:[%s2652 + $0x4] sm:$0xf]
  %v2655 = vld [vmem:[%s2652 + $0x8] sm:$0xf]
  %v2656 = vld [vmem:[%s2652 + $0xc] sm:$0xf]
  %v2657 = vld [vmem:[%s2652 + $0x10] sm:$0xf]
  %v2658 = vld [vmem:[%s2652 + $0x14] sm:$0xf]
  %v2659 = vld [vmem:[%s2652 + $0x18] sm:$0xf]
  %v2660 = vld [vmem:[%s2652 + $0x1c] sm:$0xf]
  %s2661 = scalar_lea.vmem %s9, 1
  %v2662 = vld [vmem:[%s2661] sm:$0x1]
  %v2664 = vperm.slane %v2662, 0
  %v2674 = vunpack.c.l.b16 %v2653
  %v2675 = vunpack.c.l.b16 %v2654
  %v2676 = vunpack.c.l.b16 %v2655
  %v2677 = vunpack.c.l.b16 %v2656
  %v2678 = vunpack.c.l.b16 %v2657
  %v2679 = vunpack.c.l.b16 %v2658
  %v2680 = vunpack.c.l.b16 %v2659
  %v2681 = vunpack.c.l.b16 %v2660
  %v2682 = vpack.c.b16 %v2675, %v2674
  %v2683 = vpack.c.b16 %v2677, %v2676
  %v2684 = vpack.c.b16 %v2679, %v2678
  %v2685 = vpack.c.b16 %v2681, %v2680
  %v2691 = vsel %vm1225, %v2647, 0
  %v2694 = vsel %vm1225, %v2648, 0
  %v2697 = vsel %vm1225, %v2649, 0
  %v2700 = vsel %vm1225, %v2650, 0
  %v2703 = vsel %vm1225, %v2651, 0
  %2705 = vmatpush.bf16.msra.mxu0 0
  %2706 = vmatpush.bf16.msra.mxu0 0
  %2707 = vmatpush.bf16.msra.mxu0 0
  %2708 = vmatpush.bf16.msra.mxu0 0
  %2709 = vmatpush.bf16.msra.mxu0 %v2685
  %2710 = vmatpush.bf16.msra.mxu0 %v2684
  %2711 = vmatpush.bf16.msra.mxu0 %v2683
  %2712 = vmatpush.bf16.msra.mxu0 %v2682
  %2713 = vmatmul.bf16.gmra.mxu0 %v2691
  %v2714 = vpop.f32.mrf.mxu0
  %v2715 = vadd.f32 %v2664, %v2714
  %v2716 = vpop.f32.mrf.mxu0
  %v2717 = vadd.f32 %v2664, %v2716
  %2718 = vmatmul.bf16.gmra.mxu0 %v2694
  %v2719 = vpop.f32.mrf.mxu0
  %v2720 = vadd.f32 %v2664, %v2719
  %v2721 = vpop.f32.mrf.mxu0
  %v2722 = vadd.f32 %v2664, %v2721
  %2723 = vmatmul.bf16.gmra.mxu0 %v2697
  %v2724 = vpop.f32.mrf.mxu0
  %v2725 = vadd.f32 %v2664, %v2724
  %v2726 = vpop.f32.mrf.mxu0
  %v2727 = vadd.f32 %v2664, %v2726
  %2728 = vmatmul.bf16.gmra.mxu0 %v2700
  %v2729 = vpop.f32.mrf.mxu0
  %v2730 = vadd.f32 %v2664, %v2729
  %v2731 = vpop.f32.mrf.mxu0
  %v2732 = vadd.f32 %v2664, %v2731
  %2733 = vmatmul.bf16.gmra.mxu0 %v2703
  %v2734 = vpop.f32.mrf.mxu0
  %v2735 = vadd.f32 %v2664, %v2734
  %v2736 = vpop.f32.mrf.mxu0
  %v2737 = vadd.f32 %v2664, %v2736
  %2738 = vdwg.mxu0
  %v2739 = vadd.f32 %v2551, %v2715
  %v2740 = vadd.f32 %v2552, %v2717
  %v2741 = vadd.f32 %v2553, %v2720
  %v2742 = vadd.f32 %v2554, %v2722
  %v2743 = vadd.f32 %v2555, %v2725
  %v2744 = vadd.f32 %v2556, %v2727
  %v2745 = vadd.f32 %v2557, %v2730
  %v2746 = vadd.f32 %v2558, %v2732
  %v2747 = vadd.f32 %v2559, %v2735
  %v2748 = vadd.f32 %v2560, %v2737
  %s2749 = scalar_lea.vmem %s12, 1
  %v2750 = vld [vmem:[%s2749] sm:$0x1]
  %s2751 = scalar_lea.vmem %s13, 1
  %v2752 = vld [vmem:[%s2751] sm:$0x1]
  %v2753 = vsel %vm93, %v2739, 0.0
  %2754 = vadd.xlane.f32.xlu0 %v2753
  %v2755 = vpop.xlane.xlu0 %2754
  %v2756 = vsel %vm93, %v2740, 0.0
  %2757 = vadd.xlane.f32.xlu0 %v2756
  %v2758 = vpop.xlane.xlu0 %2757
  %v2759 = vsel %vm93, %v2741, 0.0
  %2760 = vadd.xlane.f32.xlu0 %v2759
  %v2761 = vpop.xlane.xlu0 %2760
  %v2762 = vsel %vm93, %v2742, 0.0
  %2763 = vadd.xlane.f32.xlu0 %v2762
  %v2764 = vpop.xlane.xlu0 %2763
  %v2765 = vsel %vm93, %v2743, 0.0
  %2766 = vadd.xlane.f32.xlu0 %v2765
  %v2767 = vpop.xlane.xlu0 %2766
  %v2768 = vsel %vm93, %v2744, 0.0
  %2769 = vadd.xlane.f32.xlu0 %v2768
  %v2770 = vpop.xlane.xlu0 %2769
  %v2771 = vsel %vm93, %v2745, 0.0
  %2772 = vadd.xlane.f32.xlu0 %v2771
  %v2773 = vpop.xlane.xlu0 %2772
  %v2774 = vsel %vm93, %v2746, 0.0
  %2775 = vadd.xlane.f32.xlu0 %v2774
  %v2776 = vpop.xlane.xlu0 %2775
  %v2777 = vsel %vm93, %v2747, 0.0
  %2778 = vadd.xlane.f32.xlu0 %v2777
  %v2779 = vpop.xlane.xlu0 %2778
  %v2780 = vsel %vm93, %v2748, 0.0
  %2781 = vadd.xlane.f32.xlu0 %v2780
  %v2782 = vpop.xlane.xlu0 %2781
  %v2783 = vmul.f32 %v2755, %v883
  %v2784 = vmul.f32 %v2758, %v883
  %v2785 = vmul.f32 %v2761, %v883
  %v2786 = vmul.f32 %v2764, %v883
  %v2787 = vmul.f32 %v2767, %v883
  %v2788 = vmul.f32 %v2770, %v883
  %v2789 = vmul.f32 %v2773, %v883
  %v2790 = vmul.f32 %v2776, %v883
  %v2791 = vmul.f32 %v2779, %v883
  %v2792 = vmul.f32 %v2782, %v883
  %v2793 = vsub.f32 %v2739, %v2783
  %v2794 = vsub.f32 %v2740, %v2784
  %v2795 = vsub.f32 %v2741, %v2785
  %v2796 = vsub.f32 %v2742, %v2786
  %v2797 = vsub.f32 %v2743, %v2787
  %v2798 = vsub.f32 %v2744, %v2788
  %v2799 = vsub.f32 %v2745, %v2789
  %v2800 = vsub.f32 %v2746, %v2790
  %v2801 = vsub.f32 %v2747, %v2791
  %v2802 = vsub.f32 %v2748, %v2792
  %v2803 = vmul.f32 %v2793, %v2793
  %v2804 = vmul.f32 %v2794, %v2794
  %v2805 = vmul.f32 %v2795, %v2795
  %v2806 = vmul.f32 %v2796, %v2796
  %v2807 = vmul.f32 %v2797, %v2797
  %v2808 = vmul.f32 %v2798, %v2798
  %v2809 = vmul.f32 %v2799, %v2799
  %v2810 = vmul.f32 %v2800, %v2800
  %v2811 = vmul.f32 %v2801, %v2801
  %v2812 = vmul.f32 %v2802, %v2802
  %v2813 = vsel %vm93, %v2803, 0.0
  %2814 = vadd.xlane.f32.xlu0 %v2813
  %v2815 = vpop.xlane.xlu0 %2814
  %v2816 = vsel %vm93, %v2804, 0.0
  %2817 = vadd.xlane.f32.xlu0 %v2816
  %v2818 = vpop.xlane.xlu0 %2817
  %v2819 = vsel %vm93, %v2805, 0.0
  %2820 = vadd.xlane.f32.xlu0 %v2819
  %v2821 = vpop.xlane.xlu0 %2820
  %v2822 = vsel %vm93, %v2806, 0.0
  %2823 = vadd.xlane.f32.xlu0 %v2822
  %v2824 = vpop.xlane.xlu0 %2823
  %v2825 = vsel %vm93, %v2807, 0.0
  %2826 = vadd.xlane.f32.xlu0 %v2825
  %v2827 = vpop.xlane.xlu0 %2826
  %v2828 = vsel %vm93, %v2808, 0.0
  %2829 = vadd.xlane.f32.xlu0 %v2828
  %v2830 = vpop.xlane.xlu0 %2829
  %v2831 = vsel %vm93, %v2809, 0.0
  %2832 = vadd.xlane.f32.xlu0 %v2831
  %v2833 = vpop.xlane.xlu0 %2832
  %v2834 = vsel %vm93, %v2810, 0.0
  %2835 = vadd.xlane.f32.xlu0 %v2834
  %v2836 = vpop.xlane.xlu0 %2835
  %v2837 = vsel %vm93, %v2811, 0.0
  %2838 = vadd.xlane.f32.xlu0 %v2837
  %v2839 = vpop.xlane.xlu0 %2838
  %v2840 = vsel %vm93, %v2812, 0.0
  %2841 = vadd.xlane.f32.xlu0 %v2840
  %v2842 = vpop.xlane.xlu0 %2841
  %v2843 = vmul.f32 %v2815, %v883
  %v2844 = vmul.f32 %v2818, %v883
  %v2845 = vmul.f32 %v2821, %v883
  %v2846 = vmul.f32 %v2824, %v883
  %v2847 = vmul.f32 %v2827, %v883
  %v2848 = vmul.f32 %v2830, %v883
  %v2849 = vmul.f32 %v2833, %v883
  %v2850 = vmul.f32 %v2836, %v883
  %v2851 = vmul.f32 %v2839, %v883
  %v2852 = vmul.f32 %v2842, %v883
  %v2853 = vadd.f32 %v2843, 1e-05
  %v2854 = vadd.f32 %v2844, 1e-05
  %v2855 = vadd.f32 %v2845, 1e-05
  %v2856 = vadd.f32 %v2846, 1e-05
  %v2857 = vadd.f32 %v2847, 1e-05
  %v2858 = vadd.f32 %v2848, 1e-05
  %v2859 = vadd.f32 %v2849, 1e-05
  %v2860 = vadd.f32 %v2850, 1e-05
  %v2861 = vadd.f32 %v2851, 1e-05
  %v2862 = vadd.f32 %v2852, 1e-05
  %v2863 = vrsqrt.pop %v2853
  %v2864 = vmul.f32 %v2863, %v2853
  %v2865 = vmul.f32 %v2864, %v2863
  %v2866 = vmul.f32 0.5, %v2865
  %v2867 = vsub.f32 1.5, %v2866
  %v2868 = vmul.f32 %v2863, %v2867
  %vm2869 = vweird.f32 %v2853
  %vm2870 = vweird.f32 %v2863
  %vm2871 = vmor %vm2869, %vm2870
  %v2872 = vsel %vm2871, %v2863, %v2868
  %v2873 = vrsqrt.pop %v2854
  %v2874 = vmul.f32 %v2873, %v2854
  %v2875 = vmul.f32 %v2874, %v2873
  %v2876 = vmul.f32 0.5, %v2875
  %v2877 = vsub.f32 1.5, %v2876
  %v2878 = vmul.f32 %v2873, %v2877
  %vm2879 = vweird.f32 %v2854
  %vm2880 = vweird.f32 %v2873
  %vm2881 = vmor %vm2879, %vm2880
  %v2882 = vsel %vm2881, %v2873, %v2878
  %v2883 = vrsqrt.pop %v2855
  %v2884 = vmul.f32 %v2883, %v2855
  %v2885 = vmul.f32 %v2884, %v2883
  %v2886 = vmul.f32 0.5, %v2885
  %v2887 = vsub.f32 1.5, %v2886
  %v2888 = vmul.f32 %v2883, %v2887
  %vm2889 = vweird.f32 %v2855
  %vm2890 = vweird.f32 %v2883
  %vm2891 = vmor %vm2889, %vm2890
  %v2892 = vsel %vm2891, %v2883, %v2888
  %v2893 = vrsqrt.pop %v2856
  %v2894 = vmul.f32 %v2893, %v2856
  %v2895 = vmul.f32 %v2894, %v2893
  %v2896 = vmul.f32 0.5, %v2895
  %v2897 = vsub.f32 1.5, %v2896
  %v2898 = vmul.f32 %v2893, %v2897
  %vm2899 = vweird.f32 %v2856
  %vm2900 = vweird.f32 %v2893
  %vm2901 = vmor %vm2899, %vm2900
  %v2902 = vsel %vm2901, %v2893, %v2898
  %v2903 = vrsqrt.pop %v2857
  %v2904 = vmul.f32 %v2903, %v2857
  %v2905 = vmul.f32 %v2904, %v2903
  %v2906 = vmul.f32 0.5, %v2905
  %v2907 = vsub.f32 1.5, %v2906
  %v2908 = vmul.f32 %v2903, %v2907
  %vm2909 = vweird.f32 %v2857
  %vm2910 = vweird.f32 %v2903
  %vm2911 = vmor %vm2909, %vm2910
  %v2912 = vsel %vm2911, %v2903, %v2908
  %v2913 = vrsqrt.pop %v2858
  %v2914 = vmul.f32 %v2913, %v2858
  %v2915 = vmul.f32 %v2914, %v2913
  %v2916 = vmul.f32 0.5, %v2915
  %v2917 = vsub.f32 1.5, %v2916
  %v2918 = vmul.f32 %v2913, %v2917
  %vm2919 = vweird.f32 %v2858
  %vm2920 = vweird.f32 %v2913
  %vm2921 = vmor %vm2919, %vm2920
  %v2922 = vsel %vm2921, %v2913, %v2918
  %v2923 = vrsqrt.pop %v2859
  %v2924 = vmul.f32 %v2923, %v2859
  %v2925 = vmul.f32 %v2924, %v2923
  %v2926 = vmul.f32 0.5, %v2925
  %v2927 = vsub.f32 1.5, %v2926
  %v2928 = vmul.f32 %v2923, %v2927
  %vm2929 = vweird.f32 %v2859
  %vm2930 = vweird.f32 %v2923
  %vm2931 = vmor %vm2929, %vm2930
  %v2932 = vsel %vm2931, %v2923, %v2928
  %v2933 = vrsqrt.pop %v2860
  %v2934 = vmul.f32 %v2933, %v2860
  %v2935 = vmul.f32 %v2934, %v2933
  %v2936 = vmul.f32 0.5, %v2935
  %v2937 = vsub.f32 1.5, %v2936
  %v2938 = vmul.f32 %v2933, %v2937
  %vm2939 = vweird.f32 %v2860
  %vm2940 = vweird.f32 %v2933
  %vm2941 = vmor %vm2939, %vm2940
  %v2942 = vsel %vm2941, %v2933, %v2938
  %v2943 = vrsqrt.pop %v2861
  %v2944 = vmul.f32 %v2943, %v2861
  %v2945 = vmul.f32 %v2944, %v2943
  %v2946 = vmul.f32 0.5, %v2945
  %v2947 = vsub.f32 1.5, %v2946
  %v2948 = vmul.f32 %v2943, %v2947
  %vm2949 = vweird.f32 %v2861
  %vm2950 = vweird.f32 %v2943
  %vm2951 = vmor %vm2949, %vm2950
  %v2952 = vsel %vm2951, %v2943, %v2948
  %v2953 = vrsqrt.pop %v2862
  %v2954 = vmul.f32 %v2953, %v2862
  %v2955 = vmul.f32 %v2954, %v2953
  %v2956 = vmul.f32 0.5, %v2955
  %v2957 = vsub.f32 1.5, %v2956
  %v2958 = vmul.f32 %v2953, %v2957
  %vm2959 = vweird.f32 %v2862
  %vm2960 = vweird.f32 %v2953
  %vm2961 = vmor %vm2959, %vm2960
  %v2962 = vsel %vm2961, %v2953, %v2958
  %v2963 = vmul.f32 %v2793, %v2872
  %v2964 = vmul.f32 %v2794, %v2882
  %v2965 = vmul.f32 %v2795, %v2892
  %v2966 = vmul.f32 %v2796, %v2902
  %v2967 = vmul.f32 %v2797, %v2912
  %v2968 = vmul.f32 %v2798, %v2922
  %v2969 = vmul.f32 %v2799, %v2932
  %v2970 = vmul.f32 %v2800, %v2942
  %v2971 = vmul.f32 %v2801, %v2952
  %v2972 = vmul.f32 %v2802, %v2962
  %v2974 = vperm.slane %v2750, 0
  %v2976 = vmul.f32 %v2963, %v2974
  %v2977 = vmul.f32 %v2964, %v2974
  %v2978 = vmul.f32 %v2965, %v2974
  %v2979 = vmul.f32 %v2966, %v2974
  %v2980 = vmul.f32 %v2967, %v2974
  %v2981 = vmul.f32 %v2968, %v2974
  %v2982 = vmul.f32 %v2969, %v2974
  %v2983 = vmul.f32 %v2970, %v2974
  %v2984 = vmul.f32 %v2971, %v2974
  %v2985 = vmul.f32 %v2972, %v2974
  %v2987 = vperm.slane %v2752, 0
  %v2989 = vadd.f32 %v2976, %v2987
  %v2990 = vadd.f32 %v2977, %v2987
  %v2991 = vadd.f32 %v2978, %v2987
  %v2992 = vadd.f32 %v2979, %v2987
  %v2993 = vadd.f32 %v2980, %v2987
  %v2994 = vadd.f32 %v2981, %v2987
  %v2995 = vadd.f32 %v2982, %v2987
  %v2996 = vadd.f32 %v2983, %v2987
  %v2997 = vadd.f32 %v2984, %v2987
  %v2998 = vadd.f32 %v2985, %v2987
  %2999 = vst.msk [vmem:[%s14] sm:$0xff] %vm93, %v2989
  %3000 = vst.msk [vmem:[%s14 + $0x8] sm:$0xff] %vm93, %v2990
  %3001 = vst.msk [vmem:[%s14 + $0x10] sm:$0xff] %vm93, %v2991
  %3002 = vst.msk [vmem:[%s14 + $0x18] sm:$0xff] %vm93, %v2992
  %3003 = vst.msk [vmem:[%s14 + $0x20] sm:$0xff] %vm93, %v2993
  %3004 = vst.msk [vmem:[%s14 + $0x28] sm:$0xff] %vm93, %v2994
  %3005 = vst.msk [vmem:[%s14 + $0x30] sm:$0xff] %vm93, %v2995
  %3006 = vst.msk [vmem:[%s14 + $0x38] sm:$0xff] %vm93, %v2996
  %3007 = vst.msk [vmem:[%s14 + $0x40] sm:$0xff] %vm93, %v2997
  %3008 = vst.msk [vmem:[%s14 + $0x48] sm:$0xff] %vm93, %v2998
  // Predicated region
  $region58: #{_lambda_.4} parent=0 // pred_check
    _
  $region59: #{_lambda_.4} parent=0 // pred_check_branch
    %3010 = sbr.rel (0) target = $region61
  $region60: #{_lambda_.4} parent=0 // pred_region
    _
  $region61: #{_lambda_.4} parent=0 // pred_fallthru
    _
  // Predicated region
  $region62: #{_lambda_.4} parent=0 // pred_check
    _
  $region63: #{_lambda_.4} parent=0 // pred_check_branch
    %3012 = sbr.rel (0) target = $region65
  $region64: #{_lambda_.4} parent=0 // pred_region
    _
  $region65: #{_lambda_.4} parent=0 // pred_fallthru
    _

</llo_original>
